<compile_context>
chip_gen: v7x
topology: tpu7x:2x2x1
jax: 0.10.0
libtpu: 0.0.40
codegen_flags: <defaults>
</compile_context>

<pallas_src>
import functools

import jax
import jax.numpy as jnp
from jax import lax
from jax.experimental import pallas as pl
from jax.experimental.pallas import tpu as pltpu

EPS = 1e-5                          # InstanceNorm2d default eps
COMPUTE_DTYPE = jnp.bfloat16        # MXU input dtype (accumulation stays f32)
_FUSED_VMEM_BUDGET = 24 * 2**20     # conservative per-step budget (v7x: 64 MiB phys)


# --------------------------------------------------------------------------- #
# Shared conv helper
# --------------------------------------------------------------------------- #
def _conv_rows(x_refs, w, row0, n_rows, wo, stride):
    """f32 conv accumulator for output rows [row0, row0+n_rows) of one Cout tile.

    x_refs: list of phase-slab refs, each (1, hq, wq, cin) bf16.
    w:      (kh, kw, cin, ctile) bf16 value.
    Returns (n_rows * wo, ctile) f32.
    """
    kh, kw, cin, ctile = w.shape
    n_pc = min(stride, kw)
    acc = jnp.zeros((n_rows * wo, ctile), jnp.float32)
    for dy in range(kh):
        pr, r0 = dy % stride, dy // stride
        # Hoist the (possibly dynamic-start) H row loads: one per distinct
        # W-phase instead of one per tap.
        rows = [x_refs[pr * n_pc + pc][0, pl.ds(row0 + r0, n_rows), :, :]
                for pc in range(n_pc)]
        # Build the per-tap LHS tiles first, then issue the dots back-to-back
        # into one accumulator (MXU-result-buffer friendly on v7x).
        lhs = []
        for dx in range(kw):
            pc, c0 = dx % stride, dx // stride
            win = rows[pc][:, c0:c0 + wo, :]                    # (n_rows, wo, cin)
            lhs.append(win.reshape(n_rows * wo, cin))
        for dx in range(kw):
            acc = acc + jnp.dot(lhs[dx], w[dy, dx],
                                preferred_element_type=jnp.float32)
    # NOTE: the zero-padded tail rows/cols of each phase slab are never read:
    # max row = row0 + (n_rows-1) + (kh-1)//s <= hq-1, max col = wo-1 + (kw-1)//s
    # <= wq-1.  Keep this invariant if the phase layout changes.
    return acc


# --------------------------------------------------------------------------- #
# Path A: fully fused conv + InstanceNorm + LeakyReLU (whole spatial per step)
# --------------------------------------------------------------------------- #
def _fused_kernel(*args, stride, ho, wo):
    *x_refs, w_ref, o_ref = args
    w = w_ref[...]
    acc = _conv_rows(x_refs, w, 0, ho, wo, stride)              # (ho*wo, ctile) f32

    # InstanceNorm2d(affine=False) via per-channel sum / sum-of-squares
    # (no materialized centered temp), then one fused normalize + LeakyReLU pass.
    inv_cnt = 1.0 / float(ho * wo)
    mean = jnp.sum(acc, axis=0, keepdims=True) * inv_cnt        # (1, ctile)
    var = jnp.maximum(
        jnp.sum(acc * acc, axis=0, keepdims=True) * inv_cnt - mean * mean, 0.0)
    y = (acc - mean) * lax.rsqrt(var + EPS)
    y = jnp.where(y >= 0.0, y, 0.2 * y)                         # LeakyReLU(0.2)
    o_ref[0] = y.reshape(ho, wo, -1).astype(o_ref.dtype)


# --------------------------------------------------------------------------- #
# Path B: H-strip conv + stats, then a normalize pass (two-pass instance norm)
# --------------------------------------------------------------------------- #
def _conv_stats_kernel(*args, stride, rows, wo):
    *x_refs, w_ref, y_ref, stats_ref = args
    t = pl.program_id(2)                                        # strip index (innermost)

    @pl.when(t == 0)
    def _():
        stats_ref[...] = jnp.zeros_like(stats_ref)

    w = w_ref[...]
    acc = _conv_rows(x_refs, w, t * rows, rows, wo, stride)     # (rows*wo, ctile) f32
    # Per-channel running sums, accumulated in the resident stats output block.
    stats_ref[0, 0:1, :] += jnp.sum(acc, axis=0, keepdims=True)
    stats_ref[0, 1:2, :] += jnp.sum(acc * acc, axis=0, keepdims=True)
    y_ref[0] = acc.reshape(rows, wo, -1).astype(y_ref.dtype)


def _norm_lrelu_kernel(y_ref, stats_ref, o_ref, *, count):
    inv_cnt = 1.0 / float(count)
    mean = stats_ref[0, 0:1, :] * inv_cnt                       # (1, ctile)
    var = jnp.maximum(stats_ref[0, 1:2, :] * inv_cnt - mean * mean, 0.0)
    y = (y_ref[0] - mean) * lax.rsqrt(var + EPS)
    y = jnp.where(y >= 0.0, y, 0.2 * y)
    o_ref[0] = y.astype(o_ref.dtype)


# --------------------------------------------------------------------------- #
# Wrapper
# --------------------------------------------------------------------------- #
def _pick_cout_tile(cout):
    # Lane-dense Cout tiles; 256 matches the v6e/v7x MXU N dim (128 on v5e).
    for t in (256, 128):
        if cout % t == 0:
            return t
    return cout


def _pick_rows_per_strip(ho, per_row_bytes, fixed_bytes, budget):
    best = 1
    for d in range(1, ho + 1):
        if ho % d == 0 and fixed_bytes + d * per_row_bytes <= budget:
            best = d
    return best


def _vmem_limit(need_bytes):
    # Real per-step need (+ headroom), clamped to be valid on v7x (64 MiB phys).
    return int(min(max(need_bytes + (8 << 20), 32 << 20), 64 << 20))


def _phase_slabs(x_nchw, stride, kh, kw):
    """Reflect-pad, split into stride phases, bf16-cast.  Each slab is produced by
    one fused XLA producer; no concat copy is materialized."""
    n, cin, h, wdim = x_nchw.shape
    x = jnp.transpose(x_nchw, (0, 2, 3, 1))                     # NCHW -> NHWC
    xp = jnp.pad(x, ((0, 0), (1, 1), (1, 1), (0, 0)), mode="reflect")
    hp, wp = h + 2, wdim + 2
    ho = (hp - kh) // stride + 1
    wo = (wp - kw) // stride + 1
    hq = ho + (kh - 1) // stride
    wq = wo + (kw - 1) // stride
    n_pr, n_pc = min(stride, kh), min(stride, kw)
    slabs = []
    for pr in range(n_pr):
        for pc in range(n_pc):
            ph = xp[:, pr::stride, pc::stride, :][:, :hq, :wq, :]
            ph = jnp.pad(ph, ((0, 0), (0, hq - ph.shape[1]),
                              (0, wq - ph.shape[2]), (0, 0)))
            slabs.append(ph.astype(COMPUTE_DTYPE))
    return slabs, ho, wo, hq, wq


@functools.partial(jax.jit, static_argnames=("stride", "out_dtype", "rows_per_strip"))
def disc_block(x_nchw, w, b, *, stride, out_dtype=jnp.float32, rows_per_strip=None):
    """x_nchw: (N, Cin, H, W); w: (kh, kw, Cin, Cout) HWIO; b: (Cout,) unused
    (exactly cancelled by InstanceNorm2d's mean subtraction).
    Returns (N, Cout, Ho, Wo) in out_dtype."""
    del b
    n, cin, h, wdim = x_nchw.shape
    kh, kw, _, cout = w.shape
    s = stride

    slabs, ho, wo, hq, wq = _phase_slabs(x_nchw, s, kh, kw)
    n_ph = len(slabs)
    w_c = w.astype(COMPUTE_DTYPE)
    ctile = _pick_cout_tile(cout)
    n_ct = cout // ctile
    out_sz = jnp.dtype(out_dtype).itemsize

    # Per-grid-step VMEM estimate for the fully fused path (double-buffered blocks
    # plus the f32 accumulator / temps).
    in_blk = n_ph * hq * wq * cin * 2 + kh * kw * cin * ctile * 2
    acc_tmp = ho * wo * ctile * 4
    lhs_tmp = kw * ho * wo * cin * 2
    fused_need = 2 * (in_blk + ho * wo * ctile * out_sz) + 3 * acc_tmp + lhs_tmp

    if rows_per_strip is None and fused_need <= _FUSED_VMEM_BUDGET:
        # ------------------- Path A: one fused call ------------------- #
        kernel = functools.partial(_fused_kernel, stride=s, ho=ho, wo=wo)
        in_specs = ([pl.BlockSpec((1, hq, wq, cin), lambda i, c: (i, 0, 0, 0))] * n_ph
                    + [pl.BlockSpec((kh, kw, cin, ctile), lambda i, c: (0, 0, 0, c))])
        out = pl.pallas_call(
            kernel,
            out_shape=jax.ShapeDtypeStruct((n, ho, wo, cout), out_dtype),
            grid_spec=pltpu.PrefetchScalarGridSpec(
                num_scalar_prefetch=0,
                grid=(n, n_ct),
                in_specs=in_specs,
                out_specs=pl.BlockSpec((1, ho, wo, ctile), lambda i, c: (i, 0, 0, c))),
            compiler_params=pltpu.CompilerParams(
                dimension_semantics=("parallel", "parallel"),
                vmem_limit_bytes=_vmem_limit(fused_need)),
        )(*slabs, w_c)
    else:
        # ------- Path B: H-strips + two-pass instance-norm stats ------- #
        per_row_bytes = wo * (ctile * 4 * 5 + kw * cin * 2)
        fixed_bytes = 2 * in_blk + 4 * (2 * ctile * 4)
        if rows_per_strip is not None:
            sh = rows_per_strip
            if ho % sh != 0:
                raise ValueError(f"rows_per_strip={sh} must divide Ho={ho}")
        else:
            sh = _pick_rows_per_strip(ho, per_row_bytes, fixed_bytes,
                                      _FUSED_VMEM_BUDGET)
        n_st = ho // sh
        strip_need = fixed_bytes + sh * per_row_bytes

        conv_kernel = functools.partial(_conv_stats_kernel, stride=s, rows=sh, wo=wo)
        in_specs = ([pl.BlockSpec((1, hq, wq, cin), lambda i, c, t: (i, 0, 0, 0))] * n_ph
                    + [pl.BlockSpec((kh, kw, cin, ctile),
                                    lambda i, c, t: (0, 0, 0, c))])
        y_raw, stats = pl.pallas_call(
            conv_kernel,
            out_shape=(jax.ShapeDtypeStruct((n, ho, wo, cout), jnp.float32),
                       jax.ShapeDtypeStruct((n, 2, cout), jnp.float32)),
            grid_spec=pltpu.PrefetchScalarGridSpec(
                num_scalar_prefetch=0,
                grid=(n, n_ct, n_st),
                in_specs=in_specs,
                out_specs=[pl.BlockSpec((1, sh, wo, ctile),
                                        lambda i, c, t: (i, t, 0, c)),
                           pl.BlockSpec((1, 2, ctile),
                                        lambda i, c, t: (i, 0, c))]),
            compiler_params=pltpu.CompilerParams(
                dimension_semantics=("parallel", "parallel", "arbitrary"),
                vmem_limit_bytes=_vmem_limit(strip_need)),
        )(*slabs, w_c)

        norm_need = (2 * (sh * wo * ctile * 4 + 2 * ctile * 4
                          + sh * wo * ctile * out_sz) + 2 * sh * wo * ctile * 4)
        norm_kernel = functools.partial(_norm_lrelu_kernel, count=ho * wo)
        out = pl.pallas_call(
            norm_kernel,
            out_shape=jax.ShapeDtypeStruct((n, ho, wo, cout), out_dtype),
            grid_spec=pltpu.PrefetchScalarGridSpec(
                num_scalar_prefetch=0,
                grid=(n, n_ct, n_st),
                in_specs=[pl.BlockSpec((1, sh, wo, ctile),
                                       lambda i, c, t: (i, t, 0, c)),
                          pl.BlockSpec((1, 2, ctile),
                                       lambda i, c, t: (i, 0, c))],
                out_specs=pl.BlockSpec((1, sh, wo, ctile),
                                       lambda i, c, t: (i, t, 0, c))),
            compiler_params=pltpu.CompilerParams(
                dimension_semantics=("parallel", "parallel", "arbitrary"),
                vmem_limit_bytes=_vmem_limit(norm_need)),
        )(y_raw, stats)

    return jnp.transpose(out, (0, 3, 1, 2))                     # NHWC -> NCHW


# --------------------------------------------------------------------------- #
# Pure-JAX reference + test
# --------------------------------------------------------------------------- #
def _reference(x_nchw, w, b, *, stride):
    x = jnp.transpose(x_nchw, (0, 2, 3, 1))
    xp = jnp.pad(x, ((0, 0), (1, 1), (1, 1), (0, 0)), mode="reflect")
    y = lax.conv_general_dilated(
        xp, w, window_strides=(stride, stride), padding="VALID",
        dimension_numbers=("NHWC", "HWIO", "NHWC"))
    y = y + b
    mean = jnp.mean(y, axis=(1, 2), keepdims=True)
    var = jnp.mean((y - mean) ** 2, axis=(1, 2), keepdims=True)
    y = (y - mean) * lax.rsqrt(var + EPS)
    y = jnp.where(y >= 0.0, y, 0.2 * y)
    return jnp.transpose(y, (0, 3, 1, 2))


if __name__ == "__main__":
    key = jax.random.PRNGKey(0)
    N, CIN, COUT, H, W = 2, 4, 8, 16, 16
    kx, kw_, kb = jax.random.split(key, 3)

    x = jax.random.normal(kx, (N, CIN, H, W), jnp.float32)
    fan_in = CIN * 4 * 4
    scale = 1.0 / (fan_in ** 0.5)
    w = jax.random.uniform(kw_, (4, 4, CIN, COUT), jnp.float32, -scale, scale)
    b = jax.random.uniform(kb, (COUT,), jnp.float32, -scale, scale)

    TOL = 2e-2      # bf16 MXU inputs (f32 accumulation) vs. f32 reference

    # stride=2, fully fused single-call path, f32 output.
    out2 = jax.block_until_ready(disc_block(x, w, b, stride=2))
    ref2 = _reference(x, w, b, stride=2)
    assert out2.shape == (N, COUT, 8, 8)
    assert jnp.allclose(out2, ref2, rtol=TOL, atol=TOL), float(
        jnp.max(jnp.abs(out2 - ref2)))

    # stride=2, forced H-strip path (2 strips, two-pass stats), bf16 output
    # (the dtype the next DiscBlock consumes anyway).
    out2s = jax.block_until_ready(
        disc_block(x, w, b, stride=2, rows_per_strip=4, out_dtype=jnp.bfloat16))
    assert out2s.shape == (N, COUT, 8, 8) and out2s.dtype == jnp.bfloat16
    assert jnp.allclose(out2s.astype(jnp.float32), ref2, rtol=4e-2, atol=4e-2), float(
        jnp.max(jnp.abs(out2s.astype(jnp.float32) - ref2)))

    # stride=1 (the last DiscBlock), fused path.
    out1 = jax.block_until_ready(disc_block(x, w, b, stride=1))
    ref1 = _reference(x, w, b, stride=1)
    assert out1.shape == (N, COUT, 15, 15)
    assert jnp.allclose(out1, ref1, rtol=TOL, atol=TOL), float(
        jnp.max(jnp.abs(out1 - ref1)))

    # stride=1, forced H-strip path (3 strips of 5 rows).
    out1s = jax.block_until_ready(disc_block(x, w, b, stride=1, rows_per_strip=5))
    assert jnp.allclose(out1s, ref1, rtol=TOL, atol=TOL), float(
        jnp.max(jnp.abs(out1s - ref1)))

    print("KERNEL_OK")
</pallas_src>

<mosaic_0001>
module attributes {stable_mosaic.version = 11 : i64} {
  func.func @_fused_kernel(%arg0: i32, %arg1: i32, %arg2: memref<1x9x9x4xbf16, #tpu.memory_space<vmem>>, %arg3: memref<1x9x9x4xbf16, #tpu.memory_space<vmem>>, %arg4: memref<1x9x9x4xbf16, #tpu.memory_space<vmem>>, %arg5: memref<1x9x9x4xbf16, #tpu.memory_space<vmem>>, %arg6: memref<4x4x4x8xbf16, #tpu.memory_space<vmem>>, %arg7: memref<1x8x8x8xf32, #tpu.memory_space<vmem>>) attributes {dimension_semantics = [#tpu.dimension_semantics<parallel>, #tpu.dimension_semantics<parallel>], iteration_bounds = array<i64: 2, 1>, scalar_prefetch = 0 : i64, scratch_operands = 0 : i64, tpu.core_type = #tpu.core_type<tc>, window_params = [{transform_indices = @transform_0, window_bounds = array<i64: 1, 9, 9, 4>}, {transform_indices = @transform_1, window_bounds = array<i64: 1, 9, 9, 4>}, {transform_indices = @transform_2, window_bounds = array<i64: 1, 9, 9, 4>}, {transform_indices = @transform_3, window_bounds = array<i64: 1, 9, 9, 4>}, {transform_indices = @transform_4, window_bounds = array<i64: 4, 4, 4, 8>}, {transform_indices = @transform_5, window_bounds = array<i64: 1, 8, 8, 8>}]} {
    %c0 = arith.constant 0 : index
    %c0_0 = arith.constant 0 : index
    %c0_1 = arith.constant 0 : index
    %c0_2 = arith.constant 0 : index
    %0 = vector.load %arg6[%c0, %c0_0, %c0_1, %c0_2] : memref<4x4x4x8xbf16, #tpu.memory_space<vmem>>, vector<4x4x4x8xbf16>
    %cst = arith.constant 0.000000e+00 : f32
    %1 = vector.broadcast %cst : f32 to vector<64x8xf32>
    %c0_3 = arith.constant 0 : index
    %c0_4 = arith.constant 0 : index
    %c0_5 = arith.constant 0 : index
    %c0_6 = arith.constant 0 : index
    %2 = vector.load %arg2[%c0_3, %c0_4, %c0_5, %c0_6] : memref<1x9x9x4xbf16, #tpu.memory_space<vmem>>, vector<1x8x9x4xbf16>
    %3 = vector.shape_cast %2 : vector<1x8x9x4xbf16> to vector<8x9x4xbf16>
    %c0_7 = arith.constant 0 : index
    %c0_8 = arith.constant 0 : index
    %c0_9 = arith.constant 0 : index
    %c0_10 = arith.constant 0 : index
    %4 = vector.load %arg3[%c0_7, %c0_8, %c0_9, %c0_10] : memref<1x9x9x4xbf16, #tpu.memory_space<vmem>>, vector<1x8x9x4xbf16>
    %5 = vector.shape_cast %4 : vector<1x8x9x4xbf16> to vector<8x9x4xbf16>
    %6 = vector.extract_strided_slice %3 {offsets = [0, 0, 0], sizes = [8, 8, 4], strides = [1, 1, 1]} : vector<8x9x4xbf16> to vector<8x8x4xbf16>
    %7 = vector.shape_cast %6 : vector<8x8x4xbf16> to vector<64x4xbf16>
    %8 = vector.extract_strided_slice %5 {offsets = [0, 0, 0], sizes = [8, 8, 4], strides = [1, 1, 1]} : vector<8x9x4xbf16> to vector<8x8x4xbf16>
    %9 = vector.shape_cast %8 : vector<8x8x4xbf16> to vector<64x4xbf16>
    %10 = vector.extract_strided_slice %3 {offsets = [0, 1, 0], sizes = [8, 8, 4], strides = [1, 1, 1]} : vector<8x9x4xbf16> to vector<8x8x4xbf16>
    %11 = vector.shape_cast %10 : vector<8x8x4xbf16> to vector<64x4xbf16>
    %12 = vector.extract_strided_slice %5 {offsets = [0, 1, 0], sizes = [8, 8, 4], strides = [1, 1, 1]} : vector<8x9x4xbf16> to vector<8x8x4xbf16>
    %13 = vector.shape_cast %12 : vector<8x8x4xbf16> to vector<64x4xbf16>
    %14 = vector.extract_strided_slice %0 {offsets = [0, 0, 0, 0], sizes = [1, 1, 4, 8], strides = [1, 1, 1, 1]} : vector<4x4x4x8xbf16> to vector<1x1x4x8xbf16>
    %15 = vector.shape_cast %14 : vector<1x1x4x8xbf16> to vector<4x8xbf16>
    %cst_11 = arith.constant dense<0.000000e+00> : vector<64x8xf32>
    %16 = tpu.matmul %7, %15, %cst_11 {dimension_numbers = #tpu.dot_dimension_numbers<[1], [0], [0], [1], [0, 0, 1, 1], [], []>} : vector<64x4xbf16>, vector<4x8xbf16>, vector<64x8xf32> -> vector<64x8xf32>
    %17 = arith.addf %1, %16 : vector<64x8xf32>
    %18 = vector.extract_strided_slice %0 {offsets = [0, 1, 0, 0], sizes = [1, 1, 4, 8], strides = [1, 1, 1, 1]} : vector<4x4x4x8xbf16> to vector<1x1x4x8xbf16>
    %19 = vector.shape_cast %18 : vector<1x1x4x8xbf16> to vector<4x8xbf16>
    %cst_12 = arith.constant dense<0.000000e+00> : vector<64x8xf32>
    %20 = tpu.matmul %9, %19, %cst_12 {dimension_numbers = #tpu.dot_dimension_numbers<[1], [0], [0], [1], [0, 0, 1, 1], [], []>} : vector<64x4xbf16>, vector<4x8xbf16>, vector<64x8xf32> -> vector<64x8xf32>
    %21 = arith.addf %17, %20 : vector<64x8xf32>
    %22 = vector.extract_strided_slice %0 {offsets = [0, 2, 0, 0], sizes = [1, 1, 4, 8], strides = [1, 1, 1, 1]} : vector<4x4x4x8xbf16> to vector<1x1x4x8xbf16>
    %23 = vector.shape_cast %22 : vector<1x1x4x8xbf16> to vector<4x8xbf16>
    %cst_13 = arith.constant dense<0.000000e+00> : vector<64x8xf32>
    %24 = tpu.matmul %11, %23, %cst_13 {dimension_numbers = #tpu.dot_dimension_numbers<[1], [0], [0], [1], [0, 0, 1, 1], [], []>} : vector<64x4xbf16>, vector<4x8xbf16>, vector<64x8xf32> -> vector<64x8xf32>
    %25 = arith.addf %21, %24 : vector<64x8xf32>
    %26 = vector.extract_strided_slice %0 {offsets = [0, 3, 0, 0], sizes = [1, 1, 4, 8], strides = [1, 1, 1, 1]} : vector<4x4x4x8xbf16> to vector<1x1x4x8xbf16>
    %27 = vector.shape_cast %26 : vector<1x1x4x8xbf16> to vector<4x8xbf16>
    %cst_14 = arith.constant dense<0.000000e+00> : vector<64x8xf32>
    %28 = tpu.matmul %13, %27, %cst_14 {dimension_numbers = #tpu.dot_dimension_numbers<[1], [0], [0], [1], [0, 0, 1, 1], [], []>} : vector<64x4xbf16>, vector<4x8xbf16>, vector<64x8xf32> -> vector<64x8xf32>
    %29 = arith.addf %25, %28 : vector<64x8xf32>
    %c0_15 = arith.constant 0 : index
    %c0_16 = arith.constant 0 : index
    %c0_17 = arith.constant 0 : index
    %c0_18 = arith.constant 0 : index
    %30 = vector.load %arg4[%c0_15, %c0_16, %c0_17, %c0_18] : memref<1x9x9x4xbf16, #tpu.memory_space<vmem>>, vector<1x8x9x4xbf16>
    %31 = vector.shape_cast %30 : vector<1x8x9x4xbf16> to vector<8x9x4xbf16>
    %c0_19 = arith.constant 0 : index
    %c0_20 = arith.constant 0 : index
    %c0_21 = arith.constant 0 : index
    %c0_22 = arith.constant 0 : index
    %32 = vector.load %arg5[%c0_19, %c0_20, %c0_21, %c0_22] : memref<1x9x9x4xbf16, #tpu.memory_space<vmem>>, vector<1x8x9x4xbf16>
    %33 = vector.shape_cast %32 : vector<1x8x9x4xbf16> to vector<8x9x4xbf16>
    %34 = vector.extract_strided_slice %31 {offsets = [0, 0, 0], sizes = [8, 8, 4], strides = [1, 1, 1]} : vector<8x9x4xbf16> to vector<8x8x4xbf16>
    %35 = vector.shape_cast %34 : vector<8x8x4xbf16> to vector<64x4xbf16>
    %36 = vector.extract_strided_slice %33 {offsets = [0, 0, 0], sizes = [8, 8, 4], strides = [1, 1, 1]} : vector<8x9x4xbf16> to vector<8x8x4xbf16>
    %37 = vector.shape_cast %36 : vector<8x8x4xbf16> to vector<64x4xbf16>
    %38 = vector.extract_strided_slice %31 {offsets = [0, 1, 0], sizes = [8, 8, 4], strides = [1, 1, 1]} : vector<8x9x4xbf16> to vector<8x8x4xbf16>
    %39 = vector.shape_cast %38 : vector<8x8x4xbf16> to vector<64x4xbf16>
    %40 = vector.extract_strided_slice %33 {offsets = [0, 1, 0], sizes = [8, 8, 4], strides = [1, 1, 1]} : vector<8x9x4xbf16> to vector<8x8x4xbf16>
    %41 = vector.shape_cast %40 : vector<8x8x4xbf16> to vector<64x4xbf16>
    %42 = vector.extract_strided_slice %0 {offsets = [1, 0, 0, 0], sizes = [1, 1, 4, 8], strides = [1, 1, 1, 1]} : vector<4x4x4x8xbf16> to vector<1x1x4x8xbf16>
    %43 = vector.shape_cast %42 : vector<1x1x4x8xbf16> to vector<4x8xbf16>
    %cst_23 = arith.constant dense<0.000000e+00> : vector<64x8xf32>
    %44 = tpu.matmul %35, %43, %cst_23 {dimension_numbers = #tpu.dot_dimension_numbers<[1], [0], [0], [1], [0, 0, 1, 1], [], []>} : vector<64x4xbf16>, vector<4x8xbf16>, vector<64x8xf32> -> vector<64x8xf32>
    %45 = arith.addf %29, %44 : vector<64x8xf32>
    %46 = vector.extract_strided_slice %0 {offsets = [1, 1, 0, 0], sizes = [1, 1, 4, 8], strides = [1, 1, 1, 1]} : vector<4x4x4x8xbf16> to vector<1x1x4x8xbf16>
    %47 = vector.shape_cast %46 : vector<1x1x4x8xbf16> to vector<4x8xbf16>
    %cst_24 = arith.constant dense<0.000000e+00> : vector<64x8xf32>
    %48 = tpu.matmul %37, %47, %cst_24 {dimension_numbers = #tpu.dot_dimension_numbers<[1], [0], [0], [1], [0, 0, 1, 1], [], []>} : vector<64x4xbf16>, vector<4x8xbf16>, vector<64x8xf32> -> vector<64x8xf32>
    %49 = arith.addf %45, %48 : vector<64x8xf32>
    %50 = vector.extract_strided_slice %0 {offsets = [1, 2, 0, 0], sizes = [1, 1, 4, 8], strides = [1, 1, 1, 1]} : vector<4x4x4x8xbf16> to vector<1x1x4x8xbf16>
    %51 = vector.shape_cast %50 : vector<1x1x4x8xbf16> to vector<4x8xbf16>
    %cst_25 = arith.constant dense<0.000000e+00> : vector<64x8xf32>
    %52 = tpu.matmul %39, %51, %cst_25 {dimension_numbers = #tpu.dot_dimension_numbers<[1], [0], [0], [1], [0, 0, 1, 1], [], []>} : vector<64x4xbf16>, vector<4x8xbf16>, vector<64x8xf32> -> vector<64x8xf32>
    %53 = arith.addf %49, %52 : vector<64x8xf32>
    %54 = vector.extract_strided_slice %0 {offsets = [1, 3, 0, 0], sizes = [1, 1, 4, 8], strides = [1, 1, 1, 1]} : vector<4x4x4x8xbf16> to vector<1x1x4x8xbf16>
    %55 = vector.shape_cast %54 : vector<1x1x4x8xbf16> to vector<4x8xbf16>
    %cst_26 = arith.constant dense<0.000000e+00> : vector<64x8xf32>
    %56 = tpu.matmul %41, %55, %cst_26 {dimension_numbers = #tpu.dot_dimension_numbers<[1], [0], [0], [1], [0, 0, 1, 1], [], []>} : vector<64x4xbf16>, vector<4x8xbf16>, vector<64x8xf32> -> vector<64x8xf32>
    %57 = arith.addf %53, %56 : vector<64x8xf32>
    %c0_27 = arith.constant 0 : index
    %c1 = arith.constant 1 : index
    %c0_28 = arith.constant 0 : index
    %c0_29 = arith.constant 0 : index
    %58 = vector.load %arg2[%c0_27, %c1, %c0_28, %c0_29] : memref<1x9x9x4xbf16, #tpu.memory_space<vmem>>, vector<1x8x9x4xbf16>
    %59 = vector.shape_cast %58 : vector<1x8x9x4xbf16> to vector<8x9x4xbf16>
    %c0_30 = arith.constant 0 : index
    %c1_31 = arith.constant 1 : index
    %c0_32 = arith.constant 0 : index
    %c0_33 = arith.constant 0 : index
    %60 = vector.load %arg3[%c0_30, %c1_31, %c0_32, %c0_33] : memref<1x9x9x4xbf16, #tpu.memory_space<vmem>>, vector<1x8x9x4xbf16>
    %61 = vector.shape_cast %60 : vector<1x8x9x4xbf16> to vector<8x9x4xbf16>
    %62 = vector.extract_strided_slice %59 {offsets = [0, 0, 0], sizes = [8, 8, 4], strides = [1, 1, 1]} : vector<8x9x4xbf16> to vector<8x8x4xbf16>
    %63 = vector.shape_cast %62 : vector<8x8x4xbf16> to vector<64x4xbf16>
    %64 = vector.extract_strided_slice %61 {offsets = [0, 0, 0], sizes = [8, 8, 4], strides = [1, 1, 1]} : vector<8x9x4xbf16> to vector<8x8x4xbf16>
    %65 = vector.shape_cast %64 : vector<8x8x4xbf16> to vector<64x4xbf16>
    %66 = vector.extract_strided_slice %59 {offsets = [0, 1, 0], sizes = [8, 8, 4], strides = [1, 1, 1]} : vector<8x9x4xbf16> to vector<8x8x4xbf16>
    %67 = vector.shape_cast %66 : vector<8x8x4xbf16> to vector<64x4xbf16>
    %68 = vector.extract_strided_slice %61 {offsets = [0, 1, 0], sizes = [8, 8, 4], strides = [1, 1, 1]} : vector<8x9x4xbf16> to vector<8x8x4xbf16>
    %69 = vector.shape_cast %68 : vector<8x8x4xbf16> to vector<64x4xbf16>
    %70 = vector.extract_strided_slice %0 {offsets = [2, 0, 0, 0], sizes = [1, 1, 4, 8], strides = [1, 1, 1, 1]} : vector<4x4x4x8xbf16> to vector<1x1x4x8xbf16>
    %71 = vector.shape_cast %70 : vector<1x1x4x8xbf16> to vector<4x8xbf16>
    %cst_34 = arith.constant dense<0.000000e+00> : vector<64x8xf32>
    %72 = tpu.matmul %63, %71, %cst_34 {dimension_numbers = #tpu.dot_dimension_numbers<[1], [0], [0], [1], [0, 0, 1, 1], [], []>} : vector<64x4xbf16>, vector<4x8xbf16>, vector<64x8xf32> -> vector<64x8xf32>
    %73 = arith.addf %57, %72 : vector<64x8xf32>
    %74 = vector.extract_strided_slice %0 {offsets = [2, 1, 0, 0], sizes = [1, 1, 4, 8], strides = [1, 1, 1, 1]} : vector<4x4x4x8xbf16> to vector<1x1x4x8xbf16>
    %75 = vector.shape_cast %74 : vector<1x1x4x8xbf16> to vector<4x8xbf16>
    %cst_35 = arith.constant dense<0.000000e+00> : vector<64x8xf32>
    %76 = tpu.matmul %65, %75, %cst_35 {dimension_numbers = #tpu.dot_dimension_numbers<[1], [0], [0], [1], [0, 0, 1, 1], [], []>} : vector<64x4xbf16>, vector<4x8xbf16>, vector<64x8xf32> -> vector<64x8xf32>
    %77 = arith.addf %73, %76 : vector<64x8xf32>
    %78 = vector.extract_strided_slice %0 {offsets = [2, 2, 0, 0], sizes = [1, 1, 4, 8], strides = [1, 1, 1, 1]} : vector<4x4x4x8xbf16> to vector<1x1x4x8xbf16>
    %79 = vector.shape_cast %78 : vector<1x1x4x8xbf16> to vector<4x8xbf16>
    %cst_36 = arith.constant dense<0.000000e+00> : vector<64x8xf32>
    %80 = tpu.matmul %67, %79, %cst_36 {dimension_numbers = #tpu.dot_dimension_numbers<[1], [0], [0], [1], [0, 0, 1, 1], [], []>} : vector<64x4xbf16>, vector<4x8xbf16>, vector<64x8xf32> -> vector<64x8xf32>
    %81 = arith.addf %77, %80 : vector<64x8xf32>
    %82 = vector.extract_strided_slice %0 {offsets = [2, 3, 0, 0], sizes = [1, 1, 4, 8], strides = [1, 1, 1, 1]} : vector<4x4x4x8xbf16> to vector<1x1x4x8xbf16>
    %83 = vector.shape_cast %82 : vector<1x1x4x8xbf16> to vector<4x8xbf16>
    %cst_37 = arith.constant dense<0.000000e+00> : vector<64x8xf32>
    %84 = tpu.matmul %69, %83, %cst_37 {dimension_numbers = #tpu.dot_dimension_numbers<[1], [0], [0], [1], [0, 0, 1, 1], [], []>} : vector<64x4xbf16>, vector<4x8xbf16>, vector<64x8xf32> -> vector<64x8xf32>
    %85 = arith.addf %81, %84 : vector<64x8xf32>
    %c0_38 = arith.constant 0 : index
    %c1_39 = arith.constant 1 : index
    %c0_40 = arith.constant 0 : index
    %c0_41 = arith.constant 0 : index
    %86 = vector.load %arg4[%c0_38, %c1_39, %c0_40, %c0_41] : memref<1x9x9x4xbf16, #tpu.memory_space<vmem>>, vector<1x8x9x4xbf16>
    %87 = vector.shape_cast %86 : vector<1x8x9x4xbf16> to vector<8x9x4xbf16>
    %c0_42 = arith.constant 0 : index
    %c1_43 = arith.constant 1 : index
    %c0_44 = arith.constant 0 : index
    %c0_45 = arith.constant 0 : index
    %88 = vector.load %arg5[%c0_42, %c1_43, %c0_44, %c0_45] : memref<1x9x9x4xbf16, #tpu.memory_space<vmem>>, vector<1x8x9x4xbf16>
    %89 = vector.shape_cast %88 : vector<1x8x9x4xbf16> to vector<8x9x4xbf16>
    %90 = vector.extract_strided_slice %87 {offsets = [0, 0, 0], sizes = [8, 8, 4], strides = [1, 1, 1]} : vector<8x9x4xbf16> to vector<8x8x4xbf16>
    %91 = vector.shape_cast %90 : vector<8x8x4xbf16> to vector<64x4xbf16>
    %92 = vector.extract_strided_slice %89 {offsets = [0, 0, 0], sizes = [8, 8, 4], strides = [1, 1, 1]} : vector<8x9x4xbf16> to vector<8x8x4xbf16>
    %93 = vector.shape_cast %92 : vector<8x8x4xbf16> to vector<64x4xbf16>
    %94 = vector.extract_strided_slice %87 {offsets = [0, 1, 0], sizes = [8, 8, 4], strides = [1, 1, 1]} : vector<8x9x4xbf16> to vector<8x8x4xbf16>
    %95 = vector.shape_cast %94 : vector<8x8x4xbf16> to vector<64x4xbf16>
    %96 = vector.extract_strided_slice %89 {offsets = [0, 1, 0], sizes = [8, 8, 4], strides = [1, 1, 1]} : vector<8x9x4xbf16> to vector<8x8x4xbf16>
    %97 = vector.shape_cast %96 : vector<8x8x4xbf16> to vector<64x4xbf16>
    %98 = vector.extract_strided_slice %0 {offsets = [3, 0, 0, 0], sizes = [1, 1, 4, 8], strides = [1, 1, 1, 1]} : vector<4x4x4x8xbf16> to vector<1x1x4x8xbf16>
    %99 = vector.shape_cast %98 : vector<1x1x4x8xbf16> to vector<4x8xbf16>
    %cst_46 = arith.constant dense<0.000000e+00> : vector<64x8xf32>
    %100 = tpu.matmul %91, %99, %cst_46 {dimension_numbers = #tpu.dot_dimension_numbers<[1], [0], [0], [1], [0, 0, 1, 1], [], []>} : vector<64x4xbf16>, vector<4x8xbf16>, vector<64x8xf32> -> vector<64x8xf32>
    %101 = arith.addf %85, %100 : vector<64x8xf32>
    %102 = vector.extract_strided_slice %0 {offsets = [3, 1, 0, 0], sizes = [1, 1, 4, 8], strides = [1, 1, 1, 1]} : vector<4x4x4x8xbf16> to vector<1x1x4x8xbf16>
    %103 = vector.shape_cast %102 : vector<1x1x4x8xbf16> to vector<4x8xbf16>
    %cst_47 = arith.constant dense<0.000000e+00> : vector<64x8xf32>
    %104 = tpu.matmul %93, %103, %cst_47 {dimension_numbers = #tpu.dot_dimension_numbers<[1], [0], [0], [1], [0, 0, 1, 1], [], []>} : vector<64x4xbf16>, vector<4x8xbf16>, vector<64x8xf32> -> vector<64x8xf32>
    %105 = arith.addf %101, %104 : vector<64x8xf32>
    %106 = vector.extract_strided_slice %0 {offsets = [3, 2, 0, 0], sizes = [1, 1, 4, 8], strides = [1, 1, 1, 1]} : vector<4x4x4x8xbf16> to vector<1x1x4x8xbf16>
    %107 = vector.shape_cast %106 : vector<1x1x4x8xbf16> to vector<4x8xbf16>
    %cst_48 = arith.constant dense<0.000000e+00> : vector<64x8xf32>
    %108 = tpu.matmul %95, %107, %cst_48 {dimension_numbers = #tpu.dot_dimension_numbers<[1], [0], [0], [1], [0, 0, 1, 1], [], []>} : vector<64x4xbf16>, vector<4x8xbf16>, vector<64x8xf32> -> vector<64x8xf32>
    %109 = arith.addf %105, %108 : vector<64x8xf32>
    %110 = vector.extract_strided_slice %0 {offsets = [3, 3, 0, 0], sizes = [1, 1, 4, 8], strides = [1, 1, 1, 1]} : vector<4x4x4x8xbf16> to vector<1x1x4x8xbf16>
    %111 = vector.shape_cast %110 : vector<1x1x4x8xbf16> to vector<4x8xbf16>
    %cst_49 = arith.constant dense<0.000000e+00> : vector<64x8xf32>
    %112 = tpu.matmul %97, %111, %cst_49 {dimension_numbers = #tpu.dot_dimension_numbers<[1], [0], [0], [1], [0, 0, 1, 1], [], []>} : vector<64x4xbf16>, vector<4x8xbf16>, vector<64x8xf32> -> vector<64x8xf32>
    %113 = arith.addf %109, %112 : vector<64x8xf32>
    %cst_50 = arith.constant dense<0.000000e+00> : vector<8xf32>
    %114 = vector.multi_reduction <add>, %113, %cst_50 [0] : vector<64x8xf32> to vector<8xf32>
    %115 = vector.shape_cast %114 : vector<8xf32> to vector<1x8xf32>
    %cst_51 = arith.constant 1.562500e-02 : f32
    %116 = vector.broadcast %cst_51 : f32 to vector<1x8xf32>
    %117 = arith.mulf %115, %116 : vector<1x8xf32>
    %118 = arith.mulf %113, %113 : vector<64x8xf32>
    %cst_52 = arith.constant dense<0.000000e+00> : vector<8xf32>
    %119 = vector.multi_reduction <add>, %118, %cst_52 [0] : vector<64x8xf32> to vector<8xf32>
    %120 = vector.shape_cast %119 : vector<8xf32> to vector<1x8xf32>
    %cst_53 = arith.constant 1.562500e-02 : f32
    %121 = vector.broadcast %cst_53 : f32 to vector<1x8xf32>
    %122 = arith.mulf %120, %121 : vector<1x8xf32>
    %123 = arith.mulf %117, %117 : vector<1x8xf32>
    %124 = arith.subf %122, %123 : vector<1x8xf32>
    %cst_54 = arith.constant 0.000000e+00 : f32
    %125 = vector.broadcast %cst_54 : f32 to vector<1x8xf32>
    %126 = arith.maximumf %124, %125 : vector<1x8xf32>
    %127 = vector.broadcast %117 : vector<1x8xf32> to vector<64x8xf32>
    %128 = arith.subf %113, %127 : vector<64x8xf32>
    %cst_55 = arith.constant 9.99999974E-6 : f32
    %129 = vector.broadcast %cst_55 : f32 to vector<1x8xf32>
    %130 = arith.addf %126, %129 : vector<1x8xf32>
    %131 = math.rsqrt %130 : vector<1x8xf32>
    %132 = vector.broadcast %131 : vector<1x8xf32> to vector<64x8xf32>
    %133 = arith.mulf %128, %132 : vector<64x8xf32>
    %cst_56 = arith.constant 0.000000e+00 : f32
    %134 = vector.broadcast %cst_56 : f32 to vector<64x8xf32>
    %135 = arith.cmpf oge, %133, %134 : vector<64x8xf32>
    %cst_57 = arith.constant 2.000000e-01 : f32
    %136 = vector.broadcast %cst_57 : f32 to vector<64x8xf32>
    %137 = arith.mulf %136, %133 : vector<64x8xf32>
    %138 = arith.select %135, %133, %137 : vector<64x8xi1>, vector<64x8xf32>
    %139 = vector.shape_cast %138 : vector<64x8xf32> to vector<8x8x8xf32>
    %c0_58 = arith.constant 0 : index
    %c0_59 = arith.constant 0 : index
    %c0_60 = arith.constant 0 : index
    %c0_61 = arith.constant 0 : index
    %140 = vector.load %arg7[%c0_58, %c0_59, %c0_60, %c0_61] : memref<1x8x8x8xf32, #tpu.memory_space<vmem>>, vector<1x8x8x8xf32>
    %141 = vector.shape_cast %140 : vector<1x8x8x8xf32> to vector<8x8x8xf32>
    %142 = vector.shape_cast %139 : vector<8x8x8xf32> to vector<1x8x8x8xf32>
    tpu.vector_store %arg7[%c0_58, %c0_59, %c0_60, %c0_61], %142 {strides = array<i32>} : memref<1x8x8x8xf32, #tpu.memory_space<vmem>>, vector<1x8x8x8xf32>,
    return
  }
  func.func @transform_0(%arg0: i32, %arg1: i32) -> (i32, i32, i32, i32) {
    %c0_i32 = arith.constant 0 : i32
    %c0_i32_0 = arith.constant 0 : i32
    %c0_i32_1 = arith.constant 0 : i32
    %c0_i32_2 = arith.constant 0 : i32
    return %arg0, %c0_i32, %c0_i32_0, %c0_i32_1 : i32, i32, i32, i32
  }
  func.func @transform_1(%arg0: i32, %arg1: i32) -> (i32, i32, i32, i32) {
    %c0_i32 = arith.constant 0 : i32
    %c0_i32_0 = arith.constant 0 : i32
    %c0_i32_1 = arith.constant 0 : i32
    %c0_i32_2 = arith.constant 0 : i32
    return %arg0, %c0_i32, %c0_i32_0, %c0_i32_1 : i32, i32, i32, i32
  }
  func.func @transform_2(%arg0: i32, %arg1: i32) -> (i32, i32, i32, i32) {
    %c0_i32 = arith.constant 0 : i32
    %c0_i32_0 = arith.constant 0 : i32
    %c0_i32_1 = arith.constant 0 : i32
    %c0_i32_2 = arith.constant 0 : i32
    return %arg0, %c0_i32, %c0_i32_0, %c0_i32_1 : i32, i32, i32, i32
  }
  func.func @transform_3(%arg0: i32, %arg1: i32) -> (i32, i32, i32, i32) {
    %c0_i32 = arith.constant 0 : i32
    %c0_i32_0 = arith.constant 0 : i32
    %c0_i32_1 = arith.constant 0 : i32
    %c0_i32_2 = arith.constant 0 : i32
    return %arg0, %c0_i32, %c0_i32_0, %c0_i32_1 : i32, i32, i32, i32
  }
  func.func @transform_4(%arg0: i32, %arg1: i32) -> (i32, i32, i32, i32) {
    %c0_i32 = arith.constant 0 : i32
    %c0_i32_0 = arith.constant 0 : i32
    %c0_i32_1 = arith.constant 0 : i32
    %c0_i32_2 = arith.constant 0 : i32
    return %c0_i32, %c0_i32_0, %c0_i32_1, %arg1 : i32, i32, i32, i32
  }
  func.func @transform_5(%arg0: i32, %arg1: i32) -> (i32, i32, i32, i32) {
    %c0_i32 = arith.constant 0 : i32
    %c0_i32_0 = arith.constant 0 : i32
    %c0_i32_1 = arith.constant 0 : i32
    return %arg0, %c0_i32, %c0_i32_0, %arg1 : i32, i32, i32, i32
  }
}

</mosaic_0001>

<llo_original>
// kernel: disc_block.1
$region0: #{disc_block.1}
  #allocation0 [shape = 'u32[]', space=smem, size = 0x4, offset = 0x4, fixed_abs, tag = 'smem constant byte address 0x4 - core index']
  #allocation1 [shape = 'u32[144,128]{1,0:T(1,128)}', space=vmem, size = 0x12000, scoped, tag = 'internal scratch']
  %s0 = inlined_call_operand.vmem [shape: bf16[2,9,9,4], index: 0, kind: input, shape index: {}]
  %s1 = inlined_call_operand.vmem [shape: bf16[2,9,9,4], index: 1, kind: input, shape index: {}]
  %s2 = inlined_call_operand.vmem [shape: bf16[2,9,9,4], index: 2, kind: input, shape index: {}]
  %s3 = inlined_call_operand.vmem [shape: bf16[2,9,9,4], index: 3, kind: input, shape index: {}]
  %s4 = inlined_call_operand.vmem [shape: bf16[4,4,4,8], index: 4, kind: input, shape index: {}]
  %s5 = inlined_call_operand.vmem [shape: f32[2,8,8,8], index: 5, kind: output, shape index: {}]
  %s6 = sld [smem:[#allocation0]]
  $region53: #{disc_block.1} parent=0
    _
  %s8 = ssub.s32 1, %s6
  %s9 = scalar_select 0, %s8, %s6
  loop: start=0, step=1, limit=4
  $region2: #{disc_block.1} parent=0 // loop_pre_header
    _
  $region3: #{disc_block.1} parent=0 // loop_header
    %s11 = sphi 0, %s15
    %p12 = scmp.ge.s32.totalorder %s11, 4
    %s18 = sphi 0, %s30
    %s19 = sphi 0, %s26
    %s20 = sphi 0, %s18
    %s21 = sphi 0, %s19
    %s22 = sphi 0, %s20
    %s23 = sphi 0, %s21
    %s33 = sphi 0, %s35
    %s36 = sphi 0, %s33
    %s37 = sphi 0, %s36
    %s53 = sphi 0, %s37
    %s59 = sphi 0, %s61
    %s62 = sphi 0, %s59
    %s63 = sphi 0, %s62
    %s79 = sphi 0, %s63
    %s85 = sphi 0, %s87
    %s88 = sphi 0, %s85
    %s89 = sphi 0, %s88
    %s105 = sphi 0, %s89
    %s111 = sphi 0, %s113
    %s114 = sphi 0, %s111
    %s115 = sphi 0, %s114
    %s131 = sphi 0, %s115
    %s137 = sphi 0, %s139
    %s140 = sphi 0, %s137
    %s141 = sphi 0, %s140
    %s157 = sphi 0, %s141
    %s165 = sphi 0, %s167
    %s168 = sphi 0, %s165
    %s169 = sphi 0, %s168
    %s185 = sphi 0, %s169
  $region4: #{disc_block.1} parent=0 // loop_header_branch
    %14 = sbr.rel (%p12) target = $region8
  $region5: #{disc_block.1} parent=0 // loop_body
    %s16 = ssub.s32 %s11, 1
    %s17 = ssub.s32 %s11, 2
    %s24 = sadd.s32 1, %s19
    %p25 = scmp.ge.s32.totalorder %s24, 1
    %s26 = scalar_select %p25, 0, %s24
    %s27 = sadd.s32 1, %s18
    %s28 = scalar_select %p25, %s27, %s18
    %p29 = scmp.ge.s32.totalorder %s28, 2
    %s30 = scalar_select %p29, 0, %s28
    %s31 = ssub.s32 %s18, %s30
    %p32 = scmp.eq.s32.totalorder %s31, 0
    %s34 = sadd.s32 %s33, 1
    %s35 = scalar_select %p32, %s33, %s34
    %p38 = pneg %p32
    %p39 = scmp.eq.s32.totalorder %s11, 1
    %p40 = por %p38, %p39
    %p41 = scmp.ne.s32.totalorder %s33, %s36
    %p42 = scmp.eq.s32.totalorder %s11, 0
    %p43 = por %p41, %p42
    %p44 = scmp.ne.s32.totalorder %s33, %s36
    %p45 = scmp.eq.s32.totalorder %s16, 1
    %p46 = por %p44, %p45
    %p47 = scmp.ne.s32.totalorder %s36, %s37
    %p48 = scmp.eq.s32.totalorder %s16, 0
    %p49 = por %p47, %p48
    %p50 = scmp.ne.s32.totalorder %s36, %s37
    %p51 = scmp.eq.s32.totalorder %s17, 1
    %p52 = por %p50, %p51
    %p54 = scmp.ne.s32.totalorder %s37, %s53
    %p55 = scmp.eq.s32.totalorder %s17, 0
    %p56 = por %p54, %p55
    %s57 = ssub.s32 %s18, %s30
    %p58 = scmp.eq.s32.totalorder %s57, 0
    %s60 = sadd.s32 %s59, 1
    %s61 = scalar_select %p58, %s59, %s60
    %p64 = pneg %p58
    %p65 = scmp.eq.s32.totalorder %s11, 1
    %p66 = por %p64, %p65
    %p67 = scmp.ne.s32.totalorder %s59, %s62
    %p68 = scmp.eq.s32.totalorder %s11, 0
    %p69 = por %p67, %p68
    %p70 = scmp.ne.s32.totalorder %s59, %s62
    %p71 = scmp.eq.s32.totalorder %s16, 1
    %p72 = por %p70, %p71
    %p73 = scmp.ne.s32.totalorder %s62, %s63
    %p74 = scmp.eq.s32.totalorder %s16, 0
    %p75 = por %p73, %p74
    %p76 = scmp.ne.s32.totalorder %s62, %s63
    %p77 = scmp.eq.s32.totalorder %s17, 1
    %p78 = por %p76, %p77
    %p80 = scmp.ne.s32.totalorder %s63, %s79
    %p81 = scmp.eq.s32.totalorder %s17, 0
    %p82 = por %p80, %p81
    %s83 = ssub.s32 %s18, %s30
    %p84 = scmp.eq.s32.totalorder %s83, 0
    %s86 = sadd.s32 %s85, 1
    %s87 = scalar_select %p84, %s85, %s86
    %p90 = pneg %p84
    %p91 = scmp.eq.s32.totalorder %s11, 1
    %p92 = por %p90, %p91
    %p93 = scmp.ne.s32.totalorder %s85, %s88
    %p94 = scmp.eq.s32.totalorder %s11, 0
    %p95 = por %p93, %p94
    %p96 = scmp.ne.s32.totalorder %s85, %s88
    %p97 = scmp.eq.s32.totalorder %s16, 1
    %p98 = por %p96, %p97
    %p99 = scmp.ne.s32.totalorder %s88, %s89
    %p100 = scmp.eq.s32.totalorder %s16, 0
    %p101 = por %p99, %p100
    %p102 = scmp.ne.s32.totalorder %s88, %s89
    %p103 = scmp.eq.s32.totalorder %s17, 1
    %p104 = por %p102, %p103
    %p106 = scmp.ne.s32.totalorder %s89, %s105
    %p107 = scmp.eq.s32.totalorder %s17, 0
    %p108 = por %p106, %p107
    %s109 = ssub.s32 %s18, %s30
    %p110 = scmp.eq.s32.totalorder %s109, 0
    %s112 = sadd.s32 %s111, 1
    %s113 = scalar_select %p110, %s111, %s112
    %p116 = pneg %p110
    %p117 = scmp.eq.s32.totalorder %s11, 1
    %p118 = por %p116, %p117
    %p119 = scmp.ne.s32.totalorder %s111, %s114
    %p120 = scmp.eq.s32.totalorder %s11, 0
    %p121 = por %p119, %p120
    %p122 = scmp.ne.s32.totalorder %s111, %s114
    %p123 = scmp.eq.s32.totalorder %s16, 1
    %p124 = por %p122, %p123
    %p125 = scmp.ne.s32.totalorder %s114, %s115
    %p126 = scmp.eq.s32.totalorder %s16, 0
    %p127 = por %p125, %p126
    %p128 = scmp.ne.s32.totalorder %s114, %s115
    %p129 = scmp.eq.s32.totalorder %s17, 1
    %p130 = por %p128, %p129
    %p132 = scmp.ne.s32.totalorder %s115, %s131
    %p133 = scmp.eq.s32.totalorder %s17, 0
    %p134 = por %p132, %p133
    %s135 = ssub.s32 %s19, %s26
    %p136 = scmp.eq.s32.totalorder %s135, 0
    %s138 = sadd.s32 %s137, 1
    %s139 = scalar_select %p136, %s137, %s138
    %p142 = pneg %p136
    %p143 = scmp.eq.s32.totalorder %s11, 1
    %p144 = por %p142, %p143
    %p145 = scmp.ne.s32.totalorder %s137, %s140
    %p146 = scmp.eq.s32.totalorder %s11, 0
    %p147 = por %p145, %p146
    %p148 = scmp.ne.s32.totalorder %s137, %s140
    %p149 = scmp.eq.s32.totalorder %s16, 1
    %p150 = por %p148, %p149
    %p151 = scmp.ne.s32.totalorder %s140, %s141
    %p152 = scmp.eq.s32.totalorder %s16, 0
    %p153 = por %p151, %p152
    %p154 = scmp.ne.s32.totalorder %s140, %s141
    %p155 = scmp.eq.s32.totalorder %s17, 1
    %p156 = por %p154, %p155
    %p158 = scmp.ne.s32.totalorder %s141, %s157
    %p159 = scmp.eq.s32.totalorder %s17, 0
    %p160 = por %p158, %p159
    %s161 = ssub.s32 %s18, %s30
    %s162 = ssub.s32 %s19, %s26
    %s163 = sor.u32 %s161, %s162
    %p164 = scmp.eq.s32.totalorder %s163, 0
    %s166 = sadd.s32 %s165, 1
    %s167 = scalar_select %p164, %s165, %s166
    %p170 = pneg %p164
    %p171 = scmp.eq.s32.totalorder %s11, 1
    %p172 = por %p170, %p171
    %p173 = scmp.ne.s32.totalorder %s165, %s168
    %p174 = scmp.eq.s32.totalorder %s11, 0
    %p175 = por %p173, %p174
    %p176 = scmp.ne.s32.totalorder %s165, %s168
    %p177 = scmp.eq.s32.totalorder %s16, 1
    %p178 = por %p176, %p177
    %p179 = scmp.ne.s32.totalorder %s168, %s169
    %p180 = scmp.eq.s32.totalorder %s16, 0
    %p181 = por %p179, %p180
    %p182 = scmp.ne.s32.totalorder %s168, %s169
    %p183 = scmp.eq.s32.totalorder %s17, 1
    %p184 = por %p182, %p183
    %p186 = scmp.ne.s32.totalorder %s169, %s185
    %p187 = scmp.eq.s32.totalorder %s17, 0
    %p188 = por %p186, %p187
    %p189 = scmp.le.s32.totalorder 1, %s11
    %p190 = scmp.lt.s32.totalorder %s11, 3
    %p191 = pnand %p189, %p190
    %p192 = pneg %p191
    // Predicated region
    $region9: #{disc_block.1} parent=5 // pred_check
      _
    $region10: #{disc_block.1} parent=5 // pred_check_branch
      %194 = sbr.rel (%p191) target = $region12
    $region11: #{disc_block.1} parent=5 // pred_region
      %s195 = ssub.s32 %s11, 1
      // Predicated region
      $region13: #{disc_block.1} parent=11 // pred_check
        %p196 = pneg %p153
      $region14: #{disc_block.1} parent=11 // pred_check_branch
        %198 = sbr.rel (%p196) target = $region16
      $region15: #{disc_block.1} parent=11 // pred_region
        %p199 = scmp.lt.s32.totalorder %s21, 0
        %s200 = scalar_select %p199, %s21, 0
        %s201 = smul.addr %s200, 2
        %s202 = scalar_lea.vmem %s4, %s201
      $region16: #{disc_block.1} parent=11 // pred_fallthru
        _
    $region12: #{disc_block.1} parent=5 // pred_fallthru
      _
    %p203 = scmp.lt.s32.totalorder %s11, 2
    // Predicated region
    $region17: #{disc_block.1} parent=5 // pred_check
      %p204 = pneg %p203
    $region18: #{disc_block.1} parent=5 // pred_check_branch
      %206 = sbr.rel (%p204) target = $region20
    $region19: #{disc_block.1} parent=5 // pred_region
      // Predicated region
      $region21: #{disc_block.1} parent=19 // pred_check
        %p207 = pneg %p43
      $region22: #{disc_block.1} parent=19 // pred_check_branch
        %209 = sbr.rel (%p207) target = $region24
      $region23: #{disc_block.1} parent=19 // pred_region
        %p210 = scmp.lt.s32.totalorder %s18, 1
        %s211 = scalar_select %p210, %s18, 1
        %s212 = smul.addr %s211, 18
        %s213 = smul.addr %s212, 4
        %s214 = scalar_lea.vmem %s0, %s213
      $region24: #{disc_block.1} parent=19 // pred_fallthru
        _
      // Predicated region
      $region25: #{disc_block.1} parent=19 // pred_check
        %p215 = pneg %p69
      $region26: #{disc_block.1} parent=19 // pred_check_branch
        %217 = sbr.rel (%p215) target = $region28
      $region27: #{disc_block.1} parent=19 // pred_region
        %p218 = scmp.lt.s32.totalorder %s18, 1
        %s219 = scalar_select %p218, %s18, 1
        %s220 = smul.addr %s219, 18
        %s221 = smul.addr %s220, 4
        %s222 = scalar_lea.vmem %s1, %s221
      $region28: #{disc_block.1} parent=19 // pred_fallthru
        _
      // Predicated region
      $region29: #{disc_block.1} parent=19 // pred_check
        %p223 = pneg %p95
      $region30: #{disc_block.1} parent=19 // pred_check_branch
        %225 = sbr.rel (%p223) target = $region32
      $region31: #{disc_block.1} parent=19 // pred_region
        %p226 = scmp.lt.s32.totalorder %s18, 1
        %s227 = scalar_select %p226, %s18, 1
        %s228 = smul.addr %s227, 18
        %s229 = smul.addr %s228, 4
        %s230 = scalar_lea.vmem %s2, %s229
      $region32: #{disc_block.1} parent=19 // pred_fallthru
        _
      // Predicated region
      $region33: #{disc_block.1} parent=19 // pred_check
        %p231 = pneg %p121
      $region34: #{disc_block.1} parent=19 // pred_check_branch
        %233 = sbr.rel (%p231) target = $region36
      $region35: #{disc_block.1} parent=19 // pred_region
        %p234 = scmp.lt.s32.totalorder %s18, 1
        %s235 = scalar_select %p234, %s18, 1
        %s236 = smul.addr %s235, 18
        %s237 = smul.addr %s236, 4
        %s238 = scalar_lea.vmem %s3, %s237
      $region36: #{disc_block.1} parent=19 // pred_fallthru
        _
    $region20: #{disc_block.1} parent=5 // pred_fallthru
      _
    %p239 = scmp.le.s32.totalorder 1, %s11
    %p240 = scmp.lt.s32.totalorder %s11, 3
    %p241 = pnand %p239, %p240
    %p242 = pneg %p241
    // Predicated region
    $region37: #{disc_block.1} parent=5 // pred_check
      _
    $region38: #{disc_block.1} parent=5 // pred_check_branch
      %244 = sbr.rel (%p241) target = $region40
    $region39: #{disc_block.1} parent=5 // pred_region
      %s245 = ssub.s32 %s11, 1
      %p246 = scmp.lt.s32.totalorder %s20, 1
      %s247 = scalar_select %p246, %s20, 1
      %s248 = smul.addr %s247, 18
      %s249 = smul.addr %s248, 4
      %s250 = scalar_lea.vmem %s0, %s249
      %p251 = pneg %p49
      %p252 = pneg %p46
      %p253 = scmp.lt.s32.totalorder %s20, 1
      %s254 = scalar_select %p253, %s20, 1
      %s255 = smul.addr %s254, 18
      %s256 = smul.addr %s255, 4
      %s257 = scalar_lea.vmem %s1, %s256
      %p258 = pneg %p75
      %p259 = pneg %p72
      %p260 = scmp.lt.s32.totalorder %s20, 1
      %s261 = scalar_select %p260, %s20, 1
      %s262 = smul.addr %s261, 18
      %s263 = smul.addr %s262, 4
      %s264 = scalar_lea.vmem %s2, %s263
      %p265 = pneg %p101
      %p266 = pneg %p98
      %p267 = scmp.lt.s32.totalorder %s20, 1
      %s268 = scalar_select %p267, %s20, 1
      %s269 = smul.addr %s268, 18
      %s270 = smul.addr %s269, 4
      %s271 = scalar_lea.vmem %s3, %s270
      %p272 = pneg %p127
      %p273 = pneg %p124
      %p274 = scmp.lt.s32.totalorder %s21, 0
      %s275 = scalar_select %p274, %s21, 0
      %s276 = smul.addr %s275, 2
      %s277 = scalar_lea.vmem %s4, %s276
      %p278 = pneg %p153
      %p279 = pneg %p150
      %p280 = pneg %p181
      %p281 = pneg %p178
      %p282 = scmp.lt.s32.totalorder %s20, 1
      %s283 = scalar_select %p282, %s20, 1
      %p284 = scmp.lt.s32.totalorder %s21, 0
      %s285 = scalar_select %p284, %s21, 0
      %s286 = smul.addr %s283, 8
      %s287 = sadd.s32 %s285, %s286
      %s288 = smul.addr %s287, 8
      %s289 = scalar_lea.vmem %s5, %s288
      %p290 = scmp.lt.s32.totalorder %s20, 1
      %s291 = scalar_select %p290, %s20, 1
      %s292 = smul.addr %s291, 18
      %s293 = smul.addr %s292, 4
      %s294 = scalar_lea.vmem %s0, %s293
      %p295 = scmp.lt.s32.totalorder %s20, 1
      %s296 = scalar_select %p295, %s20, 1
      %s297 = smul.addr %s296, 18
      %s298 = smul.addr %s297, 4
      %s299 = scalar_lea.vmem %s1, %s298
      %p300 = scmp.lt.s32.totalorder %s20, 1
      %s301 = scalar_select %p300, %s20, 1
      %s302 = smul.addr %s301, 18
      %s303 = smul.addr %s302, 4
      %s304 = scalar_lea.vmem %s2, %s303
      %p305 = scmp.lt.s32.totalorder %s20, 1
      %s306 = scalar_select %p305, %s20, 1
      %s307 = smul.addr %s306, 18
      %s308 = smul.addr %s307, 4
      %s309 = scalar_lea.vmem %s3, %s308
      %p310 = scmp.lt.s32.totalorder %s21, 0
      %s311 = scalar_select %p310, %s21, 0
      %s312 = smul.addr %s311, 2
      %s313 = scalar_lea.vmem %s4, %s312
      %p314 = scmp.lt.s32.totalorder %s20, 1
      %s315 = scalar_select %p314, %s20, 1
      %p316 = scmp.lt.s32.totalorder %s21, 0
      %s317 = scalar_select %p316, %s21, 0
      %s318 = smul.addr %s315, 8
      %s319 = sadd.s32 %s317, %s318
      %s320 = smul.addr %s319, 8
      %s321 = scalar_lea.vmem %s5, %s320
      %v323 = vld [vmem:[%s313] sm:$0x3]
      %v324 = vld [vmem:[%s313 + $0x2] sm:$0x3]
      %v325 = vld [vmem:[%s313 + $0x4] sm:$0x3]
      %v326 = vld [vmem:[%s313 + $0x6] sm:$0x3]
      %v327 = vld [vmem:[%s313 + $0x8] sm:$0x3]
      %v328 = vld [vmem:[%s313 + $0xa] sm:$0x3]
      %v329 = vld [vmem:[%s313 + $0xc] sm:$0x3]
      %v330 = vld [vmem:[%s313 + $0xe] sm:$0x3]
      %v331 = vld [vmem:[%s313 + $0x10] sm:$0x3]
      %v332 = vld [vmem:[%s313 + $0x12] sm:$0x3]
      %v333 = vld [vmem:[%s313 + $0x14] sm:$0x3]
      %v334 = vld [vmem:[%s313 + $0x16] sm:$0x3]
      %v335 = vld [vmem:[%s313 + $0x18] sm:$0x3]
      %v336 = vld [vmem:[%s313 + $0x1a] sm:$0x3]
      %v337 = vld [vmem:[%s313 + $0x1c] sm:$0x3]
      %v338 = vld [vmem:[%s313 + $0x1e] sm:$0x3]
      %v339 = vld [vmem:[%s294] sm:$0xf]
      %v340 = vld [vmem:[%s294 + $0x4] sm:$0x1]
      %v341 = vld [vmem:[%s294 + $0x8] sm:$0xf]
      %v342 = vld [vmem:[%s294 + $0xc] sm:$0x1]
      %v343 = vld [vmem:[%s294 + $0x10] sm:$0xf]
      %v344 = vld [vmem:[%s294 + $0x14] sm:$0x1]
      %v345 = vld [vmem:[%s294 + $0x18] sm:$0xf]
      %v346 = vld [vmem:[%s294 + $0x1c] sm:$0x1]
      %v347 = vld [vmem:[%s294 + $0x20] sm:$0xf]
      %v348 = vld [vmem:[%s294 + $0x24] sm:$0x1]
      %v349 = vld [vmem:[%s294 + $0x28] sm:$0xf]
      %v350 = vld [vmem:[%s294 + $0x2c] sm:$0x1]
      %v351 = vld [vmem:[%s294 + $0x30] sm:$0xf]
      %v352 = vld [vmem:[%s294 + $0x34] sm:$0x1]
      %v353 = vld [vmem:[%s294 + $0x38] sm:$0xf]
      %v354 = vld [vmem:[%s294 + $0x3c] sm:$0x1]
      %v355 = vld [vmem:[%s299] sm:$0xf]
      %v356 = vld [vmem:[%s299 + $0x4] sm:$0x1]
      %v357 = vld [vmem:[%s299 + $0x8] sm:$0xf]
      %v358 = vld [vmem:[%s299 + $0xc] sm:$0x1]
      %v359 = vld [vmem:[%s299 + $0x10] sm:$0xf]
      %v360 = vld [vmem:[%s299 + $0x14] sm:$0x1]
      %v361 = vld [vmem:[%s299 + $0x18] sm:$0xf]
      %v362 = vld [vmem:[%s299 + $0x1c] sm:$0x1]
      %v363 = vld [vmem:[%s299 + $0x20] sm:$0xf]
      %v364 = vld [vmem:[%s299 + $0x24] sm:$0x1]
      %v365 = vld [vmem:[%s299 + $0x28] sm:$0xf]
      %v366 = vld [vmem:[%s299 + $0x2c] sm:$0x1]
      %v367 = vld [vmem:[%s299 + $0x30] sm:$0xf]
      %v368 = vld [vmem:[%s299 + $0x34] sm:$0x1]
      %v369 = vld [vmem:[%s299 + $0x38] sm:$0xf]
      %v370 = vld [vmem:[%s299 + $0x3c] sm:$0x1]
      %vm371 = vsmask.f32 3328
      %vm372 = vsmask.f32 7440
      %vm373 = vmor %vm371, %vm372
      %v375 = vshrl.u32 %v339, 16
      %v377 = vrot.slane %v375, 4
      %v378 = vshll.u32 %v339, 16
      %v380 = vrot.slane %v378, 5
      %v381 = vor.u32 %v377, %v380
      %v382 = vrot.slane %v381, 4
      %v384 = vshll.u32 %v340, 16
      %v386 = vrot.slane %v384, 5
      %v387 = vsel %vm373, %v382, %v386
      %v389 = vshrl.u32 %v341, 16
      %v391 = vrot.slane %v389, 4
      %v392 = vshll.u32 %v341, 16
      %v394 = vrot.slane %v392, 5
      %v395 = vor.u32 %v391, %v394
      %v396 = vrot.slane %v395, 4
      %v398 = vshll.u32 %v342, 16
      %v400 = vrot.slane %v398, 5
      %v401 = vsel %vm373, %v396, %v400
      %v403 = vshrl.u32 %v343, 16
      %v405 = vrot.slane %v403, 4
      %v406 = vshll.u32 %v343, 16
      %v408 = vrot.slane %v406, 5
      %v409 = vor.u32 %v405, %v408
      %v410 = vrot.slane %v409, 4
      %v412 = vshll.u32 %v344, 16
      %v414 = vrot.slane %v412, 5
      %v415 = vsel %vm373, %v410, %v414
      %v417 = vshrl.u32 %v345, 16
      %v419 = vrot.slane %v417, 4
      %v420 = vshll.u32 %v345, 16
      %v422 = vrot.slane %v420, 5
      %v423 = vor.u32 %v419, %v422
      %v424 = vrot.slane %v423, 4
      %v426 = vshll.u32 %v346, 16
      %v428 = vrot.slane %v426, 5
      %v429 = vsel %vm373, %v424, %v428
      %v431 = vshrl.u32 %v347, 16
      %v433 = vrot.slane %v431, 4
      %v434 = vshll.u32 %v347, 16
      %v436 = vrot.slane %v434, 5
      %v437 = vor.u32 %v433, %v436
      %v438 = vrot.slane %v437, 4
      %v440 = vshll.u32 %v348, 16
      %v442 = vrot.slane %v440, 5
      %v443 = vsel %vm373, %v438, %v442
      %v445 = vshrl.u32 %v349, 16
      %v447 = vrot.slane %v445, 4
      %v448 = vshll.u32 %v349, 16
      %v450 = vrot.slane %v448, 5
      %v451 = vor.u32 %v447, %v450
      %v452 = vrot.slane %v451, 4
      %v454 = vshll.u32 %v350, 16
      %v456 = vrot.slane %v454, 5
      %v457 = vsel %vm373, %v452, %v456
      %v459 = vshrl.u32 %v351, 16
      %v461 = vrot.slane %v459, 4
      %v462 = vshll.u32 %v351, 16
      %v464 = vrot.slane %v462, 5
      %v465 = vor.u32 %v461, %v464
      %v466 = vrot.slane %v465, 4
      %v468 = vshll.u32 %v352, 16
      %v470 = vrot.slane %v468, 5
      %v471 = vsel %vm373, %v466, %v470
      %v473 = vshrl.u32 %v353, 16
      %v475 = vrot.slane %v473, 4
      %v476 = vshll.u32 %v353, 16
      %v478 = vrot.slane %v476, 5
      %v479 = vor.u32 %v475, %v478
      %v480 = vrot.slane %v479, 4
      %v482 = vshll.u32 %v354, 16
      %v484 = vrot.slane %v482, 5
      %v485 = vsel %vm373, %v480, %v484
      %v487 = vshrl.u32 %v355, 16
      %v489 = vrot.slane %v487, 4
      %v490 = vshll.u32 %v355, 16
      %v492 = vrot.slane %v490, 5
      %v493 = vor.u32 %v489, %v492
      %v494 = vrot.slane %v493, 4
      %v496 = vshll.u32 %v356, 16
      %v498 = vrot.slane %v496, 5
      %v499 = vsel %vm373, %v494, %v498
      %v501 = vshrl.u32 %v357, 16
      %v503 = vrot.slane %v501, 4
      %v504 = vshll.u32 %v357, 16
      %v506 = vrot.slane %v504, 5
      %v507 = vor.u32 %v503, %v506
      %v508 = vrot.slane %v507, 4
      %v510 = vshll.u32 %v358, 16
      %v512 = vrot.slane %v510, 5
      %v513 = vsel %vm373, %v508, %v512
      %v515 = vshrl.u32 %v359, 16
      %v517 = vrot.slane %v515, 4
      %v518 = vshll.u32 %v359, 16
      %v520 = vrot.slane %v518, 5
      %v521 = vor.u32 %v517, %v520
      %v522 = vrot.slane %v521, 4
      %v524 = vshll.u32 %v360, 16
      %v526 = vrot.slane %v524, 5
      %v527 = vsel %vm373, %v522, %v526
      %v529 = vshrl.u32 %v361, 16
      %v531 = vrot.slane %v529, 4
      %v532 = vshll.u32 %v361, 16
      %v534 = vrot.slane %v532, 5
      %v535 = vor.u32 %v531, %v534
      %v536 = vrot.slane %v535, 4
      %v538 = vshll.u32 %v362, 16
      %v540 = vrot.slane %v538, 5
      %v541 = vsel %vm373, %v536, %v540
      %v543 = vshrl.u32 %v363, 16
      %v545 = vrot.slane %v543, 4
      %v546 = vshll.u32 %v363, 16
      %v548 = vrot.slane %v546, 5
      %v549 = vor.u32 %v545, %v548
      %v550 = vrot.slane %v549, 4
      %v552 = vshll.u32 %v364, 16
      %v554 = vrot.slane %v552, 5
      %v555 = vsel %vm373, %v550, %v554
      %v557 = vshrl.u32 %v365, 16
      %v559 = vrot.slane %v557, 4
      %v560 = vshll.u32 %v365, 16
      %v562 = vrot.slane %v560, 5
      %v563 = vor.u32 %v559, %v562
      %v564 = vrot.slane %v563, 4
      %v566 = vshll.u32 %v366, 16
      %v568 = vrot.slane %v566, 5
      %v569 = vsel %vm373, %v564, %v568
      %v571 = vshrl.u32 %v367, 16
      %v573 = vrot.slane %v571, 4
      %v574 = vshll.u32 %v367, 16
      %v576 = vrot.slane %v574, 5
      %v577 = vor.u32 %v573, %v576
      %v578 = vrot.slane %v577, 4
      %v580 = vshll.u32 %v368, 16
      %v582 = vrot.slane %v580, 5
      %v583 = vsel %vm373, %v578, %v582
      %v585 = vshrl.u32 %v369, 16
      %v587 = vrot.slane %v585, 4
      %v588 = vshll.u32 %v369, 16
      %v590 = vrot.slane %v588, 5
      %v591 = vor.u32 %v587, %v590
      %v592 = vrot.slane %v591, 4
      %v594 = vshll.u32 %v370, 16
      %v596 = vrot.slane %v594, 5
      %v597 = vsel %vm373, %v592, %v596
      %v606 = vunpack.c.l.b16 %v355
      %v607 = vunpack.c.l.b16 %v357
      %v608 = vunpack.c.l.b16 %v359
      %v609 = vunpack.c.l.b16 %v361
      %v610 = vunpack.c.l.b16 %v363
      %v611 = vunpack.c.l.b16 %v365
      %v612 = vunpack.c.l.b16 %v367
      %v613 = vunpack.c.l.b16 %v369
      %v614 = vpack.c.b16 %v607, %v606
      %v615 = vpack.c.b16 %v609, %v608
      %v616 = vpack.c.b16 %v611, %v610
      %v617 = vpack.c.b16 %v613, %v612
      %vm618 = vcmask 31744
      %v620 = vsel %vm618, %v614, 0
      %v623 = vsel %vm618, %v615, 0
      %v626 = vsel %vm618, %v616, 0
      %v629 = vsel %vm618, %v617, 0
      %vm631 = vcmask 1041408
      %v633 = vsel %vm631, %v324, 0
      %635 = vmatprep.subr.bf16.mxu0 0
      %636 = vmatpush1.bf16.msra.mxu0 %v633
      %637 = vmatprep.subr.bf16.mxu0 0
      %638 = vmatpush1.bf16.msra.mxu0 0
      %639 = vmatprep.subr.bf16.mxu0 0
      %640 = vmatpush1.bf16.msra.mxu0 0
      %641 = vmatprep.subr.bf16.mxu0 0
      %642 = vmatpush1.bf16.msra.mxu0 0
      %643 = vmatprep.subr.bf16.mxu0 0
      %644 = vmatpush1.bf16.msra.mxu0 0
      %645 = vmatprep.subr.bf16.mxu0 0
      %646 = vmatpush1.bf16.msra.mxu0 0
      %647 = vmatprep.subr.bf16.mxu0 0
      %648 = vmatpush1.bf16.msra.mxu0 0
      %649 = vmatprep.subr.bf16.mxu0 0
      %650 = vmatpush1.bf16.msra.mxu0 0
      %651 = vmatprep.subr.bf16.mxu0 0
      %652 = vmatpush1.bf16.msra.mxu0 0
      %653 = vmatprep.subr.bf16.mxu0 0
      %654 = vmatpush1.bf16.msra.mxu0 0
      %655 = vmatprep.subr.bf16.mxu0 0
      %656 = vmatpush1.bf16.msra.mxu0 0
      %657 = vmatprep.subr.bf16.mxu0 0
      %658 = vmatpush1.bf16.msra.mxu0 0
      %659 = vmatprep.subr.bf16.mxu0 0
      %660 = vmatpush1.bf16.msra.mxu0 0
      %661 = vmatprep.subr.bf16.mxu0 0
      %662 = vmatpush1.bf16.msra.mxu0 0
      %663 = vmatprep.subr.bf16.mxu0 0
      %664 = vmatpush1.bf16.msra.mxu0 0
      %665 = vmatprep.subr.bf16.mxu0 0
      %666 = vmatpush1.bf16.msra.mxu0 0
      %667 = vmatprep.mubr.bf16.mxu0 0
      %668 = vmatmul.mubr.bf16.gmra.mrb[0].mxu0 %v620
      %v669 = vpop.f32.mrb[0].mxu0
      %v670 = vadd.f32 0.0, %v669
      %v671 = vpop.f32.mrb[0].mxu0
      %v672 = vpop.f32.mrb[0].mxu0
      %v673 = vadd.f32 0.0, %v672
      %v674 = vpop.f32.mrb[0].mxu0
      %675 = vmatprep.mubr.bf16.mxu0 0
      %676 = vmatmul.mubr.bf16.gmra.mrb[0].mxu0 %v623
      %v677 = vpop.f32.mrb[0].mxu0
      %v678 = vadd.f32 0.0, %v677
      %v679 = vpop.f32.mrb[0].mxu0
      %v680 = vpop.f32.mrb[0].mxu0
      %v681 = vadd.f32 0.0, %v680
      %v682 = vpop.f32.mrb[0].mxu0
      %683 = vmatprep.mubr.bf16.mxu0 0
      %684 = vmatmul.mubr.bf16.gmra.mrb[0].mxu0 %v626
      %v685 = vpop.f32.mrb[0].mxu0
      %v686 = vadd.f32 0.0, %v685
      %v687 = vpop.f32.mrb[0].mxu0
      %v688 = vpop.f32.mrb[0].mxu0
      %v689 = vadd.f32 0.0, %v688
      %v690 = vpop.f32.mrb[0].mxu0
      %691 = vmatprep.mubr.bf16.mxu0 0
      %692 = vmatmul.mubr.bf16.gmra.mrb[0].mxu0 %v629
      %v693 = vpop.f32.mrb[0].mxu0
      %v694 = vadd.f32 0.0, %v693
      %v695 = vpop.f32.mrb[0].mxu0
      %v696 = vpop.f32.mrb[0].mxu0
      %v697 = vadd.f32 0.0, %v696
      %v698 = vpop.f32.mrb[0].mxu0
      %699 = vdwg.mxu0
      %v708 = vunpack.c.l.b16 %v339
      %v709 = vunpack.c.l.b16 %v341
      %v710 = vunpack.c.l.b16 %v343
      %v711 = vunpack.c.l.b16 %v345
      %v712 = vunpack.c.l.b16 %v347
      %v713 = vunpack.c.l.b16 %v349
      %v714 = vunpack.c.l.b16 %v351
      %v715 = vunpack.c.l.b16 %v353
      %v716 = vpack.c.b16 %v709, %v708
      %v717 = vpack.c.b16 %v711, %v710
      %v718 = vpack.c.b16 %v713, %v712
      %v719 = vpack.c.b16 %v715, %v714
      %v721 = vsel %vm618, %v716, 0
      %v724 = vsel %vm618, %v717, 0
      %v727 = vsel %vm618, %v718, 0
      %v730 = vsel %vm618, %v719, 0
      %v733 = vsel %vm631, %v323, 0
      %735 = vmatprep.subr.bf16.mxu0 0
      %736 = vmatpush1.bf16.msra.mxu0 %v733
      %737 = vmatprep.subr.bf16.mxu0 0
      %738 = vmatpush1.bf16.msra.mxu0 0
      %739 = vmatprep.subr.bf16.mxu0 0
      %740 = vmatpush1.bf16.msra.mxu0 0
      %741 = vmatprep.subr.bf16.mxu0 0
      %742 = vmatpush1.bf16.msra.mxu0 0
      %743 = vmatprep.subr.bf16.mxu0 0
      %744 = vmatpush1.bf16.msra.mxu0 0
      %745 = vmatprep.subr.bf16.mxu0 0
      %746 = vmatpush1.bf16.msra.mxu0 0
      %747 = vmatprep.subr.bf16.mxu0 0
      %748 = vmatpush1.bf16.msra.mxu0 0
      %749 = vmatprep.subr.bf16.mxu0 0
      %750 = vmatpush1.bf16.msra.mxu0 0
      %751 = vmatprep.subr.bf16.mxu0 0
      %752 = vmatpush1.bf16.msra.mxu0 0
      %753 = vmatprep.subr.bf16.mxu0 0
      %754 = vmatpush1.bf16.msra.mxu0 0
      %755 = vmatprep.subr.bf16.mxu0 0
      %756 = vmatpush1.bf16.msra.mxu0 0
      %757 = vmatprep.subr.bf16.mxu0 0
      %758 = vmatpush1.bf16.msra.mxu0 0
      %759 = vmatprep.subr.bf16.mxu0 0
      %760 = vmatpush1.bf16.msra.mxu0 0
      %761 = vmatprep.subr.bf16.mxu0 0
      %762 = vmatpush1.bf16.msra.mxu0 0
      %763 = vmatprep.subr.bf16.mxu0 0
      %764 = vmatpush1.bf16.msra.mxu0 0
      %765 = vmatprep.subr.bf16.mxu0 0
      %766 = vmatpush1.bf16.msra.mxu0 0
      %767 = vmatprep.mubr.bf16.mxu0 0
      %768 = vmatmul.mubr.bf16.gmra.mrb[0].mxu0 %v721
      %v769 = vpop.f32.mrb[0].mxu0
      %v770 = vadd.f32 %v670, %v769
      %v771 = vpop.f32.mrb[0].mxu0
      %v772 = vpop.f32.mrb[0].mxu0
      %v773 = vadd.f32 %v673, %v772
      %v774 = vpop.f32.mrb[0].mxu0
      %775 = vmatprep.mubr.bf16.mxu0 0
      %776 = vmatmul.mubr.bf16.gmra.mrb[0].mxu0 %v724
      %v777 = vpop.f32.mrb[0].mxu0
      %v778 = vadd.f32 %v678, %v777
      %v779 = vpop.f32.mrb[0].mxu0
      %v780 = vpop.f32.mrb[0].mxu0
      %v781 = vadd.f32 %v681, %v780
      %v782 = vpop.f32.mrb[0].mxu0
      %783 = vmatprep.mubr.bf16.mxu0 0
      %784 = vmatmul.mubr.bf16.gmra.mrb[0].mxu0 %v727
      %v785 = vpop.f32.mrb[0].mxu0
      %v786 = vadd.f32 %v686, %v785
      %v787 = vpop.f32.mrb[0].mxu0
      %v788 = vpop.f32.mrb[0].mxu0
      %v789 = vadd.f32 %v689, %v788
      %v790 = vpop.f32.mrb[0].mxu0
      %791 = vmatprep.mubr.bf16.mxu0 0
      %792 = vmatmul.mubr.bf16.gmra.mrb[0].mxu0 %v730
      %v793 = vpop.f32.mrb[0].mxu0
      %v794 = vadd.f32 %v694, %v793
      %v795 = vpop.f32.mrb[0].mxu0
      %v796 = vpop.f32.mrb[0].mxu0
      %v797 = vadd.f32 %v697, %v796
      %v798 = vpop.f32.mrb[0].mxu0
      %799 = vdwg.mxu0
      %v800 = vunpack.c.l.b16 %v387
      %v801 = vunpack.c.l.b16 %v401
      %v802 = vunpack.c.l.b16 %v415
      %v803 = vunpack.c.l.b16 %v429
      %v804 = vunpack.c.l.b16 %v443
      %v805 = vunpack.c.l.b16 %v457
      %v806 = vunpack.c.l.b16 %v471
      %v807 = vunpack.c.l.b16 %v485
      %v808 = vpack.c.b16 %v801, %v800
      %v809 = vpack.c.b16 %v803, %v802
      %v810 = vpack.c.b16 %v805, %v804
      %v811 = vpack.c.b16 %v807, %v806
      %v813 = vsel %vm618, %v808, 0
      %v816 = vsel %vm618, %v809, 0
      %v819 = vsel %vm618, %v810, 0
      %v822 = vsel %vm618, %v811, 0
      %v825 = vsel %vm631, %v325, 0
      %827 = vmatprep.subr.bf16.mxu0 0
      %828 = vmatpush1.bf16.msra.mxu0 %v825
      %829 = vmatprep.subr.bf16.mxu0 0
      %830 = vmatpush1.bf16.msra.mxu0 0
      %831 = vmatprep.subr.bf16.mxu0 0
      %832 = vmatpush1.bf16.msra.mxu0 0
      %833 = vmatprep.subr.bf16.mxu0 0
      %834 = vmatpush1.bf16.msra.mxu0 0
      %835 = vmatprep.subr.bf16.mxu0 0
      %836 = vmatpush1.bf16.msra.mxu0 0
      %837 = vmatprep.subr.bf16.mxu0 0
      %838 = vmatpush1.bf16.msra.mxu0 0
      %839 = vmatprep.subr.bf16.mxu0 0
      %840 = vmatpush1.bf16.msra.mxu0 0
      %841 = vmatprep.subr.bf16.mxu0 0
      %842 = vmatpush1.bf16.msra.mxu0 0
      %843 = vmatprep.subr.bf16.mxu0 0
      %844 = vmatpush1.bf16.msra.mxu0 0
      %845 = vmatprep.subr.bf16.mxu0 0
      %846 = vmatpush1.bf16.msra.mxu0 0
      %847 = vmatprep.subr.bf16.mxu0 0
      %848 = vmatpush1.bf16.msra.mxu0 0
      %849 = vmatprep.subr.bf16.mxu0 0
      %850 = vmatpush1.bf16.msra.mxu0 0
      %851 = vmatprep.subr.bf16.mxu0 0
      %852 = vmatpush1.bf16.msra.mxu0 0
      %853 = vmatprep.subr.bf16.mxu0 0
      %854 = vmatpush1.bf16.msra.mxu0 0
      %855 = vmatprep.subr.bf16.mxu0 0
      %856 = vmatpush1.bf16.msra.mxu0 0
      %857 = vmatprep.subr.bf16.mxu0 0
      %858 = vmatpush1.bf16.msra.mxu0 0
      %859 = vmatprep.mubr.bf16.mxu0 0
      %860 = vmatmul.mubr.bf16.gmra.mrb[0].mxu0 %v813
      %v861 = vpop.f32.mrb[0].mxu0
      %v862 = vadd.f32 0.0, %v861
      %v863 = vpop.f32.mrb[0].mxu0
      %v864 = vpop.f32.mrb[0].mxu0
      %v865 = vadd.f32 0.0, %v864
      %v866 = vpop.f32.mrb[0].mxu0
      %867 = vmatprep.mubr.bf16.mxu0 0
      %868 = vmatmul.mubr.bf16.gmra.mrb[0].mxu0 %v816
      %v869 = vpop.f32.mrb[0].mxu0
      %v870 = vadd.f32 0.0, %v869
      %v871 = vpop.f32.mrb[0].mxu0
      %v872 = vpop.f32.mrb[0].mxu0
      %v873 = vadd.f32 0.0, %v872
      %v874 = vpop.f32.mrb[0].mxu0
      %875 = vmatprep.mubr.bf16.mxu0 0
      %876 = vmatmul.mubr.bf16.gmra.mrb[0].mxu0 %v819
      %v877 = vpop.f32.mrb[0].mxu0
      %v878 = vadd.f32 0.0, %v877
      %v879 = vpop.f32.mrb[0].mxu0
      %v880 = vpop.f32.mrb[0].mxu0
      %v881 = vadd.f32 0.0, %v880
      %v882 = vpop.f32.mrb[0].mxu0
      %883 = vmatprep.mubr.bf16.mxu0 0
      %884 = vmatmul.mubr.bf16.gmra.mrb[0].mxu0 %v822
      %v885 = vpop.f32.mrb[0].mxu0
      %v886 = vadd.f32 0.0, %v885
      %v887 = vpop.f32.mrb[0].mxu0
      %v888 = vpop.f32.mrb[0].mxu0
      %v889 = vadd.f32 0.0, %v888
      %v890 = vpop.f32.mrb[0].mxu0
      %891 = vdwg.mxu0
      %v892 = vadd.f32 %v770, %v862
      %v893 = vadd.f32 %v773, %v865
      %v894 = vadd.f32 %v778, %v870
      %v895 = vadd.f32 %v781, %v873
      %v896 = vadd.f32 %v786, %v878
      %v897 = vadd.f32 %v789, %v881
      %v898 = vadd.f32 %v794, %v886
      %v899 = vadd.f32 %v797, %v889
      %v900 = vunpack.c.l.b16 %v499
      %v901 = vunpack.c.l.b16 %v513
      %v902 = vunpack.c.l.b16 %v527
      %v903 = vunpack.c.l.b16 %v541
      %v904 = vunpack.c.l.b16 %v555
      %v905 = vunpack.c.l.b16 %v569
      %v906 = vunpack.c.l.b16 %v583
      %v907 = vunpack.c.l.b16 %v597
      %v908 = vpack.c.b16 %v901, %v900
      %v909 = vpack.c.b16 %v903, %v902
      %v910 = vpack.c.b16 %v905, %v904
      %v911 = vpack.c.b16 %v907, %v906
      %v913 = vsel %vm618, %v908, 0
      %v916 = vsel %vm618, %v909, 0
      %v919 = vsel %vm618, %v910, 0
      %v922 = vsel %vm618, %v911, 0
      %v925 = vsel %vm631, %v326, 0
      %927 = vmatprep.subr.bf16.mxu0 0
      %928 = vmatpush1.bf16.msra.mxu0 %v925
      %929 = vmatprep.subr.bf16.mxu0 0
      %930 = vmatpush1.bf16.msra.mxu0 0
      %931 = vmatprep.subr.bf16.mxu0 0
      %932 = vmatpush1.bf16.msra.mxu0 0
      %933 = vmatprep.subr.bf16.mxu0 0
      %934 = vmatpush1.bf16.msra.mxu0 0
      %935 = vmatprep.subr.bf16.mxu0 0
      %936 = vmatpush1.bf16.msra.mxu0 0
      %937 = vmatprep.subr.bf16.mxu0 0
      %938 = vmatpush1.bf16.msra.mxu0 0
      %939 = vmatprep.subr.bf16.mxu0 0
      %940 = vmatpush1.bf16.msra.mxu0 0
      %941 = vmatprep.subr.bf16.mxu0 0
      %942 = vmatpush1.bf16.msra.mxu0 0
      %943 = vmatprep.subr.bf16.mxu0 0
      %944 = vmatpush1.bf16.msra.mxu0 0
      %945 = vmatprep.subr.bf16.mxu0 0
      %946 = vmatpush1.bf16.msra.mxu0 0
      %947 = vmatprep.subr.bf16.mxu0 0
      %948 = vmatpush1.bf16.msra.mxu0 0
      %949 = vmatprep.subr.bf16.mxu0 0
      %950 = vmatpush1.bf16.msra.mxu0 0
      %951 = vmatprep.subr.bf16.mxu0 0
      %952 = vmatpush1.bf16.msra.mxu0 0
      %953 = vmatprep.subr.bf16.mxu0 0
      %954 = vmatpush1.bf16.msra.mxu0 0
      %955 = vmatprep.subr.bf16.mxu0 0
      %956 = vmatpush1.bf16.msra.mxu0 0
      %957 = vmatprep.subr.bf16.mxu0 0
      %958 = vmatpush1.bf16.msra.mxu0 0
      %959 = vmatprep.mubr.bf16.mxu0 0
      %960 = vmatmul.mubr.bf16.gmra.mrb[0].mxu0 %v913
      %v961 = vpop.f32.mrb[0].mxu0
      %v962 = vadd.f32 0.0, %v961
      %v963 = vpop.f32.mrb[0].mxu0
      %v964 = vpop.f32.mrb[0].mxu0
      %v965 = vadd.f32 0.0, %v964
      %v966 = vpop.f32.mrb[0].mxu0
      %967 = vmatprep.mubr.bf16.mxu0 0
      %968 = vmatmul.mubr.bf16.gmra.mrb[0].mxu0 %v916
      %v969 = vpop.f32.mrb[0].mxu0
      %v970 = vadd.f32 0.0, %v969
      %v971 = vpop.f32.mrb[0].mxu0
      %v972 = vpop.f32.mrb[0].mxu0
      %v973 = vadd.f32 0.0, %v972
      %v974 = vpop.f32.mrb[0].mxu0
      %975 = vmatprep.mubr.bf16.mxu0 0
      %976 = vmatmul.mubr.bf16.gmra.mrb[0].mxu0 %v919
      %v977 = vpop.f32.mrb[0].mxu0
      %v978 = vadd.f32 0.0, %v977
      %v979 = vpop.f32.mrb[0].mxu0
      %v980 = vpop.f32.mrb[0].mxu0
      %v981 = vadd.f32 0.0, %v980
      %v982 = vpop.f32.mrb[0].mxu0
      %983 = vmatprep.mubr.bf16.mxu0 0
      %984 = vmatmul.mubr.bf16.gmra.mrb[0].mxu0 %v922
      %v985 = vpop.f32.mrb[0].mxu0
      %v986 = vadd.f32 0.0, %v985
      %v987 = vpop.f32.mrb[0].mxu0
      %v988 = vpop.f32.mrb[0].mxu0
      %v989 = vadd.f32 0.0, %v988
      %v990 = vpop.f32.mrb[0].mxu0
      %991 = vdwg.mxu0
      %v992 = vadd.f32 %v892, %v962
      %v993 = vadd.f32 %v893, %v965
      %v994 = vadd.f32 %v894, %v970
      %v995 = vadd.f32 %v895, %v973
      %v996 = vadd.f32 %v896, %v978
      %v997 = vadd.f32 %v897, %v981
      %v998 = vadd.f32 %v898, %v986
      %v999 = vadd.f32 %v899, %v989
      %v1000 = vld [vmem:[%s304] sm:$0xf]
      %v1001 = vld [vmem:[%s304 + $0x4] sm:$0x1]
      %v1002 = vld [vmem:[%s304 + $0x8] sm:$0xf]
      %v1003 = vld [vmem:[%s304 + $0xc] sm:$0x1]
      %v1004 = vld [vmem:[%s304 + $0x10] sm:$0xf]
      %v1005 = vld [vmem:[%s304 + $0x14] sm:$0x1]
      %v1006 = vld [vmem:[%s304 + $0x18] sm:$0xf]
      %v1007 = vld [vmem:[%s304 + $0x1c] sm:$0x1]
      %v1008 = vld [vmem:[%s304 + $0x20] sm:$0xf]
      %v1009 = vld [vmem:[%s304 + $0x24] sm:$0x1]
      %v1010 = vld [vmem:[%s304 + $0x28] sm:$0xf]
      %v1011 = vld [vmem:[%s304 + $0x2c] sm:$0x1]
      %v1012 = vld [vmem:[%s304 + $0x30] sm:$0xf]
      %v1013 = vld [vmem:[%s304 + $0x34] sm:$0x1]
      %v1014 = vld [vmem:[%s304 + $0x38] sm:$0xf]
      %v1015 = vld [vmem:[%s304 + $0x3c] sm:$0x1]
      %v1016 = vld [vmem:[%s309] sm:$0xf]
      %v1017 = vld [vmem:[%s309 + $0x4] sm:$0x1]
      %v1018 = vld [vmem:[%s309 + $0x8] sm:$0xf]
      %v1019 = vld [vmem:[%s309 + $0xc] sm:$0x1]
      %v1020 = vld [vmem:[%s309 + $0x10] sm:$0xf]
      %v1021 = vld [vmem:[%s309 + $0x14] sm:$0x1]
      %v1022 = vld [vmem:[%s309 + $0x18] sm:$0xf]
      %v1023 = vld [vmem:[%s309 + $0x1c] sm:$0x1]
      %v1024 = vld [vmem:[%s309 + $0x20] sm:$0xf]
      %v1025 = vld [vmem:[%s309 + $0x24] sm:$0x1]
      %v1026 = vld [vmem:[%s309 + $0x28] sm:$0xf]
      %v1027 = vld [vmem:[%s309 + $0x2c] sm:$0x1]
      %v1028 = vld [vmem:[%s309 + $0x30] sm:$0xf]
      %v1029 = vld [vmem:[%s309 + $0x34] sm:$0x1]
      %v1030 = vld [vmem:[%s309 + $0x38] sm:$0xf]
      %v1031 = vld [vmem:[%s309 + $0x3c] sm:$0x1]
      %v1033 = vshrl.u32 %v1000, 16
      %v1035 = vrot.slane %v1033, 4
      %v1036 = vshll.u32 %v1000, 16
      %v1038 = vrot.slane %v1036, 5
      %v1039 = vor.u32 %v1035, %v1038
      %v1040 = vrot.slane %v1039, 4
      %v1042 = vshll.u32 %v1001, 16
      %v1044 = vrot.slane %v1042, 5
      %v1045 = vsel %vm373, %v1040, %v1044
      %v1047 = vshrl.u32 %v1002, 16
      %v1049 = vrot.slane %v1047, 4
      %v1050 = vshll.u32 %v1002, 16
      %v1052 = vrot.slane %v1050, 5
      %v1053 = vor.u32 %v1049, %v1052
      %v1054 = vrot.slane %v1053, 4
      %v1056 = vshll.u32 %v1003, 16
      %v1058 = vrot.slane %v1056, 5
      %v1059 = vsel %vm373, %v1054, %v1058
      %v1061 = vshrl.u32 %v1004, 16
      %v1063 = vrot.slane %v1061, 4
      %v1064 = vshll.u32 %v1004, 16
      %v1066 = vrot.slane %v1064, 5
      %v1067 = vor.u32 %v1063, %v1066
      %v1068 = vrot.slane %v1067, 4
      %v1070 = vshll.u32 %v1005, 16
      %v1072 = vrot.slane %v1070, 5
      %v1073 = vsel %vm373, %v1068, %v1072
      %v1075 = vshrl.u32 %v1006, 16
      %v1077 = vrot.slane %v1075, 4
      %v1078 = vshll.u32 %v1006, 16
      %v1080 = vrot.slane %v1078, 5
      %v1081 = vor.u32 %v1077, %v1080
      %v1082 = vrot.slane %v1081, 4
      %v1084 = vshll.u32 %v1007, 16
      %v1086 = vrot.slane %v1084, 5
      %v1087 = vsel %vm373, %v1082, %v1086
      %v1089 = vshrl.u32 %v1008, 16
      %v1091 = vrot.slane %v1089, 4
      %v1092 = vshll.u32 %v1008, 16
      %v1094 = vrot.slane %v1092, 5
      %v1095 = vor.u32 %v1091, %v1094
      %v1096 = vrot.slane %v1095, 4
      %v1098 = vshll.u32 %v1009, 16
      %v1100 = vrot.slane %v1098, 5
      %v1101 = vsel %vm373, %v1096, %v1100
      %v1103 = vshrl.u32 %v1010, 16
      %v1105 = vrot.slane %v1103, 4
      %v1106 = vshll.u32 %v1010, 16
      %v1108 = vrot.slane %v1106, 5
      %v1109 = vor.u32 %v1105, %v1108
      %v1110 = vrot.slane %v1109, 4
      %v1112 = vshll.u32 %v1011, 16
      %v1114 = vrot.slane %v1112, 5
      %v1115 = vsel %vm373, %v1110, %v1114
      %v1117 = vshrl.u32 %v1012, 16
      %v1119 = vrot.slane %v1117, 4
      %v1120 = vshll.u32 %v1012, 16
      %v1122 = vrot.slane %v1120, 5
      %v1123 = vor.u32 %v1119, %v1122
      %v1124 = vrot.slane %v1123, 4
      %v1126 = vshll.u32 %v1013, 16
      %v1128 = vrot.slane %v1126, 5
      %v1129 = vsel %vm373, %v1124, %v1128
      %v1131 = vshrl.u32 %v1014, 16
      %v1133 = vrot.slane %v1131, 4
      %v1134 = vshll.u32 %v1014, 16
      %v1136 = vrot.slane %v1134, 5
      %v1137 = vor.u32 %v1133, %v1136
      %v1138 = vrot.slane %v1137, 4
      %v1140 = vshll.u32 %v1015, 16
      %v1142 = vrot.slane %v1140, 5
      %v1143 = vsel %vm373, %v1138, %v1142
      %v1145 = vshrl.u32 %v1016, 16
      %v1147 = vrot.slane %v1145, 4
      %v1148 = vshll.u32 %v1016, 16
      %v1150 = vrot.slane %v1148, 5
      %v1151 = vor.u32 %v1147, %v1150
      %v1152 = vrot.slane %v1151, 4
      %v1154 = vshll.u32 %v1017, 16
      %v1156 = vrot.slane %v1154, 5
      %v1157 = vsel %vm373, %v1152, %v1156
      %v1159 = vshrl.u32 %v1018, 16
      %v1161 = vrot.slane %v1159, 4
      %v1162 = vshll.u32 %v1018, 16
      %v1164 = vrot.slane %v1162, 5
      %v1165 = vor.u32 %v1161, %v1164
      %v1166 = vrot.slane %v1165, 4
      %v1168 = vshll.u32 %v1019, 16
      %v1170 = vrot.slane %v1168, 5
      %v1171 = vsel %vm373, %v1166, %v1170
      %v1173 = vshrl.u32 %v1020, 16
      %v1175 = vrot.slane %v1173, 4
      %v1176 = vshll.u32 %v1020, 16
      %v1178 = vrot.slane %v1176, 5
      %v1179 = vor.u32 %v1175, %v1178
      %v1180 = vrot.slane %v1179, 4
      %v1182 = vshll.u32 %v1021, 16
      %v1184 = vrot.slane %v1182, 5
      %v1185 = vsel %vm373, %v1180, %v1184
      %v1187 = vshrl.u32 %v1022, 16
      %v1189 = vrot.slane %v1187, 4
      %v1190 = vshll.u32 %v1022, 16
      %v1192 = vrot.slane %v1190, 5
      %v1193 = vor.u32 %v1189, %v1192
      %v1194 = vrot.slane %v1193, 4
      %v1196 = vshll.u32 %v1023, 16
      %v1198 = vrot.slane %v1196, 5
      %v1199 = vsel %vm373, %v1194, %v1198
      %v1201 = vshrl.u32 %v1024, 16
      %v1203 = vrot.slane %v1201, 4
      %v1204 = vshll.u32 %v1024, 16
      %v1206 = vrot.slane %v1204, 5
      %v1207 = vor.u32 %v1203, %v1206
      %v1208 = vrot.slane %v1207, 4
      %v1210 = vshll.u32 %v1025, 16
      %v1212 = vrot.slane %v1210, 5
      %v1213 = vsel %vm373, %v1208, %v1212
      %v1215 = vshrl.u32 %v1026, 16
      %v1217 = vrot.slane %v1215, 4
      %v1218 = vshll.u32 %v1026, 16
      %v1220 = vrot.slane %v1218, 5
      %v1221 = vor.u32 %v1217, %v1220
      %v1222 = vrot.slane %v1221, 4
      %v1224 = vshll.u32 %v1027, 16
      %v1226 = vrot.slane %v1224, 5
      %v1227 = vsel %vm373, %v1222, %v1226
      %v1229 = vshrl.u32 %v1028, 16
      %v1231 = vrot.slane %v1229, 4
      %v1232 = vshll.u32 %v1028, 16
      %v1234 = vrot.slane %v1232, 5
      %v1235 = vor.u32 %v1231, %v1234
      %v1236 = vrot.slane %v1235, 4
      %v1238 = vshll.u32 %v1029, 16
      %v1240 = vrot.slane %v1238, 5
      %v1241 = vsel %vm373, %v1236, %v1240
      %v1243 = vshrl.u32 %v1030, 16
      %v1245 = vrot.slane %v1243, 4
      %v1246 = vshll.u32 %v1030, 16
      %v1248 = vrot.slane %v1246, 5
      %v1249 = vor.u32 %v1245, %v1248
      %v1250 = vrot.slane %v1249, 4
      %v1252 = vshll.u32 %v1031, 16
      %v1254 = vrot.slane %v1252, 5
      %v1255 = vsel %vm373, %v1250, %v1254
      %v1264 = vunpack.c.l.b16 %v1000
      %v1265 = vunpack.c.l.b16 %v1002
      %v1266 = vunpack.c.l.b16 %v1004
      %v1267 = vunpack.c.l.b16 %v1006
      %v1268 = vunpack.c.l.b16 %v1008
      %v1269 = vunpack.c.l.b16 %v1010
      %v1270 = vunpack.c.l.b16 %v1012
      %v1271 = vunpack.c.l.b16 %v1014
      %v1272 = vpack.c.b16 %v1265, %v1264
      %v1273 = vpack.c.b16 %v1267, %v1266
      %v1274 = vpack.c.b16 %v1269, %v1268
      %v1275 = vpack.c.b16 %v1271, %v1270
      %v1277 = vsel %vm618, %v1272, 0
      %v1280 = vsel %vm618, %v1273, 0
      %v1283 = vsel %vm618, %v1274, 0
      %v1286 = vsel %vm618, %v1275, 0
      %v1289 = vsel %vm631, %v327, 0
      %1291 = vmatprep.subr.bf16.mxu0 0
      %1292 = vmatpush1.bf16.msra.mxu0 %v1289
      %1293 = vmatprep.subr.bf16.mxu0 0
      %1294 = vmatpush1.bf16.msra.mxu0 0
      %1295 = vmatprep.subr.bf16.mxu0 0
      %1296 = vmatpush1.bf16.msra.mxu0 0
      %1297 = vmatprep.subr.bf16.mxu0 0
      %1298 = vmatpush1.bf16.msra.mxu0 0
      %1299 = vmatprep.subr.bf16.mxu0 0
      %1300 = vmatpush1.bf16.msra.mxu0 0
      %1301 = vmatprep.subr.bf16.mxu0 0
      %1302 = vmatpush1.bf16.msra.mxu0 0
      %1303 = vmatprep.subr.bf16.mxu0 0
      %1304 = vmatpush1.bf16.msra.mxu0 0
      %1305 = vmatprep.subr.bf16.mxu0 0
      %1306 = vmatpush1.bf16.msra.mxu0 0
      %1307 = vmatprep.subr.bf16.mxu0 0
      %1308 = vmatpush1.bf16.msra.mxu0 0
      %1309 = vmatprep.subr.bf16.mxu0 0
      %1310 = vmatpush1.bf16.msra.mxu0 0
      %1311 = vmatprep.subr.bf16.mxu0 0
      %1312 = vmatpush1.bf16.msra.mxu0 0
      %1313 = vmatprep.subr.bf16.mxu0 0
      %1314 = vmatpush1.bf16.msra.mxu0 0
      %1315 = vmatprep.subr.bf16.mxu0 0
      %1316 = vmatpush1.bf16.msra.mxu0 0
      %1317 = vmatprep.subr.bf16.mxu0 0
      %1318 = vmatpush1.bf16.msra.mxu0 0
      %1319 = vmatprep.subr.bf16.mxu0 0
      %1320 = vmatpush1.bf16.msra.mxu0 0
      %1321 = vmatprep.subr.bf16.mxu0 0
      %1322 = vmatpush1.bf16.msra.mxu0 0
      %1323 = vmatprep.mubr.bf16.mxu0 0
      %1324 = vmatmul.mubr.bf16.gmra.mrb[0].mxu0 %v1277
      %v1325 = vpop.f32.mrb[0].mxu0
      %v1326 = vadd.f32 0.0, %v1325
      %v1327 = vpop.f32.mrb[0].mxu0
      %v1328 = vpop.f32.mrb[0].mxu0
      %v1329 = vadd.f32 0.0, %v1328
      %v1330 = vpop.f32.mrb[0].mxu0
      %1331 = vmatprep.mubr.bf16.mxu0 0
      %1332 = vmatmul.mubr.bf16.gmra.mrb[0].mxu0 %v1280
      %v1333 = vpop.f32.mrb[0].mxu0
      %v1334 = vadd.f32 0.0, %v1333
      %v1335 = vpop.f32.mrb[0].mxu0
      %v1336 = vpop.f32.mrb[0].mxu0
      %v1337 = vadd.f32 0.0, %v1336
      %v1338 = vpop.f32.mrb[0].mxu0
      %1339 = vmatprep.mubr.bf16.mxu0 0
      %1340 = vmatmul.mubr.bf16.gmra.mrb[0].mxu0 %v1283
      %v1341 = vpop.f32.mrb[0].mxu0
      %v1342 = vadd.f32 0.0, %v1341
      %v1343 = vpop.f32.mrb[0].mxu0
      %v1344 = vpop.f32.mrb[0].mxu0
      %v1345 = vadd.f32 0.0, %v1344
      %v1346 = vpop.f32.mrb[0].mxu0
      %1347 = vmatprep.mubr.bf16.mxu0 0
      %1348 = vmatmul.mubr.bf16.gmra.mrb[0].mxu0 %v1286
      %v1349 = vpop.f32.mrb[0].mxu0
      %v1350 = vadd.f32 0.0, %v1349
      %v1351 = vpop.f32.mrb[0].mxu0
      %v1352 = vpop.f32.mrb[0].mxu0
      %v1353 = vadd.f32 0.0, %v1352
      %v1354 = vpop.f32.mrb[0].mxu0
      %1355 = vdwg.mxu0
      %v1356 = vadd.f32 %v992, %v1326
      %v1357 = vadd.f32 %v993, %v1329
      %v1358 = vadd.f32 %v994, %v1334
      %v1359 = vadd.f32 %v995, %v1337
      %v1360 = vadd.f32 %v996, %v1342
      %v1361 = vadd.f32 %v997, %v1345
      %v1362 = vadd.f32 %v998, %v1350
      %v1363 = vadd.f32 %v999, %v1353
      %v1372 = vunpack.c.l.b16 %v1016
      %v1373 = vunpack.c.l.b16 %v1018
      %v1374 = vunpack.c.l.b16 %v1020
      %v1375 = vunpack.c.l.b16 %v1022
      %v1376 = vunpack.c.l.b16 %v1024
      %v1377 = vunpack.c.l.b16 %v1026
      %v1378 = vunpack.c.l.b16 %v1028
      %v1379 = vunpack.c.l.b16 %v1030
      %v1380 = vpack.c.b16 %v1373, %v1372
      %v1381 = vpack.c.b16 %v1375, %v1374
      %v1382 = vpack.c.b16 %v1377, %v1376
      %v1383 = vpack.c.b16 %v1379, %v1378
      %v1385 = vsel %vm618, %v1380, 0
      %v1388 = vsel %vm618, %v1381, 0
      %v1391 = vsel %vm618, %v1382, 0
      %v1394 = vsel %vm618, %v1383, 0
      %v1397 = vsel %vm631, %v328, 0
      %1399 = vmatprep.subr.bf16.mxu0 0
      %1400 = vmatpush1.bf16.msra.mxu0 %v1397
      %1401 = vmatprep.subr.bf16.mxu0 0
      %1402 = vmatpush1.bf16.msra.mxu0 0
      %1403 = vmatprep.subr.bf16.mxu0 0
      %1404 = vmatpush1.bf16.msra.mxu0 0
      %1405 = vmatprep.subr.bf16.mxu0 0
      %1406 = vmatpush1.bf16.msra.mxu0 0
      %1407 = vmatprep.subr.bf16.mxu0 0
      %1408 = vmatpush1.bf16.msra.mxu0 0
      %1409 = vmatprep.subr.bf16.mxu0 0
      %1410 = vmatpush1.bf16.msra.mxu0 0
      %1411 = vmatprep.subr.bf16.mxu0 0
      %1412 = vmatpush1.bf16.msra.mxu0 0
      %1413 = vmatprep.subr.bf16.mxu0 0
      %1414 = vmatpush1.bf16.msra.mxu0 0
      %1415 = vmatprep.subr.bf16.mxu0 0
      %1416 = vmatpush1.bf16.msra.mxu0 0
      %1417 = vmatprep.subr.bf16.mxu0 0
      %1418 = vmatpush1.bf16.msra.mxu0 0
      %1419 = vmatprep.subr.bf16.mxu0 0
      %1420 = vmatpush1.bf16.msra.mxu0 0
      %1421 = vmatprep.subr.bf16.mxu0 0
      %1422 = vmatpush1.bf16.msra.mxu0 0
      %1423 = vmatprep.subr.bf16.mxu0 0
      %1424 = vmatpush1.bf16.msra.mxu0 0
      %1425 = vmatprep.subr.bf16.mxu0 0
      %1426 = vmatpush1.bf16.msra.mxu0 0
      %1427 = vmatprep.subr.bf16.mxu0 0
      %1428 = vmatpush1.bf16.msra.mxu0 0
      %1429 = vmatprep.subr.bf16.mxu0 0
      %1430 = vmatpush1.bf16.msra.mxu0 0
      %1431 = vmatprep.mubr.bf16.mxu0 0
      %1432 = vmatmul.mubr.bf16.gmra.mrb[0].mxu0 %v1385
      %v1433 = vpop.f32.mrb[0].mxu0
      %v1434 = vadd.f32 0.0, %v1433
      %v1435 = vpop.f32.mrb[0].mxu0
      %v1436 = vpop.f32.mrb[0].mxu0
      %v1437 = vadd.f32 0.0, %v1436
      %v1438 = vpop.f32.mrb[0].mxu0
      %1439 = vmatprep.mubr.bf16.mxu0 0
      %1440 = vmatmul.mubr.bf16.gmra.mrb[0].mxu0 %v1388
      %v1441 = vpop.f32.mrb[0].mxu0
      %v1442 = vadd.f32 0.0, %v1441
      %v1443 = vpop.f32.mrb[0].mxu0
      %v1444 = vpop.f32.mrb[0].mxu0
      %v1445 = vadd.f32 0.0, %v1444
      %v1446 = vpop.f32.mrb[0].mxu0
      %1447 = vmatprep.mubr.bf16.mxu0 0
      %1448 = vmatmul.mubr.bf16.gmra.mrb[0].mxu0 %v1391
      %v1449 = vpop.f32.mrb[0].mxu0
      %v1450 = vadd.f32 0.0, %v1449
      %v1451 = vpop.f32.mrb[0].mxu0
      %v1452 = vpop.f32.mrb[0].mxu0
      %v1453 = vadd.f32 0.0, %v1452
      %v1454 = vpop.f32.mrb[0].mxu0
      %1455 = vmatprep.mubr.bf16.mxu0 0
      %1456 = vmatmul.mubr.bf16.gmra.mrb[0].mxu0 %v1394
      %v1457 = vpop.f32.mrb[0].mxu0
      %v1458 = vadd.f32 0.0, %v1457
      %v1459 = vpop.f32.mrb[0].mxu0
      %v1460 = vpop.f32.mrb[0].mxu0
      %v1461 = vadd.f32 0.0, %v1460
      %v1462 = vpop.f32.mrb[0].mxu0
      %1463 = vdwg.mxu0
      %v1464 = vadd.f32 %v1356, %v1434
      %v1465 = vadd.f32 %v1357, %v1437
      %v1466 = vadd.f32 %v1358, %v1442
      %v1467 = vadd.f32 %v1359, %v1445
      %v1468 = vadd.f32 %v1360, %v1450
      %v1469 = vadd.f32 %v1361, %v1453
      %v1470 = vadd.f32 %v1362, %v1458
      %v1471 = vadd.f32 %v1363, %v1461
      %v1472 = vunpack.c.l.b16 %v1045
      %v1473 = vunpack.c.l.b16 %v1059
      %v1474 = vunpack.c.l.b16 %v1073
      %v1475 = vunpack.c.l.b16 %v1087
      %v1476 = vunpack.c.l.b16 %v1101
      %v1477 = vunpack.c.l.b16 %v1115
      %v1478 = vunpack.c.l.b16 %v1129
      %v1479 = vunpack.c.l.b16 %v1143
      %v1480 = vpack.c.b16 %v1473, %v1472
      %v1481 = vpack.c.b16 %v1475, %v1474
      %v1482 = vpack.c.b16 %v1477, %v1476
      %v1483 = vpack.c.b16 %v1479, %v1478
      %v1485 = vsel %vm618, %v1480, 0
      %v1488 = vsel %vm618, %v1481, 0
      %v1491 = vsel %vm618, %v1482, 0
      %v1494 = vsel %vm618, %v1483, 0
      %v1497 = vsel %vm631, %v329, 0
      %1499 = vmatprep.subr.bf16.mxu0 0
      %1500 = vmatpush1.bf16.msra.mxu0 %v1497
      %1501 = vmatprep.subr.bf16.mxu0 0
      %1502 = vmatpush1.bf16.msra.mxu0 0
      %1503 = vmatprep.subr.bf16.mxu0 0
      %1504 = vmatpush1.bf16.msra.mxu0 0
      %1505 = vmatprep.subr.bf16.mxu0 0
      %1506 = vmatpush1.bf16.msra.mxu0 0
      %1507 = vmatprep.subr.bf16.mxu0 0
      %1508 = vmatpush1.bf16.msra.mxu0 0
      %1509 = vmatprep.subr.bf16.mxu0 0
      %1510 = vmatpush1.bf16.msra.mxu0 0
      %1511 = vmatprep.subr.bf16.mxu0 0
      %1512 = vmatpush1.bf16.msra.mxu0 0
      %1513 = vmatprep.subr.bf16.mxu0 0
      %1514 = vmatpush1.bf16.msra.mxu0 0
      %1515 = vmatprep.subr.bf16.mxu0 0
      %1516 = vmatpush1.bf16.msra.mxu0 0
      %1517 = vmatprep.subr.bf16.mxu0 0
      %1518 = vmatpush1.bf16.msra.mxu0 0
      %1519 = vmatprep.subr.bf16.mxu0 0
      %1520 = vmatpush1.bf16.msra.mxu0 0
      %1521 = vmatprep.subr.bf16.mxu0 0
      %1522 = vmatpush1.bf16.msra.mxu0 0
      %1523 = vmatprep.subr.bf16.mxu0 0
      %1524 = vmatpush1.bf16.msra.mxu0 0
      %1525 = vmatprep.subr.bf16.mxu0 0
      %1526 = vmatpush1.bf16.msra.mxu0 0
      %1527 = vmatprep.subr.bf16.mxu0 0
      %1528 = vmatpush1.bf16.msra.mxu0 0
      %1529 = vmatprep.subr.bf16.mxu0 0
      %1530 = vmatpush1.bf16.msra.mxu0 0
      %1531 = vmatprep.mubr.bf16.mxu0 0
      %1532 = vmatmul.mubr.bf16.gmra.mrb[0].mxu0 %v1485
      %v1533 = vpop.f32.mrb[0].mxu0
      %v1534 = vadd.f32 0.0, %v1533
      %v1535 = vpop.f32.mrb[0].mxu0
      %v1536 = vpop.f32.mrb[0].mxu0
      %v1537 = vadd.f32 0.0, %v1536
      %v1538 = vpop.f32.mrb[0].mxu0
      %1539 = vmatprep.mubr.bf16.mxu0 0
      %1540 = vmatmul.mubr.bf16.gmra.mrb[0].mxu0 %v1488
      %v1541 = vpop.f32.mrb[0].mxu0
      %v1542 = vadd.f32 0.0, %v1541
      %v1543 = vpop.f32.mrb[0].mxu0
      %v1544 = vpop.f32.mrb[0].mxu0
      %v1545 = vadd.f32 0.0, %v1544
      %v1546 = vpop.f32.mrb[0].mxu0
      %1547 = vmatprep.mubr.bf16.mxu0 0
      %1548 = vmatmul.mubr.bf16.gmra.mrb[0].mxu0 %v1491
      %v1549 = vpop.f32.mrb[0].mxu0
      %v1550 = vadd.f32 0.0, %v1549
      %v1551 = vpop.f32.mrb[0].mxu0
      %v1552 = vpop.f32.mrb[0].mxu0
      %v1553 = vadd.f32 0.0, %v1552
      %v1554 = vpop.f32.mrb[0].mxu0
      %1555 = vmatprep.mubr.bf16.mxu0 0
      %1556 = vmatmul.mubr.bf16.gmra.mrb[0].mxu0 %v1494
      %v1557 = vpop.f32.mrb[0].mxu0
      %v1558 = vadd.f32 0.0, %v1557
      %v1559 = vpop.f32.mrb[0].mxu0
      %v1560 = vpop.f32.mrb[0].mxu0
      %v1561 = vadd.f32 0.0, %v1560
      %v1562 = vpop.f32.mrb[0].mxu0
      %1563 = vdwg.mxu0
      %v1564 = vadd.f32 %v1464, %v1534
      %v1565 = vadd.f32 %v1465, %v1537
      %v1566 = vadd.f32 %v1466, %v1542
      %v1567 = vadd.f32 %v1467, %v1545
      %v1568 = vadd.f32 %v1468, %v1550
      %v1569 = vadd.f32 %v1469, %v1553
      %v1570 = vadd.f32 %v1470, %v1558
      %v1571 = vadd.f32 %v1471, %v1561
      %v1572 = vunpack.c.l.b16 %v1157
      %v1573 = vunpack.c.l.b16 %v1171
      %v1574 = vunpack.c.l.b16 %v1185
      %v1575 = vunpack.c.l.b16 %v1199
      %v1576 = vunpack.c.l.b16 %v1213
      %v1577 = vunpack.c.l.b16 %v1227
      %v1578 = vunpack.c.l.b16 %v1241
      %v1579 = vunpack.c.l.b16 %v1255
      %v1580 = vpack.c.b16 %v1573, %v1572
      %v1581 = vpack.c.b16 %v1575, %v1574
      %v1582 = vpack.c.b16 %v1577, %v1576
      %v1583 = vpack.c.b16 %v1579, %v1578
      %v1585 = vsel %vm618, %v1580, 0
      %v1588 = vsel %vm618, %v1581, 0
      %v1591 = vsel %vm618, %v1582, 0
      %v1594 = vsel %vm618, %v1583, 0
      %v1597 = vsel %vm631, %v330, 0
      %1599 = vmatprep.subr.bf16.mxu0 0
      %1600 = vmatpush1.bf16.msra.mxu0 %v1597
      %1601 = vmatprep.subr.bf16.mxu0 0
      %1602 = vmatpush1.bf16.msra.mxu0 0
      %1603 = vmatprep.subr.bf16.mxu0 0
      %1604 = vmatpush1.bf16.msra.mxu0 0
      %1605 = vmatprep.subr.bf16.mxu0 0
      %1606 = vmatpush1.bf16.msra.mxu0 0
      %1607 = vmatprep.subr.bf16.mxu0 0
      %1608 = vmatpush1.bf16.msra.mxu0 0
      %1609 = vmatprep.subr.bf16.mxu0 0
      %1610 = vmatpush1.bf16.msra.mxu0 0
      %1611 = vmatprep.subr.bf16.mxu0 0
      %1612 = vmatpush1.bf16.msra.mxu0 0
      %1613 = vmatprep.subr.bf16.mxu0 0
      %1614 = vmatpush1.bf16.msra.mxu0 0
      %1615 = vmatprep.subr.bf16.mxu0 0
      %1616 = vmatpush1.bf16.msra.mxu0 0
      %1617 = vmatprep.subr.bf16.mxu0 0
      %1618 = vmatpush1.bf16.msra.mxu0 0
      %1619 = vmatprep.subr.bf16.mxu0 0
      %1620 = vmatpush1.bf16.msra.mxu0 0
      %1621 = vmatprep.subr.bf16.mxu0 0
      %1622 = vmatpush1.bf16.msra.mxu0 0
      %1623 = vmatprep.subr.bf16.mxu0 0
      %1624 = vmatpush1.bf16.msra.mxu0 0
      %1625 = vmatprep.subr.bf16.mxu0 0
      %1626 = vmatpush1.bf16.msra.mxu0 0
      %1627 = vmatprep.subr.bf16.mxu0 0
      %1628 = vmatpush1.bf16.msra.mxu0 0
      %1629 = vmatprep.subr.bf16.mxu0 0
      %1630 = vmatpush1.bf16.msra.mxu0 0
      %1631 = vmatprep.mubr.bf16.mxu0 0
      %1632 = vmatmul.mubr.bf16.gmra.mrb[0].mxu0 %v1585
      %v1633 = vpop.f32.mrb[0].mxu0
      %v1634 = vadd.f32 0.0, %v1633
      %v1635 = vpop.f32.mrb[0].mxu0
      %v1636 = vpop.f32.mrb[0].mxu0
      %v1637 = vadd.f32 0.0, %v1636
      %v1638 = vpop.f32.mrb[0].mxu0
      %1639 = vmatprep.mubr.bf16.mxu0 0
      %1640 = vmatmul.mubr.bf16.gmra.mrb[0].mxu0 %v1588
      %v1641 = vpop.f32.mrb[0].mxu0
      %v1642 = vadd.f32 0.0, %v1641
      %v1643 = vpop.f32.mrb[0].mxu0
      %v1644 = vpop.f32.mrb[0].mxu0
      %v1645 = vadd.f32 0.0, %v1644
      %v1646 = vpop.f32.mrb[0].mxu0
      %1647 = vmatprep.mubr.bf16.mxu0 0
      %1648 = vmatmul.mubr.bf16.gmra.mrb[0].mxu0 %v1591
      %v1649 = vpop.f32.mrb[0].mxu0
      %v1650 = vadd.f32 0.0, %v1649
      %v1651 = vpop.f32.mrb[0].mxu0
      %v1652 = vpop.f32.mrb[0].mxu0
      %v1653 = vadd.f32 0.0, %v1652
      %v1654 = vpop.f32.mrb[0].mxu0
      %1655 = vmatprep.mubr.bf16.mxu0 0
      %1656 = vmatmul.mubr.bf16.gmra.mrb[0].mxu0 %v1594
      %v1657 = vpop.f32.mrb[0].mxu0
      %v1658 = vadd.f32 0.0, %v1657
      %v1659 = vpop.f32.mrb[0].mxu0
      %v1660 = vpop.f32.mrb[0].mxu0
      %v1661 = vadd.f32 0.0, %v1660
      %v1662 = vpop.f32.mrb[0].mxu0
      %1663 = vdwg.mxu0
      %v1664 = vadd.f32 %v1564, %v1634
      %v1665 = vadd.f32 %v1565, %v1637
      %v1666 = vadd.f32 %v1566, %v1642
      %v1667 = vadd.f32 %v1567, %v1645
      %v1668 = vadd.f32 %v1568, %v1650
      %v1669 = vadd.f32 %v1569, %v1653
      %v1670 = vadd.f32 %v1570, %v1658
      %v1671 = vadd.f32 %v1571, %v1661
      %s1672 = scalar_lea.vmem %s294, 8
      %v1673 = vld [vmem:[%s1672] sm:$0xf]
      %v1674 = vld [vmem:[%s1672 + $0x4] sm:$0x1]
      %v1675 = vld [vmem:[%s1672 + $0x8] sm:$0xf]
      %v1676 = vld [vmem:[%s1672 + $0xc] sm:$0x1]
      %v1677 = vld [vmem:[%s1672 + $0x10] sm:$0xf]
      %v1678 = vld [vmem:[%s1672 + $0x14] sm:$0x1]
      %v1679 = vld [vmem:[%s1672 + $0x18] sm:$0xf]
      %v1680 = vld [vmem:[%s1672 + $0x1c] sm:$0x1]
      %v1681 = vld [vmem:[%s1672 + $0x20] sm:$0xf]
      %v1682 = vld [vmem:[%s1672 + $0x24] sm:$0x1]
      %v1683 = vld [vmem:[%s1672 + $0x28] sm:$0xf]
      %v1684 = vld [vmem:[%s1672 + $0x2c] sm:$0x1]
      %v1685 = vld [vmem:[%s1672 + $0x30] sm:$0xf]
      %v1686 = vld [vmem:[%s1672 + $0x34] sm:$0x1]
      %v1687 = vld [vmem:[%s1672 + $0x38] sm:$0xf]
      %v1688 = vld [vmem:[%s1672 + $0x3c] sm:$0x1]
      %s1689 = scalar_lea.vmem %s299, 8
      %v1690 = vld [vmem:[%s1689] sm:$0xf]
      %v1691 = vld [vmem:[%s1689 + $0x4] sm:$0x1]
      %v1692 = vld [vmem:[%s1689 + $0x8] sm:$0xf]
      %v1693 = vld [vmem:[%s1689 + $0xc] sm:$0x1]
      %v1694 = vld [vmem:[%s1689 + $0x10] sm:$0xf]
      %v1695 = vld [vmem:[%s1689 + $0x14] sm:$0x1]
      %v1696 = vld [vmem:[%s1689 + $0x18] sm:$0xf]
      %v1697 = vld [vmem:[%s1689 + $0x1c] sm:$0x1]
      %v1698 = vld [vmem:[%s1689 + $0x20] sm:$0xf]
      %v1699 = vld [vmem:[%s1689 + $0x24] sm:$0x1]
      %v1700 = vld [vmem:[%s1689 + $0x28] sm:$0xf]
      %v1701 = vld [vmem:[%s1689 + $0x2c] sm:$0x1]
      %v1702 = vld [vmem:[%s1689 + $0x30] sm:$0xf]
      %v1703 = vld [vmem:[%s1689 + $0x34] sm:$0x1]
      %v1704 = vld [vmem:[%s1689 + $0x38] sm:$0xf]
      %v1705 = vld [vmem:[%s1689 + $0x3c] sm:$0x1]
      %v1707 = vshrl.u32 %v1673, 16
      %v1709 = vrot.slane %v1707, 4
      %v1710 = vshll.u32 %v1673, 16
      %v1712 = vrot.slane %v1710, 5
      %v1713 = vor.u32 %v1709, %v1712
      %v1714 = vrot.slane %v1713, 4
      %v1716 = vshll.u32 %v1674, 16
      %v1718 = vrot.slane %v1716, 5
      %v1719 = vsel %vm373, %v1714, %v1718
      %v1721 = vshrl.u32 %v1675, 16
      %v1723 = vrot.slane %v1721, 4
      %v1724 = vshll.u32 %v1675, 16
      %v1726 = vrot.slane %v1724, 5
      %v1727 = vor.u32 %v1723, %v1726
      %v1728 = vrot.slane %v1727, 4
      %v1730 = vshll.u32 %v1676, 16
      %v1732 = vrot.slane %v1730, 5
      %v1733 = vsel %vm373, %v1728, %v1732
      %v1735 = vshrl.u32 %v1677, 16
      %v1737 = vrot.slane %v1735, 4
      %v1738 = vshll.u32 %v1677, 16
      %v1740 = vrot.slane %v1738, 5
      %v1741 = vor.u32 %v1737, %v1740
      %v1742 = vrot.slane %v1741, 4
      %v1744 = vshll.u32 %v1678, 16
      %v1746 = vrot.slane %v1744, 5
      %v1747 = vsel %vm373, %v1742, %v1746
      %v1749 = vshrl.u32 %v1679, 16
      %v1751 = vrot.slane %v1749, 4
      %v1752 = vshll.u32 %v1679, 16
      %v1754 = vrot.slane %v1752, 5
      %v1755 = vor.u32 %v1751, %v1754
      %v1756 = vrot.slane %v1755, 4
      %v1758 = vshll.u32 %v1680, 16
      %v1760 = vrot.slane %v1758, 5
      %v1761 = vsel %vm373, %v1756, %v1760
      %v1763 = vshrl.u32 %v1681, 16
      %v1765 = vrot.slane %v1763, 4
      %v1766 = vshll.u32 %v1681, 16
      %v1768 = vrot.slane %v1766, 5
      %v1769 = vor.u32 %v1765, %v1768
      %v1770 = vrot.slane %v1769, 4
      %v1772 = vshll.u32 %v1682, 16
      %v1774 = vrot.slane %v1772, 5
      %v1775 = vsel %vm373, %v1770, %v1774
      %v1777 = vshrl.u32 %v1683, 16
      %v1779 = vrot.slane %v1777, 4
      %v1780 = vshll.u32 %v1683, 16
      %v1782 = vrot.slane %v1780, 5
      %v1783 = vor.u32 %v1779, %v1782
      %v1784 = vrot.slane %v1783, 4
      %v1786 = vshll.u32 %v1684, 16
      %v1788 = vrot.slane %v1786, 5
      %v1789 = vsel %vm373, %v1784, %v1788
      %v1791 = vshrl.u32 %v1685, 16
      %v1793 = vrot.slane %v1791, 4
      %v1794 = vshll.u32 %v1685, 16
      %v1796 = vrot.slane %v1794, 5
      %v1797 = vor.u32 %v1793, %v1796
      %v1798 = vrot.slane %v1797, 4
      %v1800 = vshll.u32 %v1686, 16
      %v1802 = vrot.slane %v1800, 5
      %v1803 = vsel %vm373, %v1798, %v1802
      %v1805 = vshrl.u32 %v1687, 16
      %v1807 = vrot.slane %v1805, 4
      %v1808 = vshll.u32 %v1687, 16
      %v1810 = vrot.slane %v1808, 5
      %v1811 = vor.u32 %v1807, %v1810
      %v1812 = vrot.slane %v1811, 4
      %v1814 = vshll.u32 %v1688, 16
      %v1816 = vrot.slane %v1814, 5
      %v1817 = vsel %vm373, %v1812, %v1816
      %v1819 = vshrl.u32 %v1690, 16
      %v1821 = vrot.slane %v1819, 4
      %v1822 = vshll.u32 %v1690, 16
      %v1824 = vrot.slane %v1822, 5
      %v1825 = vor.u32 %v1821, %v1824
      %v1826 = vrot.slane %v1825, 4
      %v1828 = vshll.u32 %v1691, 16
      %v1830 = vrot.slane %v1828, 5
      %v1831 = vsel %vm373, %v1826, %v1830
      %v1833 = vshrl.u32 %v1692, 16
      %v1835 = vrot.slane %v1833, 4
      %v1836 = vshll.u32 %v1692, 16
      %v1838 = vrot.slane %v1836, 5
      %v1839 = vor.u32 %v1835, %v1838
      %v1840 = vrot.slane %v1839, 4
      %v1842 = vshll.u32 %v1693, 16
      %v1844 = vrot.slane %v1842, 5
      %v1845 = vsel %vm373, %v1840, %v1844
      %v1847 = vshrl.u32 %v1694, 16
      %v1849 = vrot.slane %v1847, 4
      %v1850 = vshll.u32 %v1694, 16
      %v1852 = vrot.slane %v1850, 5
      %v1853 = vor.u32 %v1849, %v1852
      %v1854 = vrot.slane %v1853, 4
      %v1856 = vshll.u32 %v1695, 16
      %v1858 = vrot.slane %v1856, 5
      %v1859 = vsel %vm373, %v1854, %v1858
      %v1861 = vshrl.u32 %v1696, 16
      %v1863 = vrot.slane %v1861, 4
      %v1864 = vshll.u32 %v1696, 16
      %v1866 = vrot.slane %v1864, 5
      %v1867 = vor.u32 %v1863, %v1866
      %v1868 = vrot.slane %v1867, 4
      %v1870 = vshll.u32 %v1697, 16
      %v1872 = vrot.slane %v1870, 5
      %v1873 = vsel %vm373, %v1868, %v1872
      %v1875 = vshrl.u32 %v1698, 16
      %v1877 = vrot.slane %v1875, 4
      %v1878 = vshll.u32 %v1698, 16
      %v1880 = vrot.slane %v1878, 5
      %v1881 = vor.u32 %v1877, %v1880
      %v1882 = vrot.slane %v1881, 4
      %v1884 = vshll.u32 %v1699, 16
      %v1886 = vrot.slane %v1884, 5
      %v1887 = vsel %vm373, %v1882, %v1886
      %v1889 = vshrl.u32 %v1700, 16
      %v1891 = vrot.slane %v1889, 4
      %v1892 = vshll.u32 %v1700, 16
      %v1894 = vrot.slane %v1892, 5
      %v1895 = vor.u32 %v1891, %v1894
      %v1896 = vrot.slane %v1895, 4
      %v1898 = vshll.u32 %v1701, 16
      %v1900 = vrot.slane %v1898, 5
      %v1901 = vsel %vm373, %v1896, %v1900
      %v1903 = vshrl.u32 %v1702, 16
      %v1905 = vrot.slane %v1903, 4
      %v1906 = vshll.u32 %v1702, 16
      %v1908 = vrot.slane %v1906, 5
      %v1909 = vor.u32 %v1905, %v1908
      %v1910 = vrot.slane %v1909, 4
      %v1912 = vshll.u32 %v1703, 16
      %v1914 = vrot.slane %v1912, 5
      %v1915 = vsel %vm373, %v1910, %v1914
      %v1917 = vshrl.u32 %v1704, 16
      %v1919 = vrot.slane %v1917, 4
      %v1920 = vshll.u32 %v1704, 16
      %v1922 = vrot.slane %v1920, 5
      %v1923 = vor.u32 %v1919, %v1922
      %v1924 = vrot.slane %v1923, 4
      %v1926 = vshll.u32 %v1705, 16
      %v1928 = vrot.slane %v1926, 5
      %v1929 = vsel %vm373, %v1924, %v1928
      %v1938 = vunpack.c.l.b16 %v1673
      %v1939 = vunpack.c.l.b16 %v1675
      %v1940 = vunpack.c.l.b16 %v1677
      %v1941 = vunpack.c.l.b16 %v1679
      %v1942 = vunpack.c.l.b16 %v1681
      %v1943 = vunpack.c.l.b16 %v1683
      %v1944 = vunpack.c.l.b16 %v1685
      %v1945 = vunpack.c.l.b16 %v1687
      %v1946 = vpack.c.b16 %v1939, %v1938
      %v1947 = vpack.c.b16 %v1941, %v1940
      %v1948 = vpack.c.b16 %v1943, %v1942
      %v1949 = vpack.c.b16 %v1945, %v1944
      %v1951 = vsel %vm618, %v1946, 0
      %v1954 = vsel %vm618, %v1947, 0
      %v1957 = vsel %vm618, %v1948, 0
      %v1960 = vsel %vm618, %v1949, 0
      %v1963 = vsel %vm631, %v331, 0
      %1965 = vmatprep.subr.bf16.mxu0 0
      %1966 = vmatpush1.bf16.msra.mxu0 %v1963
      %1967 = vmatprep.subr.bf16.mxu0 0
      %1968 = vmatpush1.bf16.msra.mxu0 0
      %1969 = vmatprep.subr.bf16.mxu0 0
      %1970 = vmatpush1.bf16.msra.mxu0 0
      %1971 = vmatprep.subr.bf16.mxu0 0
      %1972 = vmatpush1.bf16.msra.mxu0 0
      %1973 = vmatprep.subr.bf16.mxu0 0
      %1974 = vmatpush1.bf16.msra.mxu0 0
      %1975 = vmatprep.subr.bf16.mxu0 0
      %1976 = vmatpush1.bf16.msra.mxu0 0
      %1977 = vmatprep.subr.bf16.mxu0 0
      %1978 = vmatpush1.bf16.msra.mxu0 0
      %1979 = vmatprep.subr.bf16.mxu0 0
      %1980 = vmatpush1.bf16.msra.mxu0 0
      %1981 = vmatprep.subr.bf16.mxu0 0
      %1982 = vmatpush1.bf16.msra.mxu0 0
      %1983 = vmatprep.subr.bf16.mxu0 0
      %1984 = vmatpush1.bf16.msra.mxu0 0
      %1985 = vmatprep.subr.bf16.mxu0 0
      %1986 = vmatpush1.bf16.msra.mxu0 0
      %1987 = vmatprep.subr.bf16.mxu0 0
      %1988 = vmatpush1.bf16.msra.mxu0 0
      %1989 = vmatprep.subr.bf16.mxu0 0
      %1990 = vmatpush1.bf16.msra.mxu0 0
      %1991 = vmatprep.subr.bf16.mxu0 0
      %1992 = vmatpush1.bf16.msra.mxu0 0
      %1993 = vmatprep.subr.bf16.mxu0 0
      %1994 = vmatpush1.bf16.msra.mxu0 0
      %1995 = vmatprep.subr.bf16.mxu0 0
      %1996 = vmatpush1.bf16.msra.mxu0 0
      %1997 = vmatprep.mubr.bf16.mxu0 0
      %1998 = vmatmul.mubr.bf16.gmra.mrb[0].mxu0 %v1951
      %v1999 = vpop.f32.mrb[0].mxu0
      %v2000 = vadd.f32 0.0, %v1999
      %v2001 = vpop.f32.mrb[0].mxu0
      %v2002 = vpop.f32.mrb[0].mxu0
      %v2003 = vadd.f32 0.0, %v2002
      %v2004 = vpop.f32.mrb[0].mxu0
      %2005 = vmatprep.mubr.bf16.mxu0 0
      %2006 = vmatmul.mubr.bf16.gmra.mrb[0].mxu0 %v1954
      %v2007 = vpop.f32.mrb[0].mxu0
      %v2008 = vadd.f32 0.0, %v2007
      %v2009 = vpop.f32.mrb[0].mxu0
      %v2010 = vpop.f32.mrb[0].mxu0
      %v2011 = vadd.f32 0.0, %v2010
      %v2012 = vpop.f32.mrb[0].mxu0
      %2013 = vmatprep.mubr.bf16.mxu0 0
      %2014 = vmatmul.mubr.bf16.gmra.mrb[0].mxu0 %v1957
      %v2015 = vpop.f32.mrb[0].mxu0
      %v2016 = vadd.f32 0.0, %v2015
      %v2017 = vpop.f32.mrb[0].mxu0
      %v2018 = vpop.f32.mrb[0].mxu0
      %v2019 = vadd.f32 0.0, %v2018
      %v2020 = vpop.f32.mrb[0].mxu0
      %2021 = vmatprep.mubr.bf16.mxu0 0
      %2022 = vmatmul.mubr.bf16.gmra.mrb[0].mxu0 %v1960
      %v2023 = vpop.f32.mrb[0].mxu0
      %v2024 = vadd.f32 0.0, %v2023
      %v2025 = vpop.f32.mrb[0].mxu0
      %v2026 = vpop.f32.mrb[0].mxu0
      %v2027 = vadd.f32 0.0, %v2026
      %v2028 = vpop.f32.mrb[0].mxu0
      %2029 = vdwg.mxu0
      %v2030 = vadd.f32 %v1664, %v2000
      %v2031 = vadd.f32 %v1665, %v2003
      %v2032 = vadd.f32 %v1666, %v2008
      %v2033 = vadd.f32 %v1667, %v2011
      %v2034 = vadd.f32 %v1668, %v2016
      %v2035 = vadd.f32 %v1669, %v2019
      %v2036 = vadd.f32 %v1670, %v2024
      %v2037 = vadd.f32 %v1671, %v2027
      %v2046 = vunpack.c.l.b16 %v1690
      %v2047 = vunpack.c.l.b16 %v1692
      %v2048 = vunpack.c.l.b16 %v1694
      %v2049 = vunpack.c.l.b16 %v1696
      %v2050 = vunpack.c.l.b16 %v1698
      %v2051 = vunpack.c.l.b16 %v1700
      %v2052 = vunpack.c.l.b16 %v1702
      %v2053 = vunpack.c.l.b16 %v1704
      %v2054 = vpack.c.b16 %v2047, %v2046
      %v2055 = vpack.c.b16 %v2049, %v2048
      %v2056 = vpack.c.b16 %v2051, %v2050
      %v2057 = vpack.c.b16 %v2053, %v2052
      %v2059 = vsel %vm618, %v2054, 0
      %v2062 = vsel %vm618, %v2055, 0
      %v2065 = vsel %vm618, %v2056, 0
      %v2068 = vsel %vm618, %v2057, 0
      %v2071 = vsel %vm631, %v332, 0
      %2073 = vmatprep.subr.bf16.mxu0 0
      %2074 = vmatpush1.bf16.msra.mxu0 %v2071
      %2075 = vmatprep.subr.bf16.mxu0 0
      %2076 = vmatpush1.bf16.msra.mxu0 0
      %2077 = vmatprep.subr.bf16.mxu0 0
      %2078 = vmatpush1.bf16.msra.mxu0 0
      %2079 = vmatprep.subr.bf16.mxu0 0
      %2080 = vmatpush1.bf16.msra.mxu0 0
      %2081 = vmatprep.subr.bf16.mxu0 0
      %2082 = vmatpush1.bf16.msra.mxu0 0
      %2083 = vmatprep.subr.bf16.mxu0 0
      %2084 = vmatpush1.bf16.msra.mxu0 0
      %2085 = vmatprep.subr.bf16.mxu0 0
      %2086 = vmatpush1.bf16.msra.mxu0 0
      %2087 = vmatprep.subr.bf16.mxu0 0
      %2088 = vmatpush1.bf16.msra.mxu0 0
      %2089 = vmatprep.subr.bf16.mxu0 0
      %2090 = vmatpush1.bf16.msra.mxu0 0
      %2091 = vmatprep.subr.bf16.mxu0 0
      %2092 = vmatpush1.bf16.msra.mxu0 0
      %2093 = vmatprep.subr.bf16.mxu0 0
      %2094 = vmatpush1.bf16.msra.mxu0 0
      %2095 = vmatprep.subr.bf16.mxu0 0
      %2096 = vmatpush1.bf16.msra.mxu0 0
      %2097 = vmatprep.subr.bf16.mxu0 0
      %2098 = vmatpush1.bf16.msra.mxu0 0
      %2099 = vmatprep.subr.bf16.mxu0 0
      %2100 = vmatpush1.bf16.msra.mxu0 0
      %2101 = vmatprep.subr.bf16.mxu0 0
      %2102 = vmatpush1.bf16.msra.mxu0 0
      %2103 = vmatprep.subr.bf16.mxu0 0
      %2104 = vmatpush1.bf16.msra.mxu0 0
      %2105 = vmatprep.mubr.bf16.mxu0 0
      %2106 = vmatmul.mubr.bf16.gmra.mrb[0].mxu0 %v2059
      %v2107 = vpop.f32.mrb[0].mxu0
      %v2108 = vadd.f32 0.0, %v2107
      %v2109 = vpop.f32.mrb[0].mxu0
      %v2110 = vpop.f32.mrb[0].mxu0
      %v2111 = vadd.f32 0.0, %v2110
      %v2112 = vpop.f32.mrb[0].mxu0
      %2113 = vmatprep.mubr.bf16.mxu0 0
      %2114 = vmatmul.mubr.bf16.gmra.mrb[0].mxu0 %v2062
      %v2115 = vpop.f32.mrb[0].mxu0
      %v2116 = vadd.f32 0.0, %v2115
      %v2117 = vpop.f32.mrb[0].mxu0
      %v2118 = vpop.f32.mrb[0].mxu0
      %v2119 = vadd.f32 0.0, %v2118
      %v2120 = vpop.f32.mrb[0].mxu0
      %2121 = vmatprep.mubr.bf16.mxu0 0
      %2122 = vmatmul.mubr.bf16.gmra.mrb[0].mxu0 %v2065
      %v2123 = vpop.f32.mrb[0].mxu0
      %v2124 = vadd.f32 0.0, %v2123
      %v2125 = vpop.f32.mrb[0].mxu0
      %v2126 = vpop.f32.mrb[0].mxu0
      %v2127 = vadd.f32 0.0, %v2126
      %v2128 = vpop.f32.mrb[0].mxu0
      %2129 = vmatprep.mubr.bf16.mxu0 0
      %2130 = vmatmul.mubr.bf16.gmra.mrb[0].mxu0 %v2068
      %v2131 = vpop.f32.mrb[0].mxu0
      %v2132 = vadd.f32 0.0, %v2131
      %v2133 = vpop.f32.mrb[0].mxu0
      %v2134 = vpop.f32.mrb[0].mxu0
      %v2135 = vadd.f32 0.0, %v2134
      %v2136 = vpop.f32.mrb[0].mxu0
      %2137 = vdwg.mxu0
      %v2138 = vadd.f32 %v2030, %v2108
      %v2139 = vadd.f32 %v2031, %v2111
      %v2140 = vadd.f32 %v2032, %v2116
      %v2141 = vadd.f32 %v2033, %v2119
      %v2142 = vadd.f32 %v2034, %v2124
      %v2143 = vadd.f32 %v2035, %v2127
      %v2144 = vadd.f32 %v2036, %v2132
      %v2145 = vadd.f32 %v2037, %v2135
      %v2146 = vunpack.c.l.b16 %v1719
      %v2147 = vunpack.c.l.b16 %v1733
      %v2148 = vunpack.c.l.b16 %v1747
      %v2149 = vunpack.c.l.b16 %v1761
      %v2150 = vunpack.c.l.b16 %v1775
      %v2151 = vunpack.c.l.b16 %v1789
      %v2152 = vunpack.c.l.b16 %v1803
      %v2153 = vunpack.c.l.b16 %v1817
      %v2154 = vpack.c.b16 %v2147, %v2146
      %v2155 = vpack.c.b16 %v2149, %v2148
      %v2156 = vpack.c.b16 %v2151, %v2150
      %v2157 = vpack.c.b16 %v2153, %v2152
      %v2159 = vsel %vm618, %v2154, 0
      %v2162 = vsel %vm618, %v2155, 0
      %v2165 = vsel %vm618, %v2156, 0
      %v2168 = vsel %vm618, %v2157, 0
      %v2171 = vsel %vm631, %v333, 0
      %2173 = vmatprep.subr.bf16.mxu0 0
      %2174 = vmatpush1.bf16.msra.mxu0 %v2171
      %2175 = vmatprep.subr.bf16.mxu0 0
      %2176 = vmatpush1.bf16.msra.mxu0 0
      %2177 = vmatprep.subr.bf16.mxu0 0
      %2178 = vmatpush1.bf16.msra.mxu0 0
      %2179 = vmatprep.subr.bf16.mxu0 0
      %2180 = vmatpush1.bf16.msra.mxu0 0
      %2181 = vmatprep.subr.bf16.mxu0 0
      %2182 = vmatpush1.bf16.msra.mxu0 0
      %2183 = vmatprep.subr.bf16.mxu0 0
      %2184 = vmatpush1.bf16.msra.mxu0 0
      %2185 = vmatprep.subr.bf16.mxu0 0
      %2186 = vmatpush1.bf16.msra.mxu0 0
      %2187 = vmatprep.subr.bf16.mxu0 0
      %2188 = vmatpush1.bf16.msra.mxu0 0
      %2189 = vmatprep.subr.bf16.mxu0 0
      %2190 = vmatpush1.bf16.msra.mxu0 0
      %2191 = vmatprep.subr.bf16.mxu0 0
      %2192 = vmatpush1.bf16.msra.mxu0 0
      %2193 = vmatprep.subr.bf16.mxu0 0
      %2194 = vmatpush1.bf16.msra.mxu0 0
      %2195 = vmatprep.subr.bf16.mxu0 0
      %2196 = vmatpush1.bf16.msra.mxu0 0
      %2197 = vmatprep.subr.bf16.mxu0 0
      %2198 = vmatpush1.bf16.msra.mxu0 0
      %2199 = vmatprep.subr.bf16.mxu0 0
      %2200 = vmatpush1.bf16.msra.mxu0 0
      %2201 = vmatprep.subr.bf16.mxu0 0
      %2202 = vmatpush1.bf16.msra.mxu0 0
      %2203 = vmatprep.subr.bf16.mxu0 0
      %2204 = vmatpush1.bf16.msra.mxu0 0
      %2205 = vmatprep.mubr.bf16.mxu0 0
      %2206 = vmatmul.mubr.bf16.gmra.mrb[0].mxu0 %v2159
      %v2207 = vpop.f32.mrb[0].mxu0
      %v2208 = vadd.f32 0.0, %v2207
      %v2209 = vpop.f32.mrb[0].mxu0
      %v2210 = vpop.f32.mrb[0].mxu0
      %v2211 = vadd.f32 0.0, %v2210
      %v2212 = vpop.f32.mrb[0].mxu0
      %2213 = vmatprep.mubr.bf16.mxu0 0
      %2214 = vmatmul.mubr.bf16.gmra.mrb[0].mxu0 %v2162
      %v2215 = vpop.f32.mrb[0].mxu0
      %v2216 = vadd.f32 0.0, %v2215
      %v2217 = vpop.f32.mrb[0].mxu0
      %v2218 = vpop.f32.mrb[0].mxu0
      %v2219 = vadd.f32 0.0, %v2218
      %v2220 = vpop.f32.mrb[0].mxu0
      %2221 = vmatprep.mubr.bf16.mxu0 0
      %2222 = vmatmul.mubr.bf16.gmra.mrb[0].mxu0 %v2165
      %v2223 = vpop.f32.mrb[0].mxu0
      %v2224 = vadd.f32 0.0, %v2223
      %v2225 = vpop.f32.mrb[0].mxu0
      %v2226 = vpop.f32.mrb[0].mxu0
      %v2227 = vadd.f32 0.0, %v2226
      %v2228 = vpop.f32.mrb[0].mxu0
      %2229 = vmatprep.mubr.bf16.mxu0 0
      %2230 = vmatmul.mubr.bf16.gmra.mrb[0].mxu0 %v2168
      %v2231 = vpop.f32.mrb[0].mxu0
      %v2232 = vadd.f32 0.0, %v2231
      %v2233 = vpop.f32.mrb[0].mxu0
      %v2234 = vpop.f32.mrb[0].mxu0
      %v2235 = vadd.f32 0.0, %v2234
      %v2236 = vpop.f32.mrb[0].mxu0
      %2237 = vdwg.mxu0
      %v2238 = vadd.f32 %v2138, %v2208
      %v2239 = vadd.f32 %v2139, %v2211
      %v2240 = vadd.f32 %v2140, %v2216
      %v2241 = vadd.f32 %v2141, %v2219
      %v2242 = vadd.f32 %v2142, %v2224
      %v2243 = vadd.f32 %v2143, %v2227
      %v2244 = vadd.f32 %v2144, %v2232
      %v2245 = vadd.f32 %v2145, %v2235
      %v2246 = vunpack.c.l.b16 %v1831
      %v2247 = vunpack.c.l.b16 %v1845
      %v2248 = vunpack.c.l.b16 %v1859
      %v2249 = vunpack.c.l.b16 %v1873
      %v2250 = vunpack.c.l.b16 %v1887
      %v2251 = vunpack.c.l.b16 %v1901
      %v2252 = vunpack.c.l.b16 %v1915
      %v2253 = vunpack.c.l.b16 %v1929
      %v2254 = vpack.c.b16 %v2247, %v2246
      %v2255 = vpack.c.b16 %v2249, %v2248
      %v2256 = vpack.c.b16 %v2251, %v2250
      %v2257 = vpack.c.b16 %v2253, %v2252
      %v2259 = vsel %vm618, %v2254, 0
      %v2262 = vsel %vm618, %v2255, 0
      %v2265 = vsel %vm618, %v2256, 0
      %v2268 = vsel %vm618, %v2257, 0
      %v2271 = vsel %vm631, %v334, 0
      %2273 = vmatprep.subr.bf16.mxu0 0
      %2274 = vmatpush1.bf16.msra.mxu0 %v2271
      %2275 = vmatprep.subr.bf16.mxu0 0
      %2276 = vmatpush1.bf16.msra.mxu0 0
      %2277 = vmatprep.subr.bf16.mxu0 0
      %2278 = vmatpush1.bf16.msra.mxu0 0
      %2279 = vmatprep.subr.bf16.mxu0 0
      %2280 = vmatpush1.bf16.msra.mxu0 0
      %2281 = vmatprep.subr.bf16.mxu0 0
      %2282 = vmatpush1.bf16.msra.mxu0 0
      %2283 = vmatprep.subr.bf16.mxu0 0
      %2284 = vmatpush1.bf16.msra.mxu0 0
      %2285 = vmatprep.subr.bf16.mxu0 0
      %2286 = vmatpush1.bf16.msra.mxu0 0
      %2287 = vmatprep.subr.bf16.mxu0 0
      %2288 = vmatpush1.bf16.msra.mxu0 0
      %2289 = vmatprep.subr.bf16.mxu0 0
      %2290 = vmatpush1.bf16.msra.mxu0 0
      %2291 = vmatprep.subr.bf16.mxu0 0
      %2292 = vmatpush1.bf16.msra.mxu0 0
      %2293 = vmatprep.subr.bf16.mxu0 0
      %2294 = vmatpush1.bf16.msra.mxu0 0
      %2295 = vmatprep.subr.bf16.mxu0 0
      %2296 = vmatpush1.bf16.msra.mxu0 0
      %2297 = vmatprep.subr.bf16.mxu0 0
      %2298 = vmatpush1.bf16.msra.mxu0 0
      %2299 = vmatprep.subr.bf16.mxu0 0
      %2300 = vmatpush1.bf16.msra.mxu0 0
      %2301 = vmatprep.subr.bf16.mxu0 0
      %2302 = vmatpush1.bf16.msra.mxu0 0
      %2303 = vmatprep.subr.bf16.mxu0 0
      %2304 = vmatpush1.bf16.msra.mxu0 0
      %2305 = vmatprep.mubr.bf16.mxu0 0
      %2306 = vmatmul.mubr.bf16.gmra.mrb[0].mxu0 %v2259
      %v2307 = vpop.f32.mrb[0].mxu0
      %v2308 = vadd.f32 0.0, %v2307
      %v2309 = vpop.f32.mrb[0].mxu0
      %v2310 = vpop.f32.mrb[0].mxu0
      %v2311 = vadd.f32 0.0, %v2310
      %v2312 = vpop.f32.mrb[0].mxu0
      %2313 = vmatprep.mubr.bf16.mxu0 0
      %2314 = vmatmul.mubr.bf16.gmra.mrb[0].mxu0 %v2262
      %v2315 = vpop.f32.mrb[0].mxu0
      %v2316 = vadd.f32 0.0, %v2315
      %v2317 = vpop.f32.mrb[0].mxu0
      %v2318 = vpop.f32.mrb[0].mxu0
      %v2319 = vadd.f32 0.0, %v2318
      %v2320 = vpop.f32.mrb[0].mxu0
      %2321 = vmatprep.mubr.bf16.mxu0 0
      %2322 = vmatmul.mubr.bf16.gmra.mrb[0].mxu0 %v2265
      %v2323 = vpop.f32.mrb[0].mxu0
      %v2324 = vadd.f32 0.0, %v2323
      %v2325 = vpop.f32.mrb[0].mxu0
      %v2326 = vpop.f32.mrb[0].mxu0
      %v2327 = vadd.f32 0.0, %v2326
      %v2328 = vpop.f32.mrb[0].mxu0
      %2329 = vmatprep.mubr.bf16.mxu0 0
      %2330 = vmatmul.mubr.bf16.gmra.mrb[0].mxu0 %v2268
      %v2331 = vpop.f32.mrb[0].mxu0
      %v2332 = vadd.f32 0.0, %v2331
      %v2333 = vpop.f32.mrb[0].mxu0
      %v2334 = vpop.f32.mrb[0].mxu0
      %v2335 = vadd.f32 0.0, %v2334
      %v2336 = vpop.f32.mrb[0].mxu0
      %2337 = vdwg.mxu0
      %v2338 = vadd.f32 %v2238, %v2308
      %v2339 = vadd.f32 %v2239, %v2311
      %v2340 = vadd.f32 %v2240, %v2316
      %v2341 = vadd.f32 %v2241, %v2319
      %v2342 = vadd.f32 %v2242, %v2324
      %v2343 = vadd.f32 %v2243, %v2327
      %v2344 = vadd.f32 %v2244, %v2332
      %v2345 = vadd.f32 %v2245, %v2335
      %s2346 = scalar_lea.vmem %s304, 8
      %v2347 = vld [vmem:[%s2346] sm:$0xf]
      %v2348 = vld [vmem:[%s2346 + $0x4] sm:$0x1]
      %v2349 = vld [vmem:[%s2346 + $0x8] sm:$0xf]
      %v2350 = vld [vmem:[%s2346 + $0xc] sm:$0x1]
      %v2351 = vld [vmem:[%s2346 + $0x10] sm:$0xf]
      %v2352 = vld [vmem:[%s2346 + $0x14] sm:$0x1]
      %v2353 = vld [vmem:[%s2346 + $0x18] sm:$0xf]
      %v2354 = vld [vmem:[%s2346 + $0x1c] sm:$0x1]
      %v2355 = vld [vmem:[%s2346 + $0x20] sm:$0xf]
      %v2356 = vld [vmem:[%s2346 + $0x24] sm:$0x1]
      %v2357 = vld [vmem:[%s2346 + $0x28] sm:$0xf]
      %v2358 = vld [vmem:[%s2346 + $0x2c] sm:$0x1]
      %v2359 = vld [vmem:[%s2346 + $0x30] sm:$0xf]
      %v2360 = vld [vmem:[%s2346 + $0x34] sm:$0x1]
      %v2361 = vld [vmem:[%s2346 + $0x38] sm:$0xf]
      %v2362 = vld [vmem:[%s2346 + $0x3c] sm:$0x1]
      %s2363 = scalar_lea.vmem %s309, 8
      %v2364 = vld [vmem:[%s2363] sm:$0xf]
      %v2365 = vld [vmem:[%s2363 + $0x4] sm:$0x1]
      %v2366 = vld [vmem:[%s2363 + $0x8] sm:$0xf]
      %v2367 = vld [vmem:[%s2363 + $0xc] sm:$0x1]
      %v2368 = vld [vmem:[%s2363 + $0x10] sm:$0xf]
      %v2369 = vld [vmem:[%s2363 + $0x14] sm:$0x1]
      %v2370 = vld [vmem:[%s2363 + $0x18] sm:$0xf]
      %v2371 = vld [vmem:[%s2363 + $0x1c] sm:$0x1]
      %v2372 = vld [vmem:[%s2363 + $0x20] sm:$0xf]
      %v2373 = vld [vmem:[%s2363 + $0x24] sm:$0x1]
      %v2374 = vld [vmem:[%s2363 + $0x28] sm:$0xf]
      %v2375 = vld [vmem:[%s2363 + $0x2c] sm:$0x1]
      %v2376 = vld [vmem:[%s2363 + $0x30] sm:$0xf]
      %v2377 = vld [vmem:[%s2363 + $0x34] sm:$0x1]
      %v2378 = vld [vmem:[%s2363 + $0x38] sm:$0xf]
      %v2379 = vld [vmem:[%s2363 + $0x3c] sm:$0x1]
      %v2381 = vshrl.u32 %v2347, 16
      %v2383 = vrot.slane %v2381, 4
      %v2384 = vshll.u32 %v2347, 16
      %v2386 = vrot.slane %v2384, 5
      %v2387 = vor.u32 %v2383, %v2386
      %v2388 = vrot.slane %v2387, 4
      %v2390 = vshll.u32 %v2348, 16
      %v2392 = vrot.slane %v2390, 5
      %v2393 = vsel %vm373, %v2388, %v2392
      %v2395 = vshrl.u32 %v2349, 16
      %v2397 = vrot.slane %v2395, 4
      %v2398 = vshll.u32 %v2349, 16
      %v2400 = vrot.slane %v2398, 5
      %v2401 = vor.u32 %v2397, %v2400
      %v2402 = vrot.slane %v2401, 4
      %v2404 = vshll.u32 %v2350, 16
      %v2406 = vrot.slane %v2404, 5
      %v2407 = vsel %vm373, %v2402, %v2406
      %v2409 = vshrl.u32 %v2351, 16
      %v2411 = vrot.slane %v2409, 4
      %v2412 = vshll.u32 %v2351, 16
      %v2414 = vrot.slane %v2412, 5
      %v2415 = vor.u32 %v2411, %v2414
      %v2416 = vrot.slane %v2415, 4
      %v2418 = vshll.u32 %v2352, 16
      %v2420 = vrot.slane %v2418, 5
      %v2421 = vsel %vm373, %v2416, %v2420
      %v2423 = vshrl.u32 %v2353, 16
      %v2425 = vrot.slane %v2423, 4
      %v2426 = vshll.u32 %v2353, 16
      %v2428 = vrot.slane %v2426, 5
      %v2429 = vor.u32 %v2425, %v2428
      %v2430 = vrot.slane %v2429, 4
      %v2432 = vshll.u32 %v2354, 16
      %v2434 = vrot.slane %v2432, 5
      %v2435 = vsel %vm373, %v2430, %v2434
      %v2437 = vshrl.u32 %v2355, 16
      %v2439 = vrot.slane %v2437, 4
      %v2440 = vshll.u32 %v2355, 16
      %v2442 = vrot.slane %v2440, 5
      %v2443 = vor.u32 %v2439, %v2442
      %v2444 = vrot.slane %v2443, 4
      %v2446 = vshll.u32 %v2356, 16
      %v2448 = vrot.slane %v2446, 5
      %v2449 = vsel %vm373, %v2444, %v2448
      %v2451 = vshrl.u32 %v2357, 16
      %v2453 = vrot.slane %v2451, 4
      %v2454 = vshll.u32 %v2357, 16
      %v2456 = vrot.slane %v2454, 5
      %v2457 = vor.u32 %v2453, %v2456
      %v2458 = vrot.slane %v2457, 4
      %v2460 = vshll.u32 %v2358, 16
      %v2462 = vrot.slane %v2460, 5
      %v2463 = vsel %vm373, %v2458, %v2462
      %v2465 = vshrl.u32 %v2359, 16
      %v2467 = vrot.slane %v2465, 4
      %v2468 = vshll.u32 %v2359, 16
      %v2470 = vrot.slane %v2468, 5
      %v2471 = vor.u32 %v2467, %v2470
      %v2472 = vrot.slane %v2471, 4
      %v2474 = vshll.u32 %v2360, 16
      %v2476 = vrot.slane %v2474, 5
      %v2477 = vsel %vm373, %v2472, %v2476
      %v2479 = vshrl.u32 %v2361, 16
      %v2481 = vrot.slane %v2479, 4
      %v2482 = vshll.u32 %v2361, 16
      %v2484 = vrot.slane %v2482, 5
      %v2485 = vor.u32 %v2481, %v2484
      %v2486 = vrot.slane %v2485, 4
      %v2488 = vshll.u32 %v2362, 16
      %v2490 = vrot.slane %v2488, 5
      %v2491 = vsel %vm373, %v2486, %v2490
      %v2493 = vshrl.u32 %v2364, 16
      %v2495 = vrot.slane %v2493, 4
      %v2496 = vshll.u32 %v2364, 16
      %v2498 = vrot.slane %v2496, 5
      %v2499 = vor.u32 %v2495, %v2498
      %v2500 = vrot.slane %v2499, 4
      %v2502 = vshll.u32 %v2365, 16
      %v2504 = vrot.slane %v2502, 5
      %v2505 = vsel %vm373, %v2500, %v2504
      %v2507 = vshrl.u32 %v2366, 16
      %v2509 = vrot.slane %v2507, 4
      %v2510 = vshll.u32 %v2366, 16
      %v2512 = vrot.slane %v2510, 5
      %v2513 = vor.u32 %v2509, %v2512
      %v2514 = vrot.slane %v2513, 4
      %v2516 = vshll.u32 %v2367, 16
      %v2518 = vrot.slane %v2516, 5
      %v2519 = vsel %vm373, %v2514, %v2518
      %v2521 = vshrl.u32 %v2368, 16
      %v2523 = vrot.slane %v2521, 4
      %v2524 = vshll.u32 %v2368, 16
      %v2526 = vrot.slane %v2524, 5
      %v2527 = vor.u32 %v2523, %v2526
      %v2528 = vrot.slane %v2527, 4
      %v2530 = vshll.u32 %v2369, 16
      %v2532 = vrot.slane %v2530, 5
      %v2533 = vsel %vm373, %v2528, %v2532
      %v2535 = vshrl.u32 %v2370, 16
      %v2537 = vrot.slane %v2535, 4
      %v2538 = vshll.u32 %v2370, 16
      %v2540 = vrot.slane %v2538, 5
      %v2541 = vor.u32 %v2537, %v2540
      %v2542 = vrot.slane %v2541, 4
      %v2544 = vshll.u32 %v2371, 16
      %v2546 = vrot.slane %v2544, 5
      %v2547 = vsel %vm373, %v2542, %v2546
      %v2549 = vshrl.u32 %v2372, 16
      %v2551 = vrot.slane %v2549, 4
      %v2552 = vshll.u32 %v2372, 16
      %v2554 = vrot.slane %v2552, 5
      %v2555 = vor.u32 %v2551, %v2554
      %v2556 = vrot.slane %v2555, 4
      %v2558 = vshll.u32 %v2373, 16
      %v2560 = vrot.slane %v2558, 5
      %v2561 = vsel %vm373, %v2556, %v2560
      %v2563 = vshrl.u32 %v2374, 16
      %v2565 = vrot.slane %v2563, 4
      %v2566 = vshll.u32 %v2374, 16
      %v2568 = vrot.slane %v2566, 5
      %v2569 = vor.u32 %v2565, %v2568
      %v2570 = vrot.slane %v2569, 4
      %v2572 = vshll.u32 %v2375, 16
      %v2574 = vrot.slane %v2572, 5
      %v2575 = vsel %vm373, %v2570, %v2574
      %v2577 = vshrl.u32 %v2376, 16
      %v2579 = vrot.slane %v2577, 4
      %v2580 = vshll.u32 %v2376, 16
      %v2582 = vrot.slane %v2580, 5
      %v2583 = vor.u32 %v2579, %v2582
      %v2584 = vrot.slane %v2583, 4
      %v2586 = vshll.u32 %v2377, 16
      %v2588 = vrot.slane %v2586, 5
      %v2589 = vsel %vm373, %v2584, %v2588
      %v2591 = vshrl.u32 %v2378, 16
      %v2593 = vrot.slane %v2591, 4
      %v2594 = vshll.u32 %v2378, 16
      %v2596 = vrot.slane %v2594, 5
      %v2597 = vor.u32 %v2593, %v2596
      %v2598 = vrot.slane %v2597, 4
      %v2600 = vshll.u32 %v2379, 16
      %v2602 = vrot.slane %v2600, 5
      %v2603 = vsel %vm373, %v2598, %v2602
      %v2612 = vunpack.c.l.b16 %v2347
      %v2613 = vunpack.c.l.b16 %v2349
      %v2614 = vunpack.c.l.b16 %v2351
      %v2615 = vunpack.c.l.b16 %v2353
      %v2616 = vunpack.c.l.b16 %v2355
      %v2617 = vunpack.c.l.b16 %v2357
      %v2618 = vunpack.c.l.b16 %v2359
      %v2619 = vunpack.c.l.b16 %v2361
      %v2620 = vpack.c.b16 %v2613, %v2612
      %v2621 = vpack.c.b16 %v2615, %v2614
      %v2622 = vpack.c.b16 %v2617, %v2616
      %v2623 = vpack.c.b16 %v2619, %v2618
      %v2625 = vsel %vm618, %v2620, 0
      %v2628 = vsel %vm618, %v2621, 0
      %v2631 = vsel %vm618, %v2622, 0
      %v2634 = vsel %vm618, %v2623, 0
      %v2637 = vsel %vm631, %v335, 0
      %2639 = vmatprep.subr.bf16.mxu0 0
      %2640 = vmatpush1.bf16.msra.mxu0 %v2637
      %2641 = vmatprep.subr.bf16.mxu0 0
      %2642 = vmatpush1.bf16.msra.mxu0 0
      %2643 = vmatprep.subr.bf16.mxu0 0
      %2644 = vmatpush1.bf16.msra.mxu0 0
      %2645 = vmatprep.subr.bf16.mxu0 0
      %2646 = vmatpush1.bf16.msra.mxu0 0
      %2647 = vmatprep.subr.bf16.mxu0 0
      %2648 = vmatpush1.bf16.msra.mxu0 0
      %2649 = vmatprep.subr.bf16.mxu0 0
      %2650 = vmatpush1.bf16.msra.mxu0 0
      %2651 = vmatprep.subr.bf16.mxu0 0
      %2652 = vmatpush1.bf16.msra.mxu0 0
      %2653 = vmatprep.subr.bf16.mxu0 0
      %2654 = vmatpush1.bf16.msra.mxu0 0
      %2655 = vmatprep.subr.bf16.mxu0 0
      %2656 = vmatpush1.bf16.msra.mxu0 0
      %2657 = vmatprep.subr.bf16.mxu0 0
      %2658 = vmatpush1.bf16.msra.mxu0 0
      %2659 = vmatprep.subr.bf16.mxu0 0
      %2660 = vmatpush1.bf16.msra.mxu0 0
      %2661 = vmatprep.subr.bf16.mxu0 0
      %2662 = vmatpush1.bf16.msra.mxu0 0
      %2663 = vmatprep.subr.bf16.mxu0 0
      %2664 = vmatpush1.bf16.msra.mxu0 0
      %2665 = vmatprep.subr.bf16.mxu0 0
      %2666 = vmatpush1.bf16.msra.mxu0 0
      %2667 = vmatprep.subr.bf16.mxu0 0
      %2668 = vmatpush1.bf16.msra.mxu0 0
      %2669 = vmatprep.subr.bf16.mxu0 0
      %2670 = vmatpush1.bf16.msra.mxu0 0
      %2671 = vmatprep.mubr.bf16.mxu0 0
      %2672 = vmatmul.mubr.bf16.gmra.mrb[0].mxu0 %v2625
      %v2673 = vpop.f32.mrb[0].mxu0
      %v2674 = vadd.f32 0.0, %v2673
      %v2675 = vpop.f32.mrb[0].mxu0
      %v2676 = vpop.f32.mrb[0].mxu0
      %v2677 = vadd.f32 0.0, %v2676
      %v2678 = vpop.f32.mrb[0].mxu0
      %2679 = vmatprep.mubr.bf16.mxu0 0
      %2680 = vmatmul.mubr.bf16.gmra.mrb[0].mxu0 %v2628
      %v2681 = vpop.f32.mrb[0].mxu0
      %v2682 = vadd.f32 0.0, %v2681
      %v2683 = vpop.f32.mrb[0].mxu0
      %v2684 = vpop.f32.mrb[0].mxu0
      %v2685 = vadd.f32 0.0, %v2684
      %v2686 = vpop.f32.mrb[0].mxu0
      %2687 = vmatprep.mubr.bf16.mxu0 0
      %2688 = vmatmul.mubr.bf16.gmra.mrb[0].mxu0 %v2631
      %v2689 = vpop.f32.mrb[0].mxu0
      %v2690 = vadd.f32 0.0, %v2689
      %v2691 = vpop.f32.mrb[0].mxu0
      %v2692 = vpop.f32.mrb[0].mxu0
      %v2693 = vadd.f32 0.0, %v2692
      %v2694 = vpop.f32.mrb[0].mxu0
      %2695 = vmatprep.mubr.bf16.mxu0 0
      %2696 = vmatmul.mubr.bf16.gmra.mrb[0].mxu0 %v2634
      %v2697 = vpop.f32.mrb[0].mxu0
      %v2698 = vadd.f32 0.0, %v2697
      %v2699 = vpop.f32.mrb[0].mxu0
      %v2700 = vpop.f32.mrb[0].mxu0
      %v2701 = vadd.f32 0.0, %v2700
      %v2702 = vpop.f32.mrb[0].mxu0
      %2703 = vdwg.mxu0
      %v2704 = vadd.f32 %v2338, %v2674
      %v2705 = vadd.f32 %v2339, %v2677
      %v2706 = vadd.f32 %v2340, %v2682
      %v2707 = vadd.f32 %v2341, %v2685
      %v2708 = vadd.f32 %v2342, %v2690
      %v2709 = vadd.f32 %v2343, %v2693
      %v2710 = vadd.f32 %v2344, %v2698
      %v2711 = vadd.f32 %v2345, %v2701
      %v2720 = vunpack.c.l.b16 %v2364
      %v2721 = vunpack.c.l.b16 %v2366
      %v2722 = vunpack.c.l.b16 %v2368
      %v2723 = vunpack.c.l.b16 %v2370
      %v2724 = vunpack.c.l.b16 %v2372
      %v2725 = vunpack.c.l.b16 %v2374
      %v2726 = vunpack.c.l.b16 %v2376
      %v2727 = vunpack.c.l.b16 %v2378
      %v2728 = vpack.c.b16 %v2721, %v2720
      %v2729 = vpack.c.b16 %v2723, %v2722
      %v2730 = vpack.c.b16 %v2725, %v2724
      %v2731 = vpack.c.b16 %v2727, %v2726
      %v2733 = vsel %vm618, %v2728, 0
      %v2736 = vsel %vm618, %v2729, 0
      %v2739 = vsel %vm618, %v2730, 0
      %v2742 = vsel %vm618, %v2731, 0
      %v2745 = vsel %vm631, %v336, 0
      %2747 = vmatprep.subr.bf16.mxu0 0
      %2748 = vmatpush1.bf16.msra.mxu0 %v2745
      %2749 = vmatprep.subr.bf16.mxu0 0
      %2750 = vmatpush1.bf16.msra.mxu0 0
      %2751 = vmatprep.subr.bf16.mxu0 0
      %2752 = vmatpush1.bf16.msra.mxu0 0
      %2753 = vmatprep.subr.bf16.mxu0 0
      %2754 = vmatpush1.bf16.msra.mxu0 0
      %2755 = vmatprep.subr.bf16.mxu0 0
      %2756 = vmatpush1.bf16.msra.mxu0 0
      %2757 = vmatprep.subr.bf16.mxu0 0
      %2758 = vmatpush1.bf16.msra.mxu0 0
      %2759 = vmatprep.subr.bf16.mxu0 0
      %2760 = vmatpush1.bf16.msra.mxu0 0
      %2761 = vmatprep.subr.bf16.mxu0 0
      %2762 = vmatpush1.bf16.msra.mxu0 0
      %2763 = vmatprep.subr.bf16.mxu0 0
      %2764 = vmatpush1.bf16.msra.mxu0 0
      %2765 = vmatprep.subr.bf16.mxu0 0
      %2766 = vmatpush1.bf16.msra.mxu0 0
      %2767 = vmatprep.subr.bf16.mxu0 0
      %2768 = vmatpush1.bf16.msra.mxu0 0
      %2769 = vmatprep.subr.bf16.mxu0 0
      %2770 = vmatpush1.bf16.msra.mxu0 0
      %2771 = vmatprep.subr.bf16.mxu0 0
      %2772 = vmatpush1.bf16.msra.mxu0 0
      %2773 = vmatprep.subr.bf16.mxu0 0
      %2774 = vmatpush1.bf16.msra.mxu0 0
      %2775 = vmatprep.subr.bf16.mxu0 0
      %2776 = vmatpush1.bf16.msra.mxu0 0
      %2777 = vmatprep.subr.bf16.mxu0 0
      %2778 = vmatpush1.bf16.msra.mxu0 0
      %2779 = vmatprep.mubr.bf16.mxu0 0
      %2780 = vmatmul.mubr.bf16.gmra.mrb[0].mxu0 %v2733
      %v2781 = vpop.f32.mrb[0].mxu0
      %v2782 = vadd.f32 0.0, %v2781
      %v2783 = vpop.f32.mrb[0].mxu0
      %v2784 = vpop.f32.mrb[0].mxu0
      %v2785 = vadd.f32 0.0, %v2784
      %v2786 = vpop.f32.mrb[0].mxu0
      %2787 = vmatprep.mubr.bf16.mxu0 0
      %2788 = vmatmul.mubr.bf16.gmra.mrb[0].mxu0 %v2736
      %v2789 = vpop.f32.mrb[0].mxu0
      %v2790 = vadd.f32 0.0, %v2789
      %v2791 = vpop.f32.mrb[0].mxu0
      %v2792 = vpop.f32.mrb[0].mxu0
      %v2793 = vadd.f32 0.0, %v2792
      %v2794 = vpop.f32.mrb[0].mxu0
      %2795 = vmatprep.mubr.bf16.mxu0 0
      %2796 = vmatmul.mubr.bf16.gmra.mrb[0].mxu0 %v2739
      %v2797 = vpop.f32.mrb[0].mxu0
      %v2798 = vadd.f32 0.0, %v2797
      %v2799 = vpop.f32.mrb[0].mxu0
      %v2800 = vpop.f32.mrb[0].mxu0
      %v2801 = vadd.f32 0.0, %v2800
      %v2802 = vpop.f32.mrb[0].mxu0
      %2803 = vmatprep.mubr.bf16.mxu0 0
      %2804 = vmatmul.mubr.bf16.gmra.mrb[0].mxu0 %v2742
      %v2805 = vpop.f32.mrb[0].mxu0
      %v2806 = vadd.f32 0.0, %v2805
      %v2807 = vpop.f32.mrb[0].mxu0
      %v2808 = vpop.f32.mrb[0].mxu0
      %v2809 = vadd.f32 0.0, %v2808
      %v2810 = vpop.f32.mrb[0].mxu0
      %2811 = vdwg.mxu0
      %v2812 = vadd.f32 %v2704, %v2782
      %v2813 = vadd.f32 %v2705, %v2785
      %v2814 = vadd.f32 %v2706, %v2790
      %v2815 = vadd.f32 %v2707, %v2793
      %v2816 = vadd.f32 %v2708, %v2798
      %v2817 = vadd.f32 %v2709, %v2801
      %v2818 = vadd.f32 %v2710, %v2806
      %v2819 = vadd.f32 %v2711, %v2809
      %v2820 = vunpack.c.l.b16 %v2393
      %v2821 = vunpack.c.l.b16 %v2407
      %v2822 = vunpack.c.l.b16 %v2421
      %v2823 = vunpack.c.l.b16 %v2435
      %v2824 = vunpack.c.l.b16 %v2449
      %v2825 = vunpack.c.l.b16 %v2463
      %v2826 = vunpack.c.l.b16 %v2477
      %v2827 = vunpack.c.l.b16 %v2491
      %v2828 = vpack.c.b16 %v2821, %v2820
      %v2829 = vpack.c.b16 %v2823, %v2822
      %v2830 = vpack.c.b16 %v2825, %v2824
      %v2831 = vpack.c.b16 %v2827, %v2826
      %v2833 = vsel %vm618, %v2828, 0
      %v2836 = vsel %vm618, %v2829, 0
      %v2839 = vsel %vm618, %v2830, 0
      %v2842 = vsel %vm618, %v2831, 0
      %v2845 = vsel %vm631, %v337, 0
      %2847 = vmatprep.subr.bf16.mxu0 0
      %2848 = vmatpush1.bf16.msra.mxu0 %v2845
      %2849 = vmatprep.subr.bf16.mxu0 0
      %2850 = vmatpush1.bf16.msra.mxu0 0
      %2851 = vmatprep.subr.bf16.mxu0 0
      %2852 = vmatpush1.bf16.msra.mxu0 0
      %2853 = vmatprep.subr.bf16.mxu0 0
      %2854 = vmatpush1.bf16.msra.mxu0 0
      %2855 = vmatprep.subr.bf16.mxu0 0
      %2856 = vmatpush1.bf16.msra.mxu0 0
      %2857 = vmatprep.subr.bf16.mxu0 0
      %2858 = vmatpush1.bf16.msra.mxu0 0
      %2859 = vmatprep.subr.bf16.mxu0 0
      %2860 = vmatpush1.bf16.msra.mxu0 0
      %2861 = vmatprep.subr.bf16.mxu0 0
      %2862 = vmatpush1.bf16.msra.mxu0 0
      %2863 = vmatprep.subr.bf16.mxu0 0
      %2864 = vmatpush1.bf16.msra.mxu0 0
      %2865 = vmatprep.subr.bf16.mxu0 0
      %2866 = vmatpush1.bf16.msra.mxu0 0
      %2867 = vmatprep.subr.bf16.mxu0 0
      %2868 = vmatpush1.bf16.msra.mxu0 0
      %2869 = vmatprep.subr.bf16.mxu0 0
      %2870 = vmatpush1.bf16.msra.mxu0 0
      %2871 = vmatprep.subr.bf16.mxu0 0
      %2872 = vmatpush1.bf16.msra.mxu0 0
      %2873 = vmatprep.subr.bf16.mxu0 0
      %2874 = vmatpush1.bf16.msra.mxu0 0
      %2875 = vmatprep.subr.bf16.mxu0 0
      %2876 = vmatpush1.bf16.msra.mxu0 0
      %2877 = vmatprep.subr.bf16.mxu0 0
      %2878 = vmatpush1.bf16.msra.mxu0 0
      %2879 = vmatprep.mubr.bf16.mxu0 0
      %2880 = vmatmul.mubr.bf16.gmra.mrb[0].mxu0 %v2833
      %v2881 = vpop.f32.mrb[0].mxu0
      %v2882 = vadd.f32 0.0, %v2881
      %v2883 = vpop.f32.mrb[0].mxu0
      %v2884 = vpop.f32.mrb[0].mxu0
      %v2885 = vadd.f32 0.0, %v2884
      %v2886 = vpop.f32.mrb[0].mxu0
      %2887 = vmatprep.mubr.bf16.mxu0 0
      %2888 = vmatmul.mubr.bf16.gmra.mrb[0].mxu0 %v2836
      %v2889 = vpop.f32.mrb[0].mxu0
      %v2890 = vadd.f32 0.0, %v2889
      %v2891 = vpop.f32.mrb[0].mxu0
      %v2892 = vpop.f32.mrb[0].mxu0
      %v2893 = vadd.f32 0.0, %v2892
      %v2894 = vpop.f32.mrb[0].mxu0
      %2895 = vmatprep.mubr.bf16.mxu0 0
      %2896 = vmatmul.mubr.bf16.gmra.mrb[0].mxu0 %v2839
      %v2897 = vpop.f32.mrb[0].mxu0
      %v2898 = vadd.f32 0.0, %v2897
      %v2899 = vpop.f32.mrb[0].mxu0
      %v2900 = vpop.f32.mrb[0].mxu0
      %v2901 = vadd.f32 0.0, %v2900
      %v2902 = vpop.f32.mrb[0].mxu0
      %2903 = vmatprep.mubr.bf16.mxu0 0
      %2904 = vmatmul.mubr.bf16.gmra.mrb[0].mxu0 %v2842
      %v2905 = vpop.f32.mrb[0].mxu0
      %v2906 = vadd.f32 0.0, %v2905
      %v2907 = vpop.f32.mrb[0].mxu0
      %v2908 = vpop.f32.mrb[0].mxu0
      %v2909 = vadd.f32 0.0, %v2908
      %v2910 = vpop.f32.mrb[0].mxu0
      %2911 = vdwg.mxu0
      %v2912 = vadd.f32 %v2812, %v2882
      %v2913 = vadd.f32 %v2813, %v2885
      %v2914 = vadd.f32 %v2814, %v2890
      %v2915 = vadd.f32 %v2815, %v2893
      %v2916 = vadd.f32 %v2816, %v2898
      %v2917 = vadd.f32 %v2817, %v2901
      %v2918 = vadd.f32 %v2818, %v2906
      %v2919 = vadd.f32 %v2819, %v2909
      %v2920 = vunpack.c.l.b16 %v2505
      %v2921 = vunpack.c.l.b16 %v2519
      %v2922 = vunpack.c.l.b16 %v2533
      %v2923 = vunpack.c.l.b16 %v2547
      %v2924 = vunpack.c.l.b16 %v2561
      %v2925 = vunpack.c.l.b16 %v2575
      %v2926 = vunpack.c.l.b16 %v2589
      %v2927 = vunpack.c.l.b16 %v2603
      %v2928 = vpack.c.b16 %v2921, %v2920
      %v2929 = vpack.c.b16 %v2923, %v2922
      %v2930 = vpack.c.b16 %v2925, %v2924
      %v2931 = vpack.c.b16 %v2927, %v2926
      %v2933 = vsel %vm618, %v2928, 0
      %v2936 = vsel %vm618, %v2929, 0
      %v2939 = vsel %vm618, %v2930, 0
      %v2942 = vsel %vm618, %v2931, 0
      %v2945 = vsel %vm631, %v338, 0
      %2947 = vmatprep.subr.bf16.mxu0 0
      %2948 = vmatpush1.bf16.msra.mxu0 %v2945
      %2949 = vmatprep.subr.bf16.mxu0 0
      %2950 = vmatpush1.bf16.msra.mxu0 0
      %2951 = vmatprep.subr.bf16.mxu0 0
      %2952 = vmatpush1.bf16.msra.mxu0 0
      %2953 = vmatprep.subr.bf16.mxu0 0
      %2954 = vmatpush1.bf16.msra.mxu0 0
      %2955 = vmatprep.subr.bf16.mxu0 0
      %2956 = vmatpush1.bf16.msra.mxu0 0
      %2957 = vmatprep.subr.bf16.mxu0 0
      %2958 = vmatpush1.bf16.msra.mxu0 0
      %2959 = vmatprep.subr.bf16.mxu0 0
      %2960 = vmatpush1.bf16.msra.mxu0 0
      %2961 = vmatprep.subr.bf16.mxu0 0
      %2962 = vmatpush1.bf16.msra.mxu0 0
      %2963 = vmatprep.subr.bf16.mxu0 0
      %2964 = vmatpush1.bf16.msra.mxu0 0
      %2965 = vmatprep.subr.bf16.mxu0 0
      %2966 = vmatpush1.bf16.msra.mxu0 0
      %2967 = vmatprep.subr.bf16.mxu0 0
      %2968 = vmatpush1.bf16.msra.mxu0 0
      %2969 = vmatprep.subr.bf16.mxu0 0
      %2970 = vmatpush1.bf16.msra.mxu0 0
      %2971 = vmatprep.subr.bf16.mxu0 0
      %2972 = vmatpush1.bf16.msra.mxu0 0
      %2973 = vmatprep.subr.bf16.mxu0 0
      %2974 = vmatpush1.bf16.msra.mxu0 0
      %2975 = vmatprep.subr.bf16.mxu0 0
      %2976 = vmatpush1.bf16.msra.mxu0 0
      %2977 = vmatprep.subr.bf16.mxu0 0
      %2978 = vmatpush1.bf16.msra.mxu0 0
      %2979 = vmatprep.mubr.bf16.mxu0 0
      %2980 = vmatmul.mubr.bf16.gmra.mrb[0].mxu0 %v2933
      %v2981 = vpop.f32.mrb[0].mxu0
      %v2982 = vadd.f32 0.0, %v2981
      %v2983 = vpop.f32.mrb[0].mxu0
      %v2984 = vpop.f32.mrb[0].mxu0
      %v2985 = vadd.f32 0.0, %v2984
      %v2986 = vpop.f32.mrb[0].mxu0
      %2987 = vmatprep.mubr.bf16.mxu0 0
      %2988 = vmatmul.mubr.bf16.gmra.mrb[0].mxu0 %v2936
      %v2989 = vpop.f32.mrb[0].mxu0
      %v2990 = vadd.f32 0.0, %v2989
      %v2991 = vpop.f32.mrb[0].mxu0
      %v2992 = vpop.f32.mrb[0].mxu0
      %v2993 = vadd.f32 0.0, %v2992
      %v2994 = vpop.f32.mrb[0].mxu0
      %2995 = vmatprep.mubr.bf16.mxu0 0
      %2996 = vmatmul.mubr.bf16.gmra.mrb[0].mxu0 %v2939
      %v2997 = vpop.f32.mrb[0].mxu0
      %v2998 = vadd.f32 0.0, %v2997
      %v2999 = vpop.f32.mrb[0].mxu0
      %v3000 = vpop.f32.mrb[0].mxu0
      %v3001 = vadd.f32 0.0, %v3000
      %v3002 = vpop.f32.mrb[0].mxu0
      %3003 = vmatprep.mubr.bf16.mxu0 0
      %3004 = vmatmul.mubr.bf16.gmra.mrb[0].mxu0 %v2942
      %v3005 = vpop.f32.mrb[0].mxu0
      %v3006 = vadd.f32 0.0, %v3005
      %v3007 = vpop.f32.mrb[0].mxu0
      %v3008 = vpop.f32.mrb[0].mxu0
      %v3009 = vadd.f32 0.0, %v3008
      %v3010 = vpop.f32.mrb[0].mxu0
      %3011 = vdwg.mxu0
      %v3012 = vadd.f32 %v2912, %v2982
      %v3013 = vadd.f32 %v2913, %v2985
      %v3014 = vadd.f32 %v2914, %v2990
      %v3015 = vadd.f32 %v2915, %v2993
      %v3016 = vadd.f32 %v2916, %v2998
      %v3017 = vadd.f32 %v2917, %v3001
      %v3018 = vadd.f32 %v2918, %v3006
      %v3019 = vadd.f32 %v2919, %v3009
      %vm3020 = vcmask 64512
      %v3021 = vsel %vm3020, %v3012, 0.0
      %v3022 = vsel %vm3020, %v3013, 0.0
      %v3023 = vadd.f32 %v3021, %v3022
      %v3024 = vsel %vm3020, %v3014, 0.0
      %v3025 = vadd.f32 %v3023, %v3024
      %v3026 = vsel %vm3020, %v3015, 0.0
      %v3027 = vadd.f32 %v3025, %v3026
      %v3028 = vsel %vm3020, %v3016, 0.0
      %v3029 = vadd.f32 %v3027, %v3028
      %v3030 = vsel %vm3020, %v3017, 0.0
      %v3031 = vadd.f32 %v3029, %v3030
      %v3032 = vsel %vm3020, %v3018, 0.0
      %v3033 = vadd.f32 %v3031, %v3032
      %v3034 = vsel %vm3020, %v3019, 0.0
      %v3035 = vadd.f32 %v3033, %v3034
      %v3036 = vrot.slane %v3035, 4
      %v3037 = vadd.f32 %v3035, %v3036
      %v3038 = vrot.slane %v3037, 2
      %v3039 = vadd.f32 %v3037, %v3038
      %v3040 = vrot.slane %v3039, 1
      %v3041 = vadd.f32 %v3039, %v3040
      %v3042 = vmul.f32 %v3041, 0.015625
      %v3043 = vmul.f32 %v3012, %v3012
      %v3044 = vmul.f32 %v3013, %v3013
      %v3045 = vmul.f32 %v3014, %v3014
      %v3046 = vmul.f32 %v3015, %v3015
      %v3047 = vmul.f32 %v3016, %v3016
      %v3048 = vmul.f32 %v3017, %v3017
      %v3049 = vmul.f32 %v3018, %v3018
      %v3050 = vmul.f32 %v3019, %v3019
      %v3051 = vsel %vm3020, %v3043, 0.0
      %v3052 = vsel %vm3020, %v3044, 0.0
      %v3053 = vadd.f32 %v3051, %v3052
      %v3054 = vsel %vm3020, %v3045, 0.0
      %v3055 = vadd.f32 %v3053, %v3054
      %v3056 = vsel %vm3020, %v3046, 0.0
      %v3057 = vadd.f32 %v3055, %v3056
      %v3058 = vsel %vm3020, %v3047, 0.0
      %v3059 = vadd.f32 %v3057, %v3058
      %v3060 = vsel %vm3020, %v3048, 0.0
      %v3061 = vadd.f32 %v3059, %v3060
      %v3062 = vsel %vm3020, %v3049, 0.0
      %v3063 = vadd.f32 %v3061, %v3062
      %v3064 = vsel %vm3020, %v3050, 0.0
      %v3065 = vadd.f32 %v3063, %v3064
      %v3066 = vrot.slane %v3065, 4
      %v3067 = vadd.f32 %v3065, %v3066
      %v3068 = vrot.slane %v3067, 2
      %v3069 = vadd.f32 %v3067, %v3068
      %v3070 = vrot.slane %v3069, 1
      %v3071 = vadd.f32 %v3069, %v3070
      %v3072 = vmul.f32 %v3071, 0.015625
      %v3073 = vmul.f32 %v3042, %v3042
      %v3074 = vsub.f32 %v3072, %v3073
      %v3075 = vmax.f32 %v3074, 0.0
      %v3076 = vsub.f32 %v3012, %v3042
      %v3077 = vsub.f32 %v3013, %v3042
      %v3078 = vsub.f32 %v3014, %v3042
      %v3079 = vsub.f32 %v3015, %v3042
      %v3080 = vsub.f32 %v3016, %v3042
      %v3081 = vsub.f32 %v3017, %v3042
      %v3082 = vsub.f32 %v3018, %v3042
      %v3083 = vsub.f32 %v3019, %v3042
      %v3084 = vadd.f32 %v3075, 1e-05
      %v3085 = vrsqrt.pop %v3084
      %v3086 = vmul.f32 %v3076, %v3085
      %v3087 = vmul.f32 %v3077, %v3085
      %v3088 = vmul.f32 %v3078, %v3085
      %v3089 = vmul.f32 %v3079, %v3085
      %v3090 = vmul.f32 %v3080, %v3085
      %v3091 = vmul.f32 %v3081, %v3085
      %v3092 = vmul.f32 %v3082, %v3085
      %v3093 = vmul.f32 %v3083, %v3085
      %vm3094 = vcmp.ge.f32.partialorder %v3086, 0.0
      %vm3095 = vcmp.ge.f32.partialorder %v3087, 0.0
      %vm3096 = vcmp.ge.f32.partialorder %v3088, 0.0
      %vm3097 = vcmp.ge.f32.partialorder %v3089, 0.0
      %vm3098 = vcmp.ge.f32.partialorder %v3090, 0.0
      %vm3099 = vcmp.ge.f32.partialorder %v3091, 0.0
      %vm3100 = vcmp.ge.f32.partialorder %v3092, 0.0
      %vm3101 = vcmp.ge.f32.partialorder %v3093, 0.0
      %v3102 = vmul.f32 %v3086, 0.2
      %v3103 = vmul.f32 %v3087, 0.2
      %v3104 = vmul.f32 %v3088, 0.2
      %v3105 = vmul.f32 %v3089, 0.2
      %v3106 = vmul.f32 %v3090, 0.2
      %v3107 = vmul.f32 %v3091, 0.2
      %v3108 = vmul.f32 %v3092, 0.2
      %v3109 = vmul.f32 %v3093, 0.2
      %v3110 = vsel %vm3094, %v3086, %v3102
      %v3111 = vsel %vm3095, %v3087, %v3103
      %v3112 = vsel %vm3096, %v3088, %v3104
      %v3113 = vsel %vm3097, %v3089, %v3105
      %v3114 = vsel %vm3098, %v3090, %v3106
      %v3115 = vsel %vm3099, %v3091, %v3107
      %v3116 = vsel %vm3100, %v3092, %v3108
      %v3117 = vsel %vm3101, %v3093, %v3109
      %3118 = vst.msk [vmem:[%s321] sm:$0xff] %vm3020, %v3110
      %3119 = vst.msk [vmem:[%s321 + $0x8] sm:$0xff] %vm3020, %v3111
      %3120 = vst.msk [vmem:[%s321 + $0x10] sm:$0xff] %vm3020, %v3112
      %3121 = vst.msk [vmem:[%s321 + $0x18] sm:$0xff] %vm3020, %v3113
      %3122 = vst.msk [vmem:[%s321 + $0x20] sm:$0xff] %vm3020, %v3114
      %3123 = vst.msk [vmem:[%s321 + $0x28] sm:$0xff] %vm3020, %v3115
      %3124 = vst.msk [vmem:[%s321 + $0x30] sm:$0xff] %vm3020, %v3116
      %3125 = vst.msk [vmem:[%s321 + $0x38] sm:$0xff] %vm3020, %v3117
      %p3126 = scmp.lt.s32.totalorder %s20, 1
      %s3127 = scalar_select %p3126, %s20, 1
      %p3128 = scmp.lt.s32.totalorder %s21, 0
      %s3129 = scalar_select %p3128, %s21, 0
      %s3130 = smul.addr %s3127, 8
      %s3131 = sadd.s32 %s3129, %s3130
      %s3132 = smul.addr %s3131, 8
      %s3133 = scalar_lea.vmem %s5, %s3132
      // Predicated region
      $region41: #{disc_block.1} parent=39 // pred_check
        %p3134 = pneg %p178
      $region42: #{disc_block.1} parent=39 // pred_check_branch
        %3136 = sbr.rel (%p3134) target = $region44
      $region43: #{disc_block.1} parent=39 // pred_region
        _
      $region44: #{disc_block.1} parent=39 // pred_fallthru
        _
    $region40: #{disc_block.1} parent=5 // pred_fallthru
      _
    %p3137 = scmp.le.s32.totalorder 2, %s11
    // Predicated region
    $region45: #{disc_block.1} parent=5 // pred_check
      %p3138 = pneg %p3137
    $region46: #{disc_block.1} parent=5 // pred_check_branch
      %3140 = sbr.rel (%p3138) target = $region48
    $region47: #{disc_block.1} parent=5 // pred_region
      %s3141 = ssub.s32 %s11, 2
      // Predicated region
      $region49: #{disc_block.1} parent=47 // pred_check
        %p3142 = pneg %p184
      $region50: #{disc_block.1} parent=47 // pred_check_branch
        %3144 = sbr.rel (%p3142) target = $region52
      $region51: #{disc_block.1} parent=47 // pred_region
        %p3145 = scmp.lt.s32.totalorder %s22, 1
        %s3146 = scalar_select %p3145, %s22, 1
        %p3147 = scmp.lt.s32.totalorder %s23, 0
        %s3148 = scalar_select %p3147, %s23, 0
        %s3149 = smul.addr %s3146, 8
        %s3150 = sadd.s32 %s3148, %s3149
        %s3151 = smul.addr %s3150, 8
        %s3152 = scalar_lea.vmem %s5, %s3151
      $region52: #{disc_block.1} parent=47 // pred_fallthru
        _
    $region48: #{disc_block.1} parent=5 // pred_fallthru
      _
  $region6: #{disc_block.1} parent=0 // loop_footer
    %s15 = sadd.s32 1, %s11
  $region7: #{disc_block.1} parent=0 // loop_footer_branch
    %10 = sbr.rel target = $region3
  $region8: #{disc_block.1} parent=0 // loop_exit
    _

</llo_original>
